<compile_context>
chip_gen: v7x
topology: tpu7x:2x2x1
jax: 0.10.0
libtpu: 0.0.40
codegen_flags: <defaults>
</compile_context>

<pallas_src>
import functools
import math

import jax
import jax.numpy as jnp
from jax.experimental import pallas as pl
from jax.experimental.pallas import tpu as pltpu

# ---------------- small synthetic BERT config ----------------
VOCAB = 64
HIDDEN = 32
N_LAYERS = 2
N_HEADS = 2
HEAD_DIM = HIDDEN // N_HEADS
INTERMEDIATE = 64
MAX_POS = 16
N_TAX = 4                 # len(['misinformation','trust','civil_rights','literacy'])
LN_EPS = 1e-12            # BERT LayerNorm eps
MASK_NEG = -10000.0       # HF BERT additive attention-mask fill value


# ---------------- fused Pallas kernel ----------------
def _bert_kernel(emb_ref, mask_ref, eg_ref, eb_ref,
                 qw_ref, qb_ref, kw_ref, kb_ref, vw_ref, vb_ref,
                 aow_ref, aob_ref, alng_ref, alnb_ref,
                 iw_ref, ib_ref, ow_ref, ob_ref, olng_ref, olnb_ref,
                 pw_ref, pb_ref, cw_ref, cb_ref,
                 out_ref, attn_ref, *, batch, seq):
    """Whole BERT encoder + pooler + classifier on VMEM-resident tensors.

    emb_ref:  (B*T, H)   summed word+pos+type embeddings
    mask_ref: (B, T, T)  additive attention mask (already broadcast over queries)
    q/k/v w:  (L*NH, H, dh)   per-layer, per-head projection weights
    ao_w:     (L*NH, dh, H)   per-head slices of the attention output projection
    attn_ref: (B*T, H)   VMEM scratch used to assemble per-batch attention output
    out_ref:  (B, N_TAX) sigmoid class probabilities
    """
    scale = 1.0 / math.sqrt(HEAD_DIM)

    def layer_norm(h, g, b):
        mu = jnp.mean(h, axis=-1, keepdims=True)
        d = h - mu
        var = jnp.mean(d * d, axis=-1, keepdims=True)
        return d * jax.lax.rsqrt(var + LN_EPS) * g + b

    def gelu(y):
        # TODO(synk): HF BERT default hidden_act is exact erf-GELU; tanh
        # approximation used (no guaranteed Mosaic lowering for lax.erf).
        c = math.sqrt(2.0 / math.pi)
        return 0.5 * y * (1.0 + jnp.tanh(c * (y + 0.044715 * y * y * y)))

    # --- embedding LayerNorm (no residual) ---
    x = layer_norm(emb_ref[...], eg_ref[...], eb_ref[...])          # (B*T, H) f32

    for l in range(N_LAYERS):
        # ---- self-attention ----
        # Per-head Q/K/V projections on the full (B*T, H) hidden state.
        # Scale is folded into Q once.
        qs, ks, vs = [], [], []
        for h in range(N_HEADS):
            lh = l * N_HEADS + h
            qs.append((jnp.dot(x, qw_ref[lh], preferred_element_type=jnp.float32)
                       + qb_ref[lh]) * scale)
            ks.append(jnp.dot(x, kw_ref[lh], preferred_element_type=jnp.float32)
                      + kb_ref[lh])
            vs.append(jnp.dot(x, vw_ref[lh], preferred_element_type=jnp.float32)
                      + vb_ref[lh])

        # Per batch: softmax(q k^T + mask) v, and accumulate the per-head
        # output projection directly (merge_heads == sum over heads).
        for b in range(batch):
            r0 = b * seq
            mask_b = mask_ref[b]                                     # (T, T)
            acc = aob_ref[l]                                         # (1, H) bias
            for h in range(N_HEADS):
                lh = l * N_HEADS + h
                q_b = qs[h][r0:r0 + seq, :]                          # (T, dh)
                k_b = ks[h][r0:r0 + seq, :]
                v_b = vs[h][r0:r0 + seq, :]
                s = jax.lax.dot_general(
                    q_b, k_b, (((1,), (1,)), ((), ())),
                    preferred_element_type=jnp.float32) + mask_b     # (T, T)
                s = s - jnp.max(s, axis=-1, keepdims=True)
                p = jnp.exp(s)
                p = p * pl.reciprocal(jnp.sum(p, axis=-1, keepdims=True),
                                      approx=True)
                ctx = jnp.dot(p, v_b, preferred_element_type=jnp.float32)   # (T, dh)
                acc = acc + jnp.dot(ctx, aow_ref[lh],
                                    preferred_element_type=jnp.float32)     # (T, H)
            attn_ref[r0:r0 + seq, :] = acc

        # residual + LayerNorm fused right after the attention output projection
        x = layer_norm(attn_ref[...] + x, alng_ref[l], alnb_ref[l])

        # ---- feed-forward, residual + LayerNorm epilogue ----
        inter = gelu(jnp.dot(x, iw_ref[l], preferred_element_type=jnp.float32)
                     + ib_ref[l])                                     # (B*T, I)
        ffn = jnp.dot(inter, ow_ref[l], preferred_element_type=jnp.float32) + ob_ref[l]
        x = layer_norm(ffn + x, olng_ref[l], olnb_ref[l])

    # ---- pooler (CLS token -> dense -> tanh) + classifier -> sigmoid ----
    # Gather the CLS rows (row b*T for each batch) with a constant one-hot
    # selection matmul: robust, no strided/scatter ops needed.
    rows = jax.lax.broadcasted_iota(jnp.int32, (batch, batch * seq), 1)
    want = jax.lax.broadcasted_iota(jnp.int32, (batch, batch * seq), 0) * seq
    sel = (rows == want).astype(jnp.float32)                          # (B, B*T)
    cls = jnp.dot(sel, x, preferred_element_type=jnp.float32)         # (B, H)

    pooled = jnp.tanh(jnp.dot(cls, pw_ref[...],
                              preferred_element_type=jnp.float32) + pb_ref[...])
    # nn.Dropout(0.1) is identity at inference
    logits = jnp.dot(pooled, cw_ref[...],
                     preferred_element_type=jnp.float32) + cb_ref[...]
    out_ref[...] = jax.nn.sigmoid(logits)


# ---------------- parameter init (deterministic, synthetic) ----------------
def init_params(key):
    keys = iter(jax.random.split(key, 128))

    def w(shape):
        return 0.02 * jax.random.normal(next(keys), shape, jnp.float32)

    params = {
        "word_emb": w((VOCAB, HIDDEN)),
        "pos_emb": w((MAX_POS, HIDDEN)),
        "type_emb": w((2, HIDDEN)),
        "emb_ln_g": jnp.ones((HIDDEN,), jnp.float32),
        "emb_ln_b": jnp.zeros((HIDDEN,), jnp.float32),
        "layers": [],
        "pool_w": w((HIDDEN, HIDDEN)),
        "pool_b": jnp.zeros((HIDDEN,), jnp.float32),
        "cls_w": w((HIDDEN, N_TAX)),
        "cls_b": jnp.zeros((N_TAX,), jnp.float32),
    }
    for _ in range(N_LAYERS):
        params["layers"].append({
            "q_w": w((HIDDEN, HIDDEN)), "q_b": jnp.zeros((HIDDEN,), jnp.float32),
            "k_w": w((HIDDEN, HIDDEN)), "k_b": jnp.zeros((HIDDEN,), jnp.float32),
            "v_w": w((HIDDEN, HIDDEN)), "v_b": jnp.zeros((HIDDEN,), jnp.float32),
            "ao_w": w((HIDDEN, HIDDEN)), "ao_b": jnp.zeros((HIDDEN,), jnp.float32),
            "attn_ln_g": jnp.ones((HIDDEN,), jnp.float32),
            "attn_ln_b": jnp.zeros((HIDDEN,), jnp.float32),
            "i_w": w((HIDDEN, INTERMEDIATE)), "i_b": jnp.zeros((INTERMEDIATE,), jnp.float32),
            "o_w": w((INTERMEDIATE, HIDDEN)), "o_b": jnp.zeros((HIDDEN,), jnp.float32),
            "out_ln_g": jnp.ones((HIDDEN,), jnp.float32),
            "out_ln_b": jnp.zeros((HIDDEN,), jnp.float32),
        })
    return params


def pack_params(p):
    """Repack standard BERT params into the fused kernel's layout.

    Head splitting (HF transpose_for_scores) is done here, once, on weights:
      q/k/v:  (H, H) -> (NH, H, dh)   output-feature slices per head
      ao_w:   (H, H) -> (NH, dh, H)   input-feature slices per head
    so the kernel never slices the lane dimension at runtime.
    """
    def split_out(w_):    # (H, H) -> (NH, H, dh)
        return w_.reshape(HIDDEN, N_HEADS, HEAD_DIM).transpose(1, 0, 2)

    def split_in(w_):     # (H, H) -> (NH, dh, H)
        return w_.reshape(N_HEADS, HEAD_DIM, HIDDEN)

    def split_bias(b_):   # (H,) -> (NH, 1, dh)
        return b_.reshape(N_HEADS, 1, HEAD_DIM)

    layers = p["layers"]
    cat = lambda xs: jnp.concatenate(xs, axis=0)
    stk = lambda xs: jnp.stack(xs, axis=0)

    return {
        "word_emb": p["word_emb"],
        "pos_emb": p["pos_emb"],
        "type_emb": p["type_emb"],
        "emb_ln_g": p["emb_ln_g"].reshape(1, HIDDEN),
        "emb_ln_b": p["emb_ln_b"].reshape(1, HIDDEN),
        "q_w": cat([split_out(L["q_w"]) for L in layers]),          # (L*NH, H, dh)
        "q_b": cat([split_bias(L["q_b"]) for L in layers]),         # (L*NH, 1, dh)
        "k_w": cat([split_out(L["k_w"]) for L in layers]),
        "k_b": cat([split_bias(L["k_b"]) for L in layers]),
        "v_w": cat([split_out(L["v_w"]) for L in layers]),
        "v_b": cat([split_bias(L["v_b"]) for L in layers]),
        "ao_w": cat([split_in(L["ao_w"]) for L in layers]),         # (L*NH, dh, H)
        "ao_b": stk([L["ao_b"].reshape(1, HIDDEN) for L in layers]),     # (L, 1, H)
        "attn_ln_g": stk([L["attn_ln_g"].reshape(1, HIDDEN) for L in layers]),
        "attn_ln_b": stk([L["attn_ln_b"].reshape(1, HIDDEN) for L in layers]),
        "i_w": stk([L["i_w"] for L in layers]),                     # (L, H, I)
        "i_b": stk([L["i_b"].reshape(1, INTERMEDIATE) for L in layers]),
        "o_w": stk([L["o_w"] for L in layers]),                     # (L, I, H)
        "o_b": stk([L["o_b"].reshape(1, HIDDEN) for L in layers]),
        "out_ln_g": stk([L["out_ln_g"].reshape(1, HIDDEN) for L in layers]),
        "out_ln_b": stk([L["out_ln_b"].reshape(1, HIDDEN) for L in layers]),
        "pool_w": p["pool_w"],
        "pool_b": p["pool_b"].reshape(1, HIDDEN),
        "cls_w": p["cls_w"],
        "cls_b": p["cls_b"].reshape(1, N_TAX),
    }


# ---------------- forward pass ----------------
def bert_taxonomy_forward(packed, input_ids, attention_mask):
    B, T = input_ids.shape

    # Embedding gather + sum is cheap XLA glue; everything downstream is the
    # single fused Pallas kernel.
    we = jnp.take(packed["word_emb"], input_ids, axis=0)            # (B,T,H)
    pe = packed["pos_emb"][:T][None, :, :]                          # (1,T,H)
    te = packed["type_emb"][0][None, None, :]                       # token_type_ids = 0
    emb = (we + pe + te).reshape(B * T, HIDDEN).astype(jnp.float32)

    # Additive attention mask, pre-broadcast over query rows: (B, T, T)
    ext = (1.0 - attention_mask.astype(jnp.float32)) * MASK_NEG     # (B,T)
    ext = jnp.broadcast_to(ext[:, None, :], (B, T, T))

    kernel = functools.partial(_bert_kernel, batch=B, seq=T)
    probs = pl.pallas_call(
        kernel,
        out_shape=jax.ShapeDtypeStruct((B, N_TAX), jnp.float32),
        scratch_shapes=[pltpu.VMEM((B * T, HIDDEN), jnp.float32)],
    )(
        emb, ext,
        packed["emb_ln_g"], packed["emb_ln_b"],
        packed["q_w"], packed["q_b"], packed["k_w"], packed["k_b"],
        packed["v_w"], packed["v_b"],
        packed["ao_w"], packed["ao_b"], packed["attn_ln_g"], packed["attn_ln_b"],
        packed["i_w"], packed["i_b"], packed["o_w"], packed["o_b"],
        packed["out_ln_g"], packed["out_ln_b"],
        packed["pool_w"], packed["pool_b"], packed["cls_w"], packed["cls_b"],
    )
    return probs                                                    # (B, N_TAX)


if __name__ == "__main__":
    B, T = 2, 8
    key = jax.random.PRNGKey(0)
    pkey, ikey = jax.random.split(key)

    params = init_params(pkey)
    packed = pack_params(params)

    input_ids = jax.random.randint(ikey, (B, T), 0, VOCAB, dtype=jnp.int32)
    attention_mask = jnp.array(
        [[1, 1, 1, 1, 1, 1, 1, 1],
         [1, 1, 1, 1, 1, 1, 0, 0]], dtype=jnp.float32)

    out = jax.jit(bert_taxonomy_forward)(packed, input_ids, attention_mask)
    out = jax.block_until_ready(out)

    assert out.shape == (B, N_TAX), out.shape
    assert bool(jnp.all((out >= 0.0) & (out <= 1.0)))
    print("KERNEL_OK")
</pallas_src>

<mosaic_0001>
module attributes {stable_mosaic.version = 11 : i64} {
  func.func @_bert_kernel(%arg0: memref<16x32xf32, #tpu.memory_space<vmem>>, %arg1: memref<2x8x8xf32, #tpu.memory_space<vmem>>, %arg2: memref<1x32xf32, #tpu.memory_space<vmem>>, %arg3: memref<1x32xf32, #tpu.memory_space<vmem>>, %arg4: memref<4x32x16xf32, #tpu.memory_space<vmem>>, %arg5: memref<4x1x16xf32, #tpu.memory_space<vmem>>, %arg6: memref<4x32x16xf32, #tpu.memory_space<vmem>>, %arg7: memref<4x1x16xf32, #tpu.memory_space<vmem>>, %arg8: memref<4x32x16xf32, #tpu.memory_space<vmem>>, %arg9: memref<4x1x16xf32, #tpu.memory_space<vmem>>, %arg10: memref<4x16x32xf32, #tpu.memory_space<vmem>>, %arg11: memref<2x1x32xf32, #tpu.memory_space<vmem>>, %arg12: memref<2x1x32xf32, #tpu.memory_space<vmem>>, %arg13: memref<2x1x32xf32, #tpu.memory_space<vmem>>, %arg14: memref<2x32x64xf32, #tpu.memory_space<vmem>>, %arg15: memref<2x1x64xf32, #tpu.memory_space<vmem>>, %arg16: memref<2x64x32xf32, #tpu.memory_space<vmem>>, %arg17: memref<2x1x32xf32, #tpu.memory_space<vmem>>, %arg18: memref<2x1x32xf32, #tpu.memory_space<vmem>>, %arg19: memref<2x1x32xf32, #tpu.memory_space<vmem>>, %arg20: memref<32x32xf32, #tpu.memory_space<vmem>>, %arg21: memref<1x32xf32, #tpu.memory_space<vmem>>, %arg22: memref<32x4xf32, #tpu.memory_space<vmem>>, %arg23: memref<1x4xf32, #tpu.memory_space<vmem>>, %arg24: memref<2x4xf32, #tpu.memory_space<vmem>>, %arg25: memref<16x32xf32, #tpu.memory_space<vmem>>) attributes {dimension_semantics = [], scalar_prefetch = 0 : i64, scratch_operands = 1 : i64, tpu.core_type = #tpu.core_type<tc>} {
    %c0 = arith.constant 0 : index
    %c0_0 = arith.constant 0 : index
    %0 = vector.load %arg0[%c0, %c0_0] : memref<16x32xf32, #tpu.memory_space<vmem>>, vector<16x32xf32>
    %c0_1 = arith.constant 0 : index
    %c0_2 = arith.constant 0 : index
    %1 = vector.load %arg2[%c0_1, %c0_2] : memref<1x32xf32, #tpu.memory_space<vmem>>, vector<1x32xf32>
    %c0_3 = arith.constant 0 : index
    %c0_4 = arith.constant 0 : index
    %2 = vector.load %arg3[%c0_3, %c0_4] : memref<1x32xf32, #tpu.memory_space<vmem>>, vector<1x32xf32>
    %cst = arith.constant dense<0.000000e+00> : vector<16xf32>
    %3 = vector.multi_reduction <add>, %0, %cst [1] : vector<16x32xf32> to vector<16xf32>
    %4 = vector.shape_cast %3 : vector<16xf32> to vector<16x1xf32>
    %cst_5 = arith.constant 3.200000e+01 : f32
    %5 = vector.broadcast %cst_5 : f32 to vector<16x1xf32>
    %6 = arith.divf %4, %5 : vector<16x1xf32>
    %7 = vector.broadcast %6 : vector<16x1xf32> to vector<16x32xf32>
    %8 = arith.subf %0, %7 : vector<16x32xf32>
    %9 = arith.mulf %8, %8 : vector<16x32xf32>
    %cst_6 = arith.constant dense<0.000000e+00> : vector<16xf32>
    %10 = vector.multi_reduction <add>, %9, %cst_6 [1] : vector<16x32xf32> to vector<16xf32>
    %11 = vector.shape_cast %10 : vector<16xf32> to vector<16x1xf32>
    %cst_7 = arith.constant 3.200000e+01 : f32
    %12 = vector.broadcast %cst_7 : f32 to vector<16x1xf32>
    %13 = arith.divf %11, %12 : vector<16x1xf32>
    %cst_8 = arith.constant 9.99999996E-13 : f32
    %14 = vector.broadcast %cst_8 : f32 to vector<16x1xf32>
    %15 = arith.addf %13, %14 : vector<16x1xf32>
    %16 = math.rsqrt %15 : vector<16x1xf32>
    %17 = vector.broadcast %16 : vector<16x1xf32> to vector<16x32xf32>
    %18 = arith.mulf %8, %17 : vector<16x32xf32>
    %19 = vector.broadcast %1 : vector<1x32xf32> to vector<16x32xf32>
    %20 = arith.mulf %18, %19 : vector<16x32xf32>
    %21 = vector.broadcast %2 : vector<1x32xf32> to vector<16x32xf32>
    %22 = arith.addf %20, %21 : vector<16x32xf32>
    %c0_9 = arith.constant 0 : index
    %c0_10 = arith.constant 0 : index
    %c0_11 = arith.constant 0 : index
    %23 = vector.load %arg4[%c0_9, %c0_10, %c0_11] : memref<4x32x16xf32, #tpu.memory_space<vmem>>, vector<1x32x16xf32>
    %24 = vector.shape_cast %23 : vector<1x32x16xf32> to vector<32x16xf32>
    %cst_12 = arith.constant dense<0.000000e+00> : vector<16x16xf32>
    %25 = tpu.matmul %22, %24, %cst_12 {dimension_numbers = #tpu.dot_dimension_numbers<[1], [0], [0], [1], [0, 0, 1, 1], [], []>} : vector<16x32xf32>, vector<32x16xf32>, vector<16x16xf32> -> vector<16x16xf32>
    %c0_13 = arith.constant 0 : index
    %c0_14 = arith.constant 0 : index
    %c0_15 = arith.constant 0 : index
    %26 = vector.load %arg5[%c0_13, %c0_14, %c0_15] : memref<4x1x16xf32, #tpu.memory_space<vmem>>, vector<1x1x16xf32>
    %27 = vector.shape_cast %26 : vector<1x1x16xf32> to vector<1x16xf32>
    %28 = vector.broadcast %27 : vector<1x16xf32> to vector<16x16xf32>
    %29 = arith.addf %25, %28 : vector<16x16xf32>
    %cst_16 = arith.constant 2.500000e-01 : f32
    %30 = vector.broadcast %cst_16 : f32 to vector<16x16xf32>
    %31 = arith.mulf %29, %30 : vector<16x16xf32>
    %c0_17 = arith.constant 0 : index
    %c0_18 = arith.constant 0 : index
    %c0_19 = arith.constant 0 : index
    %32 = vector.load %arg6[%c0_17, %c0_18, %c0_19] : memref<4x32x16xf32, #tpu.memory_space<vmem>>, vector<1x32x16xf32>
    %33 = vector.shape_cast %32 : vector<1x32x16xf32> to vector<32x16xf32>
    %cst_20 = arith.constant dense<0.000000e+00> : vector<16x16xf32>
    %34 = tpu.matmul %22, %33, %cst_20 {dimension_numbers = #tpu.dot_dimension_numbers<[1], [0], [0], [1], [0, 0, 1, 1], [], []>} : vector<16x32xf32>, vector<32x16xf32>, vector<16x16xf32> -> vector<16x16xf32>
    %c0_21 = arith.constant 0 : index
    %c0_22 = arith.constant 0 : index
    %c0_23 = arith.constant 0 : index
    %35 = vector.load %arg7[%c0_21, %c0_22, %c0_23] : memref<4x1x16xf32, #tpu.memory_space<vmem>>, vector<1x1x16xf32>
    %36 = vector.shape_cast %35 : vector<1x1x16xf32> to vector<1x16xf32>
    %37 = vector.broadcast %36 : vector<1x16xf32> to vector<16x16xf32>
    %38 = arith.addf %34, %37 : vector<16x16xf32>
    %c0_24 = arith.constant 0 : index
    %c0_25 = arith.constant 0 : index
    %c0_26 = arith.constant 0 : index
    %39 = vector.load %arg8[%c0_24, %c0_25, %c0_26] : memref<4x32x16xf32, #tpu.memory_space<vmem>>, vector<1x32x16xf32>
    %40 = vector.shape_cast %39 : vector<1x32x16xf32> to vector<32x16xf32>
    %cst_27 = arith.constant dense<0.000000e+00> : vector<16x16xf32>
    %41 = tpu.matmul %22, %40, %cst_27 {dimension_numbers = #tpu.dot_dimension_numbers<[1], [0], [0], [1], [0, 0, 1, 1], [], []>} : vector<16x32xf32>, vector<32x16xf32>, vector<16x16xf32> -> vector<16x16xf32>
    %c0_28 = arith.constant 0 : index
    %c0_29 = arith.constant 0 : index
    %c0_30 = arith.constant 0 : index
    %42 = vector.load %arg9[%c0_28, %c0_29, %c0_30] : memref<4x1x16xf32, #tpu.memory_space<vmem>>, vector<1x1x16xf32>
    %43 = vector.shape_cast %42 : vector<1x1x16xf32> to vector<1x16xf32>
    %44 = vector.broadcast %43 : vector<1x16xf32> to vector<16x16xf32>
    %45 = arith.addf %41, %44 : vector<16x16xf32>
    %c1 = arith.constant 1 : index
    %c0_31 = arith.constant 0 : index
    %c0_32 = arith.constant 0 : index
    %46 = vector.load %arg4[%c1, %c0_31, %c0_32] : memref<4x32x16xf32, #tpu.memory_space<vmem>>, vector<1x32x16xf32>
    %47 = vector.shape_cast %46 : vector<1x32x16xf32> to vector<32x16xf32>
    %cst_33 = arith.constant dense<0.000000e+00> : vector<16x16xf32>
    %48 = tpu.matmul %22, %47, %cst_33 {dimension_numbers = #tpu.dot_dimension_numbers<[1], [0], [0], [1], [0, 0, 1, 1], [], []>} : vector<16x32xf32>, vector<32x16xf32>, vector<16x16xf32> -> vector<16x16xf32>
    %c1_34 = arith.constant 1 : index
    %c0_35 = arith.constant 0 : index
    %c0_36 = arith.constant 0 : index
    %49 = vector.load %arg5[%c1_34, %c0_35, %c0_36] : memref<4x1x16xf32, #tpu.memory_space<vmem>>, vector<1x1x16xf32>
    %50 = vector.shape_cast %49 : vector<1x1x16xf32> to vector<1x16xf32>
    %51 = vector.broadcast %50 : vector<1x16xf32> to vector<16x16xf32>
    %52 = arith.addf %48, %51 : vector<16x16xf32>
    %cst_37 = arith.constant 2.500000e-01 : f32
    %53 = vector.broadcast %cst_37 : f32 to vector<16x16xf32>
    %54 = arith.mulf %52, %53 : vector<16x16xf32>
    %c1_38 = arith.constant 1 : index
    %c0_39 = arith.constant 0 : index
    %c0_40 = arith.constant 0 : index
    %55 = vector.load %arg6[%c1_38, %c0_39, %c0_40] : memref<4x32x16xf32, #tpu.memory_space<vmem>>, vector<1x32x16xf32>
    %56 = vector.shape_cast %55 : vector<1x32x16xf32> to vector<32x16xf32>
    %cst_41 = arith.constant dense<0.000000e+00> : vector<16x16xf32>
    %57 = tpu.matmul %22, %56, %cst_41 {dimension_numbers = #tpu.dot_dimension_numbers<[1], [0], [0], [1], [0, 0, 1, 1], [], []>} : vector<16x32xf32>, vector<32x16xf32>, vector<16x16xf32> -> vector<16x16xf32>
    %c1_42 = arith.constant 1 : index
    %c0_43 = arith.constant 0 : index
    %c0_44 = arith.constant 0 : index
    %58 = vector.load %arg7[%c1_42, %c0_43, %c0_44] : memref<4x1x16xf32, #tpu.memory_space<vmem>>, vector<1x1x16xf32>
    %59 = vector.shape_cast %58 : vector<1x1x16xf32> to vector<1x16xf32>
    %60 = vector.broadcast %59 : vector<1x16xf32> to vector<16x16xf32>
    %61 = arith.addf %57, %60 : vector<16x16xf32>
    %c1_45 = arith.constant 1 : index
    %c0_46 = arith.constant 0 : index
    %c0_47 = arith.constant 0 : index
    %62 = vector.load %arg8[%c1_45, %c0_46, %c0_47] : memref<4x32x16xf32, #tpu.memory_space<vmem>>, vector<1x32x16xf32>
    %63 = vector.shape_cast %62 : vector<1x32x16xf32> to vector<32x16xf32>
    %cst_48 = arith.constant dense<0.000000e+00> : vector<16x16xf32>
    %64 = tpu.matmul %22, %63, %cst_48 {dimension_numbers = #tpu.dot_dimension_numbers<[1], [0], [0], [1], [0, 0, 1, 1], [], []>} : vector<16x32xf32>, vector<32x16xf32>, vector<16x16xf32> -> vector<16x16xf32>
    %c1_49 = arith.constant 1 : index
    %c0_50 = arith.constant 0 : index
    %c0_51 = arith.constant 0 : index
    %65 = vector.load %arg9[%c1_49, %c0_50, %c0_51] : memref<4x1x16xf32, #tpu.memory_space<vmem>>, vector<1x1x16xf32>
    %66 = vector.shape_cast %65 : vector<1x1x16xf32> to vector<1x16xf32>
    %67 = vector.broadcast %66 : vector<1x16xf32> to vector<16x16xf32>
    %68 = arith.addf %64, %67 : vector<16x16xf32>
    %c0_52 = arith.constant 0 : index
    %c0_53 = arith.constant 0 : index
    %c0_54 = arith.constant 0 : index
    %69 = vector.load %arg1[%c0_52, %c0_53, %c0_54] : memref<2x8x8xf32, #tpu.memory_space<vmem>>, vector<1x8x8xf32>
    %70 = vector.shape_cast %69 : vector<1x8x8xf32> to vector<8x8xf32>
    %c0_55 = arith.constant 0 : index
    %c0_56 = arith.constant 0 : index
    %c0_57 = arith.constant 0 : index
    %71 = vector.load %arg11[%c0_55, %c0_56, %c0_57] : memref<2x1x32xf32, #tpu.memory_space<vmem>>, vector<1x1x32xf32>
    %72 = vector.shape_cast %71 : vector<1x1x32xf32> to vector<1x32xf32>
    %73 = vector.extract_strided_slice %31 {offsets = [0, 0], sizes = [8, 16], strides = [1, 1]} : vector<16x16xf32> to vector<8x16xf32>
    %74 = vector.extract_strided_slice %38 {offsets = [0, 0], sizes = [8, 16], strides = [1, 1]} : vector<16x16xf32> to vector<8x16xf32>
    %75 = vector.extract_strided_slice %45 {offsets = [0, 0], sizes = [8, 16], strides = [1, 1]} : vector<16x16xf32> to vector<8x16xf32>
    %cst_58 = arith.constant dense<0.000000e+00> : vector<8x8xf32>
    %76 = tpu.matmul %73, %74, %cst_58 {dimension_numbers = #tpu.dot_dimension_numbers<[1], [1], [0], [0], [0, 0, 1, 0], [], []>} : vector<8x16xf32>, vector<8x16xf32>, vector<8x8xf32> -> vector<8x8xf32>
    %77 = arith.addf %76, %70 : vector<8x8xf32>
    %cst_59 = arith.constant dense<0xFF800000> : vector<8xf32>
    %78 = vector.multi_reduction <maximumf>, %77, %cst_59 [1] : vector<8x8xf32> to vector<8xf32>
    %79 = vector.shape_cast %78 : vector<8xf32> to vector<8x1xf32>
    %80 = vector.broadcast %79 : vector<8x1xf32> to vector<8x8xf32>
    %81 = arith.subf %77, %80 : vector<8x8xf32>
    %82 = math.exp %81 : vector<8x8xf32>
    %cst_60 = arith.constant dense<0.000000e+00> : vector<8xf32>
    %83 = vector.multi_reduction <add>, %82, %cst_60 [1] : vector<8x8xf32> to vector<8xf32>
    %84 = vector.shape_cast %83 : vector<8xf32> to vector<8x1xf32>
    %85 = tpu.reciprocal %84 {approx = true} : vector<8x1xf32> -> vector<8x1xf32>
    %86 = vector.broadcast %85 : vector<8x1xf32> to vector<8x8xf32>
    %87 = arith.mulf %82, %86 : vector<8x8xf32>
    %cst_61 = arith.constant dense<0.000000e+00> : vector<8x16xf32>
    %88 = tpu.matmul %87, %75, %cst_61 {dimension_numbers = #tpu.dot_dimension_numbers<[1], [0], [0], [1], [0, 0, 1, 1], [], []>} : vector<8x8xf32>, vector<8x16xf32>, vector<8x16xf32> -> vector<8x16xf32>
    %c0_62 = arith.constant 0 : index
    %c0_63 = arith.constant 0 : index
    %c0_64 = arith.constant 0 : index
    %89 = vector.load %arg10[%c0_62, %c0_63, %c0_64] : memref<4x16x32xf32, #tpu.memory_space<vmem>>, vector<1x16x32xf32>
    %90 = vector.shape_cast %89 : vector<1x16x32xf32> to vector<16x32xf32>
    %cst_65 = arith.constant dense<0.000000e+00> : vector<8x32xf32>
    %91 = tpu.matmul %88, %90, %cst_65 {dimension_numbers = #tpu.dot_dimension_numbers<[1], [0], [0], [1], [0, 0, 1, 1], [], []>} : vector<8x16xf32>, vector<16x32xf32>, vector<8x32xf32> -> vector<8x32xf32>
    %92 = vector.broadcast %72 : vector<1x32xf32> to vector<8x32xf32>
    %93 = arith.addf %92, %91 : vector<8x32xf32>
    %94 = vector.extract_strided_slice %54 {offsets = [0, 0], sizes = [8, 16], strides = [1, 1]} : vector<16x16xf32> to vector<8x16xf32>
    %95 = vector.extract_strided_slice %61 {offsets = [0, 0], sizes = [8, 16], strides = [1, 1]} : vector<16x16xf32> to vector<8x16xf32>
    %96 = vector.extract_strided_slice %68 {offsets = [0, 0], sizes = [8, 16], strides = [1, 1]} : vector<16x16xf32> to vector<8x16xf32>
    %cst_66 = arith.constant dense<0.000000e+00> : vector<8x8xf32>
    %97 = tpu.matmul %94, %95, %cst_66 {dimension_numbers = #tpu.dot_dimension_numbers<[1], [1], [0], [0], [0, 0, 1, 0], [], []>} : vector<8x16xf32>, vector<8x16xf32>, vector<8x8xf32> -> vector<8x8xf32>
    %98 = arith.addf %97, %70 : vector<8x8xf32>
    %cst_67 = arith.constant dense<0xFF800000> : vector<8xf32>
    %99 = vector.multi_reduction <maximumf>, %98, %cst_67 [1] : vector<8x8xf32> to vector<8xf32>
    %100 = vector.shape_cast %99 : vector<8xf32> to vector<8x1xf32>
    %101 = vector.broadcast %100 : vector<8x1xf32> to vector<8x8xf32>
    %102 = arith.subf %98, %101 : vector<8x8xf32>
    %103 = math.exp %102 : vector<8x8xf32>
    %cst_68 = arith.constant dense<0.000000e+00> : vector<8xf32>
    %104 = vector.multi_reduction <add>, %103, %cst_68 [1] : vector<8x8xf32> to vector<8xf32>
    %105 = vector.shape_cast %104 : vector<8xf32> to vector<8x1xf32>
    %106 = tpu.reciprocal %105 {approx = true} : vector<8x1xf32> -> vector<8x1xf32>
    %107 = vector.broadcast %106 : vector<8x1xf32> to vector<8x8xf32>
    %108 = arith.mulf %103, %107 : vector<8x8xf32>
    %cst_69 = arith.constant dense<0.000000e+00> : vector<8x16xf32>
    %109 = tpu.matmul %108, %96, %cst_69 {dimension_numbers = #tpu.dot_dimension_numbers<[1], [0], [0], [1], [0, 0, 1, 1], [], []>} : vector<8x8xf32>, vector<8x16xf32>, vector<8x16xf32> -> vector<8x16xf32>
    %c1_70 = arith.constant 1 : index
    %c0_71 = arith.constant 0 : index
    %c0_72 = arith.constant 0 : index
    %110 = vector.load %arg10[%c1_70, %c0_71, %c0_72] : memref<4x16x32xf32, #tpu.memory_space<vmem>>, vector<1x16x32xf32>
    %111 = vector.shape_cast %110 : vector<1x16x32xf32> to vector<16x32xf32>
    %cst_73 = arith.constant dense<0.000000e+00> : vector<8x32xf32>
    %112 = tpu.matmul %109, %111, %cst_73 {dimension_numbers = #tpu.dot_dimension_numbers<[1], [0], [0], [1], [0, 0, 1, 1], [], []>} : vector<8x16xf32>, vector<16x32xf32>, vector<8x32xf32> -> vector<8x32xf32>
    %113 = arith.addf %93, %112 : vector<8x32xf32>
    %c0_74 = arith.constant 0 : index
    %c0_75 = arith.constant 0 : index
    %114 = vector.load %arg25[%c0_74, %c0_75] : memref<16x32xf32, #tpu.memory_space<vmem>>, vector<8x32xf32>
    tpu.vector_store %arg25[%c0_74, %c0_75], %113 {strides = array<i32>} : memref<16x32xf32, #tpu.memory_space<vmem>>, vector<8x32xf32>,
    %c1_76 = arith.constant 1 : index
    %c0_77 = arith.constant 0 : index
    %c0_78 = arith.constant 0 : index
    %115 = vector.load %arg1[%c1_76, %c0_77, %c0_78] : memref<2x8x8xf32, #tpu.memory_space<vmem>>, vector<1x8x8xf32>
    %116 = vector.shape_cast %115 : vector<1x8x8xf32> to vector<8x8xf32>
    %c0_79 = arith.constant 0 : index
    %c0_80 = arith.constant 0 : index
    %c0_81 = arith.constant 0 : index
    %117 = vector.load %arg11[%c0_79, %c0_80, %c0_81] : memref<2x1x32xf32, #tpu.memory_space<vmem>>, vector<1x1x32xf32>
    %118 = vector.shape_cast %117 : vector<1x1x32xf32> to vector<1x32xf32>
    %119 = vector.extract_strided_slice %31 {offsets = [8, 0], sizes = [8, 16], strides = [1, 1]} : vector<16x16xf32> to vector<8x16xf32>
    %120 = vector.extract_strided_slice %38 {offsets = [8, 0], sizes = [8, 16], strides = [1, 1]} : vector<16x16xf32> to vector<8x16xf32>
    %121 = vector.extract_strided_slice %45 {offsets = [8, 0], sizes = [8, 16], strides = [1, 1]} : vector<16x16xf32> to vector<8x16xf32>
    %cst_82 = arith.constant dense<0.000000e+00> : vector<8x8xf32>
    %122 = tpu.matmul %119, %120, %cst_82 {dimension_numbers = #tpu.dot_dimension_numbers<[1], [1], [0], [0], [0, 0, 1, 0], [], []>} : vector<8x16xf32>, vector<8x16xf32>, vector<8x8xf32> -> vector<8x8xf32>
    %123 = arith.addf %122, %116 : vector<8x8xf32>
    %cst_83 = arith.constant dense<0xFF800000> : vector<8xf32>
    %124 = vector.multi_reduction <maximumf>, %123, %cst_83 [1] : vector<8x8xf32> to vector<8xf32>
    %125 = vector.shape_cast %124 : vector<8xf32> to vector<8x1xf32>
    %126 = vector.broadcast %125 : vector<8x1xf32> to vector<8x8xf32>
    %127 = arith.subf %123, %126 : vector<8x8xf32>
    %128 = math.exp %127 : vector<8x8xf32>
    %cst_84 = arith.constant dense<0.000000e+00> : vector<8xf32>
    %129 = vector.multi_reduction <add>, %128, %cst_84 [1] : vector<8x8xf32> to vector<8xf32>
    %130 = vector.shape_cast %129 : vector<8xf32> to vector<8x1xf32>
    %131 = tpu.reciprocal %130 {approx = true} : vector<8x1xf32> -> vector<8x1xf32>
    %132 = vector.broadcast %131 : vector<8x1xf32> to vector<8x8xf32>
    %133 = arith.mulf %128, %132 : vector<8x8xf32>
    %cst_85 = arith.constant dense<0.000000e+00> : vector<8x16xf32>
    %134 = tpu.matmul %133, %121, %cst_85 {dimension_numbers = #tpu.dot_dimension_numbers<[1], [0], [0], [1], [0, 0, 1, 1], [], []>} : vector<8x8xf32>, vector<8x16xf32>, vector<8x16xf32> -> vector<8x16xf32>
    %c0_86 = arith.constant 0 : index
    %c0_87 = arith.constant 0 : index
    %c0_88 = arith.constant 0 : index
    %135 = vector.load %arg10[%c0_86, %c0_87, %c0_88] : memref<4x16x32xf32, #tpu.memory_space<vmem>>, vector<1x16x32xf32>
    %136 = vector.shape_cast %135 : vector<1x16x32xf32> to vector<16x32xf32>
    %cst_89 = arith.constant dense<0.000000e+00> : vector<8x32xf32>
    %137 = tpu.matmul %134, %136, %cst_89 {dimension_numbers = #tpu.dot_dimension_numbers<[1], [0], [0], [1], [0, 0, 1, 1], [], []>} : vector<8x16xf32>, vector<16x32xf32>, vector<8x32xf32> -> vector<8x32xf32>
    %138 = vector.broadcast %118 : vector<1x32xf32> to vector<8x32xf32>
    %139 = arith.addf %138, %137 : vector<8x32xf32>
    %140 = vector.extract_strided_slice %54 {offsets = [8, 0], sizes = [8, 16], strides = [1, 1]} : vector<16x16xf32> to vector<8x16xf32>
    %141 = vector.extract_strided_slice %61 {offsets = [8, 0], sizes = [8, 16], strides = [1, 1]} : vector<16x16xf32> to vector<8x16xf32>
    %142 = vector.extract_strided_slice %68 {offsets = [8, 0], sizes = [8, 16], strides = [1, 1]} : vector<16x16xf32> to vector<8x16xf32>
    %cst_90 = arith.constant dense<0.000000e+00> : vector<8x8xf32>
    %143 = tpu.matmul %140, %141, %cst_90 {dimension_numbers = #tpu.dot_dimension_numbers<[1], [1], [0], [0], [0, 0, 1, 0], [], []>} : vector<8x16xf32>, vector<8x16xf32>, vector<8x8xf32> -> vector<8x8xf32>
    %144 = arith.addf %143, %116 : vector<8x8xf32>
    %cst_91 = arith.constant dense<0xFF800000> : vector<8xf32>
    %145 = vector.multi_reduction <maximumf>, %144, %cst_91 [1] : vector<8x8xf32> to vector<8xf32>
    %146 = vector.shape_cast %145 : vector<8xf32> to vector<8x1xf32>
    %147 = vector.broadcast %146 : vector<8x1xf32> to vector<8x8xf32>
    %148 = arith.subf %144, %147 : vector<8x8xf32>
    %149 = math.exp %148 : vector<8x8xf32>
    %cst_92 = arith.constant dense<0.000000e+00> : vector<8xf32>
    %150 = vector.multi_reduction <add>, %149, %cst_92 [1] : vector<8x8xf32> to vector<8xf32>
    %151 = vector.shape_cast %150 : vector<8xf32> to vector<8x1xf32>
    %152 = tpu.reciprocal %151 {approx = true} : vector<8x1xf32> -> vector<8x1xf32>
    %153 = vector.broadcast %152 : vector<8x1xf32> to vector<8x8xf32>
    %154 = arith.mulf %149, %153 : vector<8x8xf32>
    %cst_93 = arith.constant dense<0.000000e+00> : vector<8x16xf32>
    %155 = tpu.matmul %154, %142, %cst_93 {dimension_numbers = #tpu.dot_dimension_numbers<[1], [0], [0], [1], [0, 0, 1, 1], [], []>} : vector<8x8xf32>, vector<8x16xf32>, vector<8x16xf32> -> vector<8x16xf32>
    %c1_94 = arith.constant 1 : index
    %c0_95 = arith.constant 0 : index
    %c0_96 = arith.constant 0 : index
    %156 = vector.load %arg10[%c1_94, %c0_95, %c0_96] : memref<4x16x32xf32, #tpu.memory_space<vmem>>, vector<1x16x32xf32>
    %157 = vector.shape_cast %156 : vector<1x16x32xf32> to vector<16x32xf32>
    %cst_97 = arith.constant dense<0.000000e+00> : vector<8x32xf32>
    %158 = tpu.matmul %155, %157, %cst_97 {dimension_numbers = #tpu.dot_dimension_numbers<[1], [0], [0], [1], [0, 0, 1, 1], [], []>} : vector<8x16xf32>, vector<16x32xf32>, vector<8x32xf32> -> vector<8x32xf32>
    %159 = arith.addf %139, %158 : vector<8x32xf32>
    %c8 = arith.constant 8 : index
    %c0_98 = arith.constant 0 : index
    %160 = vector.load %arg25[%c8, %c0_98] : memref<16x32xf32, #tpu.memory_space<vmem>>, vector<8x32xf32>
    tpu.vector_store %arg25[%c8, %c0_98], %159 {strides = array<i32>} : memref<16x32xf32, #tpu.memory_space<vmem>>, vector<8x32xf32>,
    %c0_99 = arith.constant 0 : index
    %c0_100 = arith.constant 0 : index
    %161 = vector.load %arg25[%c0_99, %c0_100] : memref<16x32xf32, #tpu.memory_space<vmem>>, vector<16x32xf32>
    %162 = arith.addf %161, %22 : vector<16x32xf32>
    %c0_101 = arith.constant 0 : index
    %c0_102 = arith.constant 0 : index
    %c0_103 = arith.constant 0 : index
    %163 = vector.load %arg12[%c0_101, %c0_102, %c0_103] : memref<2x1x32xf32, #tpu.memory_space<vmem>>, vector<1x1x32xf32>
    %164 = vector.shape_cast %163 : vector<1x1x32xf32> to vector<1x32xf32>
    %c0_104 = arith.constant 0 : index
    %c0_105 = arith.constant 0 : index
    %c0_106 = arith.constant 0 : index
    %165 = vector.load %arg13[%c0_104, %c0_105, %c0_106] : memref<2x1x32xf32, #tpu.memory_space<vmem>>, vector<1x1x32xf32>
    %166 = vector.shape_cast %165 : vector<1x1x32xf32> to vector<1x32xf32>
    %cst_107 = arith.constant dense<0.000000e+00> : vector<16xf32>
    %167 = vector.multi_reduction <add>, %162, %cst_107 [1] : vector<16x32xf32> to vector<16xf32>
    %168 = vector.shape_cast %167 : vector<16xf32> to vector<16x1xf32>
    %cst_108 = arith.constant 3.200000e+01 : f32
    %169 = vector.broadcast %cst_108 : f32 to vector<16x1xf32>
    %170 = arith.divf %168, %169 : vector<16x1xf32>
    %171 = vector.broadcast %170 : vector<16x1xf32> to vector<16x32xf32>
    %172 = arith.subf %162, %171 : vector<16x32xf32>
    %173 = arith.mulf %172, %172 : vector<16x32xf32>
    %cst_109 = arith.constant dense<0.000000e+00> : vector<16xf32>
    %174 = vector.multi_reduction <add>, %173, %cst_109 [1] : vector<16x32xf32> to vector<16xf32>
    %175 = vector.shape_cast %174 : vector<16xf32> to vector<16x1xf32>
    %cst_110 = arith.constant 3.200000e+01 : f32
    %176 = vector.broadcast %cst_110 : f32 to vector<16x1xf32>
    %177 = arith.divf %175, %176 : vector<16x1xf32>
    %cst_111 = arith.constant 9.99999996E-13 : f32
    %178 = vector.broadcast %cst_111 : f32 to vector<16x1xf32>
    %179 = arith.addf %177, %178 : vector<16x1xf32>
    %180 = math.rsqrt %179 : vector<16x1xf32>
    %181 = vector.broadcast %180 : vector<16x1xf32> to vector<16x32xf32>
    %182 = arith.mulf %172, %181 : vector<16x32xf32>
    %183 = vector.broadcast %164 : vector<1x32xf32> to vector<16x32xf32>
    %184 = arith.mulf %182, %183 : vector<16x32xf32>
    %185 = vector.broadcast %166 : vector<1x32xf32> to vector<16x32xf32>
    %186 = arith.addf %184, %185 : vector<16x32xf32>
    %c0_112 = arith.constant 0 : index
    %c0_113 = arith.constant 0 : index
    %c0_114 = arith.constant 0 : index
    %187 = vector.load %arg14[%c0_112, %c0_113, %c0_114] : memref<2x32x64xf32, #tpu.memory_space<vmem>>, vector<1x32x64xf32>
    %188 = vector.shape_cast %187 : vector<1x32x64xf32> to vector<32x64xf32>
    %cst_115 = arith.constant dense<0.000000e+00> : vector<16x64xf32>
    %189 = tpu.matmul %186, %188, %cst_115 {dimension_numbers = #tpu.dot_dimension_numbers<[1], [0], [0], [1], [0, 0, 1, 1], [], []>} : vector<16x32xf32>, vector<32x64xf32>, vector<16x64xf32> -> vector<16x64xf32>
    %c0_116 = arith.constant 0 : index
    %c0_117 = arith.constant 0 : index
    %c0_118 = arith.constant 0 : index
    %190 = vector.load %arg15[%c0_116, %c0_117, %c0_118] : memref<2x1x64xf32, #tpu.memory_space<vmem>>, vector<1x1x64xf32>
    %191 = vector.shape_cast %190 : vector<1x1x64xf32> to vector<1x64xf32>
    %192 = vector.broadcast %191 : vector<1x64xf32> to vector<16x64xf32>
    %193 = arith.addf %189, %192 : vector<16x64xf32>
    %cst_119 = arith.constant 5.000000e-01 : f32
    %194 = vector.broadcast %cst_119 : f32 to vector<16x64xf32>
    %195 = arith.mulf %194, %193 : vector<16x64xf32>
    %cst_120 = arith.constant 4.471500e-02 : f32
    %196 = vector.broadcast %cst_120 : f32 to vector<16x64xf32>
    %197 = arith.mulf %196, %193 : vector<16x64xf32>
    %198 = arith.mulf %197, %193 : vector<16x64xf32>
    %199 = arith.mulf %198, %193 : vector<16x64xf32>
    %200 = arith.addf %193, %199 : vector<16x64xf32>
    %cst_121 = arith.constant 0.797884583 : f32
    %201 = vector.broadcast %cst_121 : f32 to vector<16x64xf32>
    %202 = arith.mulf %201, %200 : vector<16x64xf32>
    %203 = math.tanh %202 : vector<16x64xf32>
    %cst_122 = arith.constant 1.000000e+00 : f32
    %204 = vector.broadcast %cst_122 : f32 to vector<16x64xf32>
    %205 = arith.addf %204, %203 : vector<16x64xf32>
    %206 = arith.mulf %195, %205 : vector<16x64xf32>
    %c0_123 = arith.constant 0 : index
    %c0_124 = arith.constant 0 : index
    %c0_125 = arith.constant 0 : index
    %207 = vector.load %arg16[%c0_123, %c0_124, %c0_125] : memref<2x64x32xf32, #tpu.memory_space<vmem>>, vector<1x64x32xf32>
    %208 = vector.shape_cast %207 : vector<1x64x32xf32> to vector<64x32xf32>
    %cst_126 = arith.constant dense<0.000000e+00> : vector<16x32xf32>
    %209 = tpu.matmul %206, %208, %cst_126 {dimension_numbers = #tpu.dot_dimension_numbers<[1], [0], [0], [1], [0, 0, 1, 1], [], []>} : vector<16x64xf32>, vector<64x32xf32>, vector<16x32xf32> -> vector<16x32xf32>
    %c0_127 = arith.constant 0 : index
    %c0_128 = arith.constant 0 : index
    %c0_129 = arith.constant 0 : index
    %210 = vector.load %arg17[%c0_127, %c0_128, %c0_129] : memref<2x1x32xf32, #tpu.memory_space<vmem>>, vector<1x1x32xf32>
    %211 = vector.shape_cast %210 : vector<1x1x32xf32> to vector<1x32xf32>
    %212 = vector.broadcast %211 : vector<1x32xf32> to vector<16x32xf32>
    %213 = arith.addf %209, %212 : vector<16x32xf32>
    %214 = arith.addf %213, %186 : vector<16x32xf32>
    %c0_130 = arith.constant 0 : index
    %c0_131 = arith.constant 0 : index
    %c0_132 = arith.constant 0 : index
    %215 = vector.load %arg18[%c0_130, %c0_131, %c0_132] : memref<2x1x32xf32, #tpu.memory_space<vmem>>, vector<1x1x32xf32>
    %216 = vector.shape_cast %215 : vector<1x1x32xf32> to vector<1x32xf32>
    %c0_133 = arith.constant 0 : index
    %c0_134 = arith.constant 0 : index
    %c0_135 = arith.constant 0 : index
    %217 = vector.load %arg19[%c0_133, %c0_134, %c0_135] : memref<2x1x32xf32, #tpu.memory_space<vmem>>, vector<1x1x32xf32>
    %218 = vector.shape_cast %217 : vector<1x1x32xf32> to vector<1x32xf32>
    %cst_136 = arith.constant dense<0.000000e+00> : vector<16xf32>
    %219 = vector.multi_reduction <add>, %214, %cst_136 [1] : vector<16x32xf32> to vector<16xf32>
    %220 = vector.shape_cast %219 : vector<16xf32> to vector<16x1xf32>
    %cst_137 = arith.constant 3.200000e+01 : f32
    %221 = vector.broadcast %cst_137 : f32 to vector<16x1xf32>
    %222 = arith.divf %220, %221 : vector<16x1xf32>
    %223 = vector.broadcast %222 : vector<16x1xf32> to vector<16x32xf32>
    %224 = arith.subf %214, %223 : vector<16x32xf32>
    %225 = arith.mulf %224, %224 : vector<16x32xf32>
    %cst_138 = arith.constant dense<0.000000e+00> : vector<16xf32>
    %226 = vector.multi_reduction <add>, %225, %cst_138 [1] : vector<16x32xf32> to vector<16xf32>
    %227 = vector.shape_cast %226 : vector<16xf32> to vector<16x1xf32>
    %cst_139 = arith.constant 3.200000e+01 : f32
    %228 = vector.broadcast %cst_139 : f32 to vector<16x1xf32>
    %229 = arith.divf %227, %228 : vector<16x1xf32>
    %cst_140 = arith.constant 9.99999996E-13 : f32
    %230 = vector.broadcast %cst_140 : f32 to vector<16x1xf32>
    %231 = arith.addf %229, %230 : vector<16x1xf32>
    %232 = math.rsqrt %231 : vector<16x1xf32>
    %233 = vector.broadcast %232 : vector<16x1xf32> to vector<16x32xf32>
    %234 = arith.mulf %224, %233 : vector<16x32xf32>
    %235 = vector.broadcast %216 : vector<1x32xf32> to vector<16x32xf32>
    %236 = arith.mulf %234, %235 : vector<16x32xf32>
    %237 = vector.broadcast %218 : vector<1x32xf32> to vector<16x32xf32>
    %238 = arith.addf %236, %237 : vector<16x32xf32>
    %c2 = arith.constant 2 : index
    %c0_141 = arith.constant 0 : index
    %c0_142 = arith.constant 0 : index
    %239 = vector.load %arg4[%c2, %c0_141, %c0_142] : memref<4x32x16xf32, #tpu.memory_space<vmem>>, vector<1x32x16xf32>
    %240 = vector.shape_cast %239 : vector<1x32x16xf32> to vector<32x16xf32>
    %cst_143 = arith.constant dense<0.000000e+00> : vector<16x16xf32>
    %241 = tpu.matmul %238, %240, %cst_143 {dimension_numbers = #tpu.dot_dimension_numbers<[1], [0], [0], [1], [0, 0, 1, 1], [], []>} : vector<16x32xf32>, vector<32x16xf32>, vector<16x16xf32> -> vector<16x16xf32>
    %c2_144 = arith.constant 2 : index
    %c0_145 = arith.constant 0 : index
    %c0_146 = arith.constant 0 : index
    %242 = vector.load %arg5[%c2_144, %c0_145, %c0_146] : memref<4x1x16xf32, #tpu.memory_space<vmem>>, vector<1x1x16xf32>
    %243 = vector.shape_cast %242 : vector<1x1x16xf32> to vector<1x16xf32>
    %244 = vector.broadcast %243 : vector<1x16xf32> to vector<16x16xf32>
    %245 = arith.addf %241, %244 : vector<16x16xf32>
    %cst_147 = arith.constant 2.500000e-01 : f32
    %246 = vector.broadcast %cst_147 : f32 to vector<16x16xf32>
    %247 = arith.mulf %245, %246 : vector<16x16xf32>
    %c2_148 = arith.constant 2 : index
    %c0_149 = arith.constant 0 : index
    %c0_150 = arith.constant 0 : index
    %248 = vector.load %arg6[%c2_148, %c0_149, %c0_150] : memref<4x32x16xf32, #tpu.memory_space<vmem>>, vector<1x32x16xf32>
    %249 = vector.shape_cast %248 : vector<1x32x16xf32> to vector<32x16xf32>
    %cst_151 = arith.constant dense<0.000000e+00> : vector<16x16xf32>
    %250 = tpu.matmul %238, %249, %cst_151 {dimension_numbers = #tpu.dot_dimension_numbers<[1], [0], [0], [1], [0, 0, 1, 1], [], []>} : vector<16x32xf32>, vector<32x16xf32>, vector<16x16xf32> -> vector<16x16xf32>
    %c2_152 = arith.constant 2 : index
    %c0_153 = arith.constant 0 : index
    %c0_154 = arith.constant 0 : index
    %251 = vector.load %arg7[%c2_152, %c0_153, %c0_154] : memref<4x1x16xf32, #tpu.memory_space<vmem>>, vector<1x1x16xf32>
    %252 = vector.shape_cast %251 : vector<1x1x16xf32> to vector<1x16xf32>
    %253 = vector.broadcast %252 : vector<1x16xf32> to vector<16x16xf32>
    %254 = arith.addf %250, %253 : vector<16x16xf32>
    %c2_155 = arith.constant 2 : index
    %c0_156 = arith.constant 0 : index
    %c0_157 = arith.constant 0 : index
    %255 = vector.load %arg8[%c2_155, %c0_156, %c0_157] : memref<4x32x16xf32, #tpu.memory_space<vmem>>, vector<1x32x16xf32>
    %256 = vector.shape_cast %255 : vector<1x32x16xf32> to vector<32x16xf32>
    %cst_158 = arith.constant dense<0.000000e+00> : vector<16x16xf32>
    %257 = tpu.matmul %238, %256, %cst_158 {dimension_numbers = #tpu.dot_dimension_numbers<[1], [0], [0], [1], [0, 0, 1, 1], [], []>} : vector<16x32xf32>, vector<32x16xf32>, vector<16x16xf32> -> vector<16x16xf32>
    %c2_159 = arith.constant 2 : index
    %c0_160 = arith.constant 0 : index
    %c0_161 = arith.constant 0 : index
    %258 = vector.load %arg9[%c2_159, %c0_160, %c0_161] : memref<4x1x16xf32, #tpu.memory_space<vmem>>, vector<1x1x16xf32>
    %259 = vector.shape_cast %258 : vector<1x1x16xf32> to vector<1x16xf32>
    %260 = vector.broadcast %259 : vector<1x16xf32> to vector<16x16xf32>
    %261 = arith.addf %257, %260 : vector<16x16xf32>
    %c3 = arith.constant 3 : index
    %c0_162 = arith.constant 0 : index
    %c0_163 = arith.constant 0 : index
    %262 = vector.load %arg4[%c3, %c0_162, %c0_163] : memref<4x32x16xf32, #tpu.memory_space<vmem>>, vector<1x32x16xf32>
    %263 = vector.shape_cast %262 : vector<1x32x16xf32> to vector<32x16xf32>
    %cst_164 = arith.constant dense<0.000000e+00> : vector<16x16xf32>
    %264 = tpu.matmul %238, %263, %cst_164 {dimension_numbers = #tpu.dot_dimension_numbers<[1], [0], [0], [1], [0, 0, 1, 1], [], []>} : vector<16x32xf32>, vector<32x16xf32>, vector<16x16xf32> -> vector<16x16xf32>
    %c3_165 = arith.constant 3 : index
    %c0_166 = arith.constant 0 : index
    %c0_167 = arith.constant 0 : index
    %265 = vector.load %arg5[%c3_165, %c0_166, %c0_167] : memref<4x1x16xf32, #tpu.memory_space<vmem>>, vector<1x1x16xf32>
    %266 = vector.shape_cast %265 : vector<1x1x16xf32> to vector<1x16xf32>
    %267 = vector.broadcast %266 : vector<1x16xf32> to vector<16x16xf32>
    %268 = arith.addf %264, %267 : vector<16x16xf32>
    %cst_168 = arith.constant 2.500000e-01 : f32
    %269 = vector.broadcast %cst_168 : f32 to vector<16x16xf32>
    %270 = arith.mulf %268, %269 : vector<16x16xf32>
    %c3_169 = arith.constant 3 : index
    %c0_170 = arith.constant 0 : index
    %c0_171 = arith.constant 0 : index
    %271 = vector.load %arg6[%c3_169, %c0_170, %c0_171] : memref<4x32x16xf32, #tpu.memory_space<vmem>>, vector<1x32x16xf32>
    %272 = vector.shape_cast %271 : vector<1x32x16xf32> to vector<32x16xf32>
    %cst_172 = arith.constant dense<0.000000e+00> : vector<16x16xf32>
    %273 = tpu.matmul %238, %272, %cst_172 {dimension_numbers = #tpu.dot_dimension_numbers<[1], [0], [0], [1], [0, 0, 1, 1], [], []>} : vector<16x32xf32>, vector<32x16xf32>, vector<16x16xf32> -> vector<16x16xf32>
    %c3_173 = arith.constant 3 : index
    %c0_174 = arith.constant 0 : index
    %c0_175 = arith.constant 0 : index
    %274 = vector.load %arg7[%c3_173, %c0_174, %c0_175] : memref<4x1x16xf32, #tpu.memory_space<vmem>>, vector<1x1x16xf32>
    %275 = vector.shape_cast %274 : vector<1x1x16xf32> to vector<1x16xf32>
    %276 = vector.broadcast %275 : vector<1x16xf32> to vector<16x16xf32>
    %277 = arith.addf %273, %276 : vector<16x16xf32>
    %c3_176 = arith.constant 3 : index
    %c0_177 = arith.constant 0 : index
    %c0_178 = arith.constant 0 : index
    %278 = vector.load %arg8[%c3_176, %c0_177, %c0_178] : memref<4x32x16xf32, #tpu.memory_space<vmem>>, vector<1x32x16xf32>
    %279 = vector.shape_cast %278 : vector<1x32x16xf32> to vector<32x16xf32>
    %cst_179 = arith.constant dense<0.000000e+00> : vector<16x16xf32>
    %280 = tpu.matmul %238, %279, %cst_179 {dimension_numbers = #tpu.dot_dimension_numbers<[1], [0], [0], [1], [0, 0, 1, 1], [], []>} : vector<16x32xf32>, vector<32x16xf32>, vector<16x16xf32> -> vector<16x16xf32>
    %c3_180 = arith.constant 3 : index
    %c0_181 = arith.constant 0 : index
    %c0_182 = arith.constant 0 : index
    %281 = vector.load %arg9[%c3_180, %c0_181, %c0_182] : memref<4x1x16xf32, #tpu.memory_space<vmem>>, vector<1x1x16xf32>
    %282 = vector.shape_cast %281 : vector<1x1x16xf32> to vector<1x16xf32>
    %283 = vector.broadcast %282 : vector<1x16xf32> to vector<16x16xf32>
    %284 = arith.addf %280, %283 : vector<16x16xf32>
    %c0_183 = arith.constant 0 : index
    %c0_184 = arith.constant 0 : index
    %c0_185 = arith.constant 0 : index
    %285 = vector.load %arg1[%c0_183, %c0_184, %c0_185] : memref<2x8x8xf32, #tpu.memory_space<vmem>>, vector<1x8x8xf32>
    %286 = vector.shape_cast %285 : vector<1x8x8xf32> to vector<8x8xf32>
    %c1_186 = arith.constant 1 : index
    %c0_187 = arith.constant 0 : index
    %c0_188 = arith.constant 0 : index
    %287 = vector.load %arg11[%c1_186, %c0_187, %c0_188] : memref<2x1x32xf32, #tpu.memory_space<vmem>>, vector<1x1x32xf32>
    %288 = vector.shape_cast %287 : vector<1x1x32xf32> to vector<1x32xf32>
    %289 = vector.extract_strided_slice %247 {offsets = [0, 0], sizes = [8, 16], strides = [1, 1]} : vector<16x16xf32> to vector<8x16xf32>
    %290 = vector.extract_strided_slice %254 {offsets = [0, 0], sizes = [8, 16], strides = [1, 1]} : vector<16x16xf32> to vector<8x16xf32>
    %291 = vector.extract_strided_slice %261 {offsets = [0, 0], sizes = [8, 16], strides = [1, 1]} : vector<16x16xf32> to vector<8x16xf32>
    %cst_189 = arith.constant dense<0.000000e+00> : vector<8x8xf32>
    %292 = tpu.matmul %289, %290, %cst_189 {dimension_numbers = #tpu.dot_dimension_numbers<[1], [1], [0], [0], [0, 0, 1, 0], [], []>} : vector<8x16xf32>, vector<8x16xf32>, vector<8x8xf32> -> vector<8x8xf32>
    %293 = arith.addf %292, %286 : vector<8x8xf32>
    %cst_190 = arith.constant dense<0xFF800000> : vector<8xf32>
    %294 = vector.multi_reduction <maximumf>, %293, %cst_190 [1] : vector<8x8xf32> to vector<8xf32>
    %295 = vector.shape_cast %294 : vector<8xf32> to vector<8x1xf32>
    %296 = vector.broadcast %295 : vector<8x1xf32> to vector<8x8xf32>
    %297 = arith.subf %293, %296 : vector<8x8xf32>
    %298 = math.exp %297 : vector<8x8xf32>
    %cst_191 = arith.constant dense<0.000000e+00> : vector<8xf32>
    %299 = vector.multi_reduction <add>, %298, %cst_191 [1] : vector<8x8xf32> to vector<8xf32>
    %300 = vector.shape_cast %299 : vector<8xf32> to vector<8x1xf32>
    %301 = tpu.reciprocal %300 {approx = true} : vector<8x1xf32> -> vector<8x1xf32>
    %302 = vector.broadcast %301 : vector<8x1xf32> to vector<8x8xf32>
    %303 = arith.mulf %298, %302 : vector<8x8xf32>
    %cst_192 = arith.constant dense<0.000000e+00> : vector<8x16xf32>
    %304 = tpu.matmul %303, %291, %cst_192 {dimension_numbers = #tpu.dot_dimension_numbers<[1], [0], [0], [1], [0, 0, 1, 1], [], []>} : vector<8x8xf32>, vector<8x16xf32>, vector<8x16xf32> -> vector<8x16xf32>
    %c2_193 = arith.constant 2 : index
    %c0_194 = arith.constant 0 : index
    %c0_195 = arith.constant 0 : index
    %305 = vector.load %arg10[%c2_193, %c0_194, %c0_195] : memref<4x16x32xf32, #tpu.memory_space<vmem>>, vector<1x16x32xf32>
    %306 = vector.shape_cast %305 : vector<1x16x32xf32> to vector<16x32xf32>
    %cst_196 = arith.constant dense<0.000000e+00> : vector<8x32xf32>
    %307 = tpu.matmul %304, %306, %cst_196 {dimension_numbers = #tpu.dot_dimension_numbers<[1], [0], [0], [1], [0, 0, 1, 1], [], []>} : vector<8x16xf32>, vector<16x32xf32>, vector<8x32xf32> -> vector<8x32xf32>
    %308 = vector.broadcast %288 : vector<1x32xf32> to vector<8x32xf32>
    %309 = arith.addf %308, %307 : vector<8x32xf32>
    %310 = vector.extract_strided_slice %270 {offsets = [0, 0], sizes = [8, 16], strides = [1, 1]} : vector<16x16xf32> to vector<8x16xf32>
    %311 = vector.extract_strided_slice %277 {offsets = [0, 0], sizes = [8, 16], strides = [1, 1]} : vector<16x16xf32> to vector<8x16xf32>
    %312 = vector.extract_strided_slice %284 {offsets = [0, 0], sizes = [8, 16], strides = [1, 1]} : vector<16x16xf32> to vector<8x16xf32>
    %cst_197 = arith.constant dense<0.000000e+00> : vector<8x8xf32>
    %313 = tpu.matmul %310, %311, %cst_197 {dimension_numbers = #tpu.dot_dimension_numbers<[1], [1], [0], [0], [0, 0, 1, 0], [], []>} : vector<8x16xf32>, vector<8x16xf32>, vector<8x8xf32> -> vector<8x8xf32>
    %314 = arith.addf %313, %286 : vector<8x8xf32>
    %cst_198 = arith.constant dense<0xFF800000> : vector<8xf32>
    %315 = vector.multi_reduction <maximumf>, %314, %cst_198 [1] : vector<8x8xf32> to vector<8xf32>
    %316 = vector.shape_cast %315 : vector<8xf32> to vector<8x1xf32>
    %317 = vector.broadcast %316 : vector<8x1xf32> to vector<8x8xf32>
    %318 = arith.subf %314, %317 : vector<8x8xf32>
    %319 = math.exp %318 : vector<8x8xf32>
    %cst_199 = arith.constant dense<0.000000e+00> : vector<8xf32>
    %320 = vector.multi_reduction <add>, %319, %cst_199 [1] : vector<8x8xf32> to vector<8xf32>
    %321 = vector.shape_cast %320 : vector<8xf32> to vector<8x1xf32>
    %322 = tpu.reciprocal %321 {approx = true} : vector<8x1xf32> -> vector<8x1xf32>
    %323 = vector.broadcast %322 : vector<8x1xf32> to vector<8x8xf32>
    %324 = arith.mulf %319, %323 : vector<8x8xf32>
    %cst_200 = arith.constant dense<0.000000e+00> : vector<8x16xf32>
    %325 = tpu.matmul %324, %312, %cst_200 {dimension_numbers = #tpu.dot_dimension_numbers<[1], [0], [0], [1], [0, 0, 1, 1], [], []>} : vector<8x8xf32>, vector<8x16xf32>, vector<8x16xf32> -> vector<8x16xf32>
    %c3_201 = arith.constant 3 : index
    %c0_202 = arith.constant 0 : index
    %c0_203 = arith.constant 0 : index
    %326 = vector.load %arg10[%c3_201, %c0_202, %c0_203] : memref<4x16x32xf32, #tpu.memory_space<vmem>>, vector<1x16x32xf32>
    %327 = vector.shape_cast %326 : vector<1x16x32xf32> to vector<16x32xf32>
    %cst_204 = arith.constant dense<0.000000e+00> : vector<8x32xf32>
    %328 = tpu.matmul %325, %327, %cst_204 {dimension_numbers = #tpu.dot_dimension_numbers<[1], [0], [0], [1], [0, 0, 1, 1], [], []>} : vector<8x16xf32>, vector<16x32xf32>, vector<8x32xf32> -> vector<8x32xf32>
    %329 = arith.addf %309, %328 : vector<8x32xf32>
    %c0_205 = arith.constant 0 : index
    %c0_206 = arith.constant 0 : index
    %330 = vector.load %arg25[%c0_205, %c0_206] : memref<16x32xf32, #tpu.memory_space<vmem>>, vector<8x32xf32>
    tpu.vector_store %arg25[%c0_205, %c0_206], %329 {strides = array<i32>} : memref<16x32xf32, #tpu.memory_space<vmem>>, vector<8x32xf32>,
    %c1_207 = arith.constant 1 : index
    %c0_208 = arith.constant 0 : index
    %c0_209 = arith.constant 0 : index
    %331 = vector.load %arg1[%c1_207, %c0_208, %c0_209] : memref<2x8x8xf32, #tpu.memory_space<vmem>>, vector<1x8x8xf32>
    %332 = vector.shape_cast %331 : vector<1x8x8xf32> to vector<8x8xf32>
    %c1_210 = arith.constant 1 : index
    %c0_211 = arith.constant 0 : index
    %c0_212 = arith.constant 0 : index
    %333 = vector.load %arg11[%c1_210, %c0_211, %c0_212] : memref<2x1x32xf32, #tpu.memory_space<vmem>>, vector<1x1x32xf32>
    %334 = vector.shape_cast %333 : vector<1x1x32xf32> to vector<1x32xf32>
    %335 = vector.extract_strided_slice %247 {offsets = [8, 0], sizes = [8, 16], strides = [1, 1]} : vector<16x16xf32> to vector<8x16xf32>
    %336 = vector.extract_strided_slice %254 {offsets = [8, 0], sizes = [8, 16], strides = [1, 1]} : vector<16x16xf32> to vector<8x16xf32>
    %337 = vector.extract_strided_slice %261 {offsets = [8, 0], sizes = [8, 16], strides = [1, 1]} : vector<16x16xf32> to vector<8x16xf32>
    %cst_213 = arith.constant dense<0.000000e+00> : vector<8x8xf32>
    %338 = tpu.matmul %335, %336, %cst_213 {dimension_numbers = #tpu.dot_dimension_numbers<[1], [1], [0], [0], [0, 0, 1, 0], [], []>} : vector<8x16xf32>, vector<8x16xf32>, vector<8x8xf32> -> vector<8x8xf32>
    %339 = arith.addf %338, %332 : vector<8x8xf32>
    %cst_214 = arith.constant dense<0xFF800000> : vector<8xf32>
    %340 = vector.multi_reduction <maximumf>, %339, %cst_214 [1] : vector<8x8xf32> to vector<8xf32>
    %341 = vector.shape_cast %340 : vector<8xf32> to vector<8x1xf32>
    %342 = vector.broadcast %341 : vector<8x1xf32> to vector<8x8xf32>
    %343 = arith.subf %339, %342 : vector<8x8xf32>
    %344 = math.exp %343 : vector<8x8xf32>
    %cst_215 = arith.constant dense<0.000000e+00> : vector<8xf32>
    %345 = vector.multi_reduction <add>, %344, %cst_215 [1] : vector<8x8xf32> to vector<8xf32>
    %346 = vector.shape_cast %345 : vector<8xf32> to vector<8x1xf32>
    %347 = tpu.reciprocal %346 {approx = true} : vector<8x1xf32> -> vector<8x1xf32>
    %348 = vector.broadcast %347 : vector<8x1xf32> to vector<8x8xf32>
    %349 = arith.mulf %344, %348 : vector<8x8xf32>
    %cst_216 = arith.constant dense<0.000000e+00> : vector<8x16xf32>
    %350 = tpu.matmul %349, %337, %cst_216 {dimension_numbers = #tpu.dot_dimension_numbers<[1], [0], [0], [1], [0, 0, 1, 1], [], []>} : vector<8x8xf32>, vector<8x16xf32>, vector<8x16xf32> -> vector<8x16xf32>
    %c2_217 = arith.constant 2 : index
    %c0_218 = arith.constant 0 : index
    %c0_219 = arith.constant 0 : index
    %351 = vector.load %arg10[%c2_217, %c0_218, %c0_219] : memref<4x16x32xf32, #tpu.memory_space<vmem>>, vector<1x16x32xf32>
    %352 = vector.shape_cast %351 : vector<1x16x32xf32> to vector<16x32xf32>
    %cst_220 = arith.constant dense<0.000000e+00> : vector<8x32xf32>
    %353 = tpu.matmul %350, %352, %cst_220 {dimension_numbers = #tpu.dot_dimension_numbers<[1], [0], [0], [1], [0, 0, 1, 1], [], []>} : vector<8x16xf32>, vector<16x32xf32>, vector<8x32xf32> -> vector<8x32xf32>
    %354 = vector.broadcast %334 : vector<1x32xf32> to vector<8x32xf32>
    %355 = arith.addf %354, %353 : vector<8x32xf32>
    %356 = vector.extract_strided_slice %270 {offsets = [8, 0], sizes = [8, 16], strides = [1, 1]} : vector<16x16xf32> to vector<8x16xf32>
    %357 = vector.extract_strided_slice %277 {offsets = [8, 0], sizes = [8, 16], strides = [1, 1]} : vector<16x16xf32> to vector<8x16xf32>
    %358 = vector.extract_strided_slice %284 {offsets = [8, 0], sizes = [8, 16], strides = [1, 1]} : vector<16x16xf32> to vector<8x16xf32>
    %cst_221 = arith.constant dense<0.000000e+00> : vector<8x8xf32>
    %359 = tpu.matmul %356, %357, %cst_221 {dimension_numbers = #tpu.dot_dimension_numbers<[1], [1], [0], [0], [0, 0, 1, 0], [], []>} : vector<8x16xf32>, vector<8x16xf32>, vector<8x8xf32> -> vector<8x8xf32>
    %360 = arith.addf %359, %332 : vector<8x8xf32>
    %cst_222 = arith.constant dense<0xFF800000> : vector<8xf32>
    %361 = vector.multi_reduction <maximumf>, %360, %cst_222 [1] : vector<8x8xf32> to vector<8xf32>
    %362 = vector.shape_cast %361 : vector<8xf32> to vector<8x1xf32>
    %363 = vector.broadcast %362 : vector<8x1xf32> to vector<8x8xf32>
    %364 = arith.subf %360, %363 : vector<8x8xf32>
    %365 = math.exp %364 : vector<8x8xf32>
    %cst_223 = arith.constant dense<0.000000e+00> : vector<8xf32>
    %366 = vector.multi_reduction <add>, %365, %cst_223 [1] : vector<8x8xf32> to vector<8xf32>
    %367 = vector.shape_cast %366 : vector<8xf32> to vector<8x1xf32>
    %368 = tpu.reciprocal %367 {approx = true} : vector<8x1xf32> -> vector<8x1xf32>
    %369 = vector.broadcast %368 : vector<8x1xf32> to vector<8x8xf32>
    %370 = arith.mulf %365, %369 : vector<8x8xf32>
    %cst_224 = arith.constant dense<0.000000e+00> : vector<8x16xf32>
    %371 = tpu.matmul %370, %358, %cst_224 {dimension_numbers = #tpu.dot_dimension_numbers<[1], [0], [0], [1], [0, 0, 1, 1], [], []>} : vector<8x8xf32>, vector<8x16xf32>, vector<8x16xf32> -> vector<8x16xf32>
    %c3_225 = arith.constant 3 : index
    %c0_226 = arith.constant 0 : index
    %c0_227 = arith.constant 0 : index
    %372 = vector.load %arg10[%c3_225, %c0_226, %c0_227] : memref<4x16x32xf32, #tpu.memory_space<vmem>>, vector<1x16x32xf32>
    %373 = vector.shape_cast %372 : vector<1x16x32xf32> to vector<16x32xf32>
    %cst_228 = arith.constant dense<0.000000e+00> : vector<8x32xf32>
    %374 = tpu.matmul %371, %373, %cst_228 {dimension_numbers = #tpu.dot_dimension_numbers<[1], [0], [0], [1], [0, 0, 1, 1], [], []>} : vector<8x16xf32>, vector<16x32xf32>, vector<8x32xf32> -> vector<8x32xf32>
    %375 = arith.addf %355, %374 : vector<8x32xf32>
    %c8_229 = arith.constant 8 : index
    %c0_230 = arith.constant 0 : index
    %376 = vector.load %arg25[%c8_229, %c0_230] : memref<16x32xf32, #tpu.memory_space<vmem>>, vector<8x32xf32>
    tpu.vector_store %arg25[%c8_229, %c0_230], %375 {strides = array<i32>} : memref<16x32xf32, #tpu.memory_space<vmem>>, vector<8x32xf32>,
    %c0_231 = arith.constant 0 : index
    %c0_232 = arith.constant 0 : index
    %377 = vector.load %arg25[%c0_231, %c0_232] : memref<16x32xf32, #tpu.memory_space<vmem>>, vector<16x32xf32>
    %378 = arith.addf %377, %238 : vector<16x32xf32>
    %c1_233 = arith.constant 1 : index
    %c0_234 = arith.constant 0 : index
    %c0_235 = arith.constant 0 : index
    %379 = vector.load %arg12[%c1_233, %c0_234, %c0_235] : memref<2x1x32xf32, #tpu.memory_space<vmem>>, vector<1x1x32xf32>
    %380 = vector.shape_cast %379 : vector<1x1x32xf32> to vector<1x32xf32>
    %c1_236 = arith.constant 1 : index
    %c0_237 = arith.constant 0 : index
    %c0_238 = arith.constant 0 : index
    %381 = vector.load %arg13[%c1_236, %c0_237, %c0_238] : memref<2x1x32xf32, #tpu.memory_space<vmem>>, vector<1x1x32xf32>
    %382 = vector.shape_cast %381 : vector<1x1x32xf32> to vector<1x32xf32>
    %cst_239 = arith.constant dense<0.000000e+00> : vector<16xf32>
    %383 = vector.multi_reduction <add>, %378, %cst_239 [1] : vector<16x32xf32> to vector<16xf32>
    %384 = vector.shape_cast %383 : vector<16xf32> to vector<16x1xf32>
    %cst_240 = arith.constant 3.200000e+01 : f32
    %385 = vector.broadcast %cst_240 : f32 to vector<16x1xf32>
    %386 = arith.divf %384, %385 : vector<16x1xf32>
    %387 = vector.broadcast %386 : vector<16x1xf32> to vector<16x32xf32>
    %388 = arith.subf %378, %387 : vector<16x32xf32>
    %389 = arith.mulf %388, %388 : vector<16x32xf32>
    %cst_241 = arith.constant dense<0.000000e+00> : vector<16xf32>
    %390 = vector.multi_reduction <add>, %389, %cst_241 [1] : vector<16x32xf32> to vector<16xf32>
    %391 = vector.shape_cast %390 : vector<16xf32> to vector<16x1xf32>
    %cst_242 = arith.constant 3.200000e+01 : f32
    %392 = vector.broadcast %cst_242 : f32 to vector<16x1xf32>
    %393 = arith.divf %391, %392 : vector<16x1xf32>
    %cst_243 = arith.constant 9.99999996E-13 : f32
    %394 = vector.broadcast %cst_243 : f32 to vector<16x1xf32>
    %395 = arith.addf %393, %394 : vector<16x1xf32>
    %396 = math.rsqrt %395 : vector<16x1xf32>
    %397 = vector.broadcast %396 : vector<16x1xf32> to vector<16x32xf32>
    %398 = arith.mulf %388, %397 : vector<16x32xf32>
    %399 = vector.broadcast %380 : vector<1x32xf32> to vector<16x32xf32>
    %400 = arith.mulf %398, %399 : vector<16x32xf32>
    %401 = vector.broadcast %382 : vector<1x32xf32> to vector<16x32xf32>
    %402 = arith.addf %400, %401 : vector<16x32xf32>
    %c1_244 = arith.constant 1 : index
    %c0_245 = arith.constant 0 : index
    %c0_246 = arith.constant 0 : index
    %403 = vector.load %arg14[%c1_244, %c0_245, %c0_246] : memref<2x32x64xf32, #tpu.memory_space<vmem>>, vector<1x32x64xf32>
    %404 = vector.shape_cast %403 : vector<1x32x64xf32> to vector<32x64xf32>
    %cst_247 = arith.constant dense<0.000000e+00> : vector<16x64xf32>
    %405 = tpu.matmul %402, %404, %cst_247 {dimension_numbers = #tpu.dot_dimension_numbers<[1], [0], [0], [1], [0, 0, 1, 1], [], []>} : vector<16x32xf32>, vector<32x64xf32>, vector<16x64xf32> -> vector<16x64xf32>
    %c1_248 = arith.constant 1 : index
    %c0_249 = arith.constant 0 : index
    %c0_250 = arith.constant 0 : index
    %406 = vector.load %arg15[%c1_248, %c0_249, %c0_250] : memref<2x1x64xf32, #tpu.memory_space<vmem>>, vector<1x1x64xf32>
    %407 = vector.shape_cast %406 : vector<1x1x64xf32> to vector<1x64xf32>
    %408 = vector.broadcast %407 : vector<1x64xf32> to vector<16x64xf32>
    %409 = arith.addf %405, %408 : vector<16x64xf32>
    %cst_251 = arith.constant 5.000000e-01 : f32
    %410 = vector.broadcast %cst_251 : f32 to vector<16x64xf32>
    %411 = arith.mulf %410, %409 : vector<16x64xf32>
    %cst_252 = arith.constant 4.471500e-02 : f32
    %412 = vector.broadcast %cst_252 : f32 to vector<16x64xf32>
    %413 = arith.mulf %412, %409 : vector<16x64xf32>
    %414 = arith.mulf %413, %409 : vector<16x64xf32>
    %415 = arith.mulf %414, %409 : vector<16x64xf32>
    %416 = arith.addf %409, %415 : vector<16x64xf32>
    %cst_253 = arith.constant 0.797884583 : f32
    %417 = vector.broadcast %cst_253 : f32 to vector<16x64xf32>
    %418 = arith.mulf %417, %416 : vector<16x64xf32>
    %419 = math.tanh %418 : vector<16x64xf32>
    %cst_254 = arith.constant 1.000000e+00 : f32
    %420 = vector.broadcast %cst_254 : f32 to vector<16x64xf32>
    %421 = arith.addf %420, %419 : vector<16x64xf32>
    %422 = arith.mulf %411, %421 : vector<16x64xf32>
    %c1_255 = arith.constant 1 : index
    %c0_256 = arith.constant 0 : index
    %c0_257 = arith.constant 0 : index
    %423 = vector.load %arg16[%c1_255, %c0_256, %c0_257] : memref<2x64x32xf32, #tpu.memory_space<vmem>>, vector<1x64x32xf32>
    %424 = vector.shape_cast %423 : vector<1x64x32xf32> to vector<64x32xf32>
    %cst_258 = arith.constant dense<0.000000e+00> : vector<16x32xf32>
    %425 = tpu.matmul %422, %424, %cst_258 {dimension_numbers = #tpu.dot_dimension_numbers<[1], [0], [0], [1], [0, 0, 1, 1], [], []>} : vector<16x64xf32>, vector<64x32xf32>, vector<16x32xf32> -> vector<16x32xf32>
    %c1_259 = arith.constant 1 : index
    %c0_260 = arith.constant 0 : index
    %c0_261 = arith.constant 0 : index
    %426 = vector.load %arg17[%c1_259, %c0_260, %c0_261] : memref<2x1x32xf32, #tpu.memory_space<vmem>>, vector<1x1x32xf32>
    %427 = vector.shape_cast %426 : vector<1x1x32xf32> to vector<1x32xf32>
    %428 = vector.broadcast %427 : vector<1x32xf32> to vector<16x32xf32>
    %429 = arith.addf %425, %428 : vector<16x32xf32>
    %430 = arith.addf %429, %402 : vector<16x32xf32>
    %c1_262 = arith.constant 1 : index
    %c0_263 = arith.constant 0 : index
    %c0_264 = arith.constant 0 : index
    %431 = vector.load %arg18[%c1_262, %c0_263, %c0_264] : memref<2x1x32xf32, #tpu.memory_space<vmem>>, vector<1x1x32xf32>
    %432 = vector.shape_cast %431 : vector<1x1x32xf32> to vector<1x32xf32>
    %c1_265 = arith.constant 1 : index
    %c0_266 = arith.constant 0 : index
    %c0_267 = arith.constant 0 : index
    %433 = vector.load %arg19[%c1_265, %c0_266, %c0_267] : memref<2x1x32xf32, #tpu.memory_space<vmem>>, vector<1x1x32xf32>
    %434 = vector.shape_cast %433 : vector<1x1x32xf32> to vector<1x32xf32>
    %cst_268 = arith.constant dense<0.000000e+00> : vector<16xf32>
    %435 = vector.multi_reduction <add>, %430, %cst_268 [1] : vector<16x32xf32> to vector<16xf32>
    %436 = vector.shape_cast %435 : vector<16xf32> to vector<16x1xf32>
    %cst_269 = arith.constant 3.200000e+01 : f32
    %437 = vector.broadcast %cst_269 : f32 to vector<16x1xf32>
    %438 = arith.divf %436, %437 : vector<16x1xf32>
    %439 = vector.broadcast %438 : vector<16x1xf32> to vector<16x32xf32>
    %440 = arith.subf %430, %439 : vector<16x32xf32>
    %441 = arith.mulf %440, %440 : vector<16x32xf32>
    %cst_270 = arith.constant dense<0.000000e+00> : vector<16xf32>
    %442 = vector.multi_reduction <add>, %441, %cst_270 [1] : vector<16x32xf32> to vector<16xf32>
    %443 = vector.shape_cast %442 : vector<16xf32> to vector<16x1xf32>
    %cst_271 = arith.constant 3.200000e+01 : f32
    %444 = vector.broadcast %cst_271 : f32 to vector<16x1xf32>
    %445 = arith.divf %443, %444 : vector<16x1xf32>
    %cst_272 = arith.constant 9.99999996E-13 : f32
    %446 = vector.broadcast %cst_272 : f32 to vector<16x1xf32>
    %447 = arith.addf %445, %446 : vector<16x1xf32>
    %448 = math.rsqrt %447 : vector<16x1xf32>
    %449 = vector.broadcast %448 : vector<16x1xf32> to vector<16x32xf32>
    %450 = arith.mulf %440, %449 : vector<16x32xf32>
    %451 = vector.broadcast %432 : vector<1x32xf32> to vector<16x32xf32>
    %452 = arith.mulf %450, %451 : vector<16x32xf32>
    %453 = vector.broadcast %434 : vector<1x32xf32> to vector<16x32xf32>
    %454 = arith.addf %452, %453 : vector<16x32xf32>
    %455 = tpu.iota {dimensions = array<i32: 1>} : vector<2x16xi32>
    %456 = tpu.iota {dimensions = array<i32: 0>} : vector<2x16xi32>
    %c8_i32 = arith.constant 8 : i32
    %457 = vector.broadcast %c8_i32 : i32 to vector<2x16xi32>
    %458 = arith.muli %456, %457 : vector<2x16xi32>
    %459 = arith.cmpi eq, %455, %458 : vector<2x16xi32>
    %460 = arith.extui %459 : vector<2x16xi1> to vector<2x16xi32>
    %461 = arith.sitofp %460 : vector<2x16xi32> to vector<2x16xf32>
    %cst_273 = arith.constant dense<0.000000e+00> : vector<2x32xf32>
    %462 = tpu.matmul %461, %454, %cst_273 {dimension_numbers = #tpu.dot_dimension_numbers<[1], [0], [0], [1], [0, 0, 1, 1], [], []>} : vector<2x16xf32>, vector<16x32xf32>, vector<2x32xf32> -> vector<2x32xf32>
    %c0_274 = arith.constant 0 : index
    %c0_275 = arith.constant 0 : index
    %463 = vector.load %arg20[%c0_274, %c0_275] : memref<32x32xf32, #tpu.memory_space<vmem>>, vector<32x32xf32>
    %cst_276 = arith.constant dense<0.000000e+00> : vector<2x32xf32>
    %464 = tpu.matmul %462, %463, %cst_276 {dimension_numbers = #tpu.dot_dimension_numbers<[1], [0], [0], [1], [0, 0, 1, 1], [], []>} : vector<2x32xf32>, vector<32x32xf32>, vector<2x32xf32> -> vector<2x32xf32>
    %c0_277 = arith.constant 0 : index
    %c0_278 = arith.constant 0 : index
    %465 = vector.load %arg21[%c0_277, %c0_278] : memref<1x32xf32, #tpu.memory_space<vmem>>, vector<1x32xf32>
    %466 = vector.broadcast %465 : vector<1x32xf32> to vector<2x32xf32>
    %467 = arith.addf %464, %466 : vector<2x32xf32>
    %468 = math.tanh %467 : vector<2x32xf32>
    %c0_279 = arith.constant 0 : index
    %c0_280 = arith.constant 0 : index
    %469 = vector.load %arg22[%c0_279, %c0_280] : memref<32x4xf32, #tpu.memory_space<vmem>>, vector<32x4xf32>
    %cst_281 = arith.constant dense<0.000000e+00> : vector<2x4xf32>
    %470 = tpu.matmul %468, %469, %cst_281 {dimension_numbers = #tpu.dot_dimension_numbers<[1], [0], [0], [1], [0, 0, 1, 1], [], []>} : vector<2x32xf32>, vector<32x4xf32>, vector<2x4xf32> -> vector<2x4xf32>
    %c0_282 = arith.constant 0 : index
    %c0_283 = arith.constant 0 : index
    %471 = vector.load %arg23[%c0_282, %c0_283] : memref<1x4xf32, #tpu.memory_space<vmem>>, vector<1x4xf32>
    %472 = vector.broadcast %471 : vector<1x4xf32> to vector<2x4xf32>
    %473 = arith.addf %470, %472 : vector<2x4xf32>
    %474 = arith.negf %473 : vector<2x4xf32>
    %475 = math.exp %474 : vector<2x4xf32>
    %cst_284 = arith.constant 1.000000e+00 : f32
    %476 = vector.broadcast %cst_284 : f32 to vector<2x4xf32>
    %477 = arith.addf %476, %475 : vector<2x4xf32>
    %478 = arith.divf %476, %477 : vector<2x4xf32>
    %c0_285 = arith.constant 0 : index
    %c0_286 = arith.constant 0 : index
    %479 = vector.load %arg24[%c0_285, %c0_286] : memref<2x4xf32, #tpu.memory_space<vmem>>, vector<2x4xf32>
    tpu.vector_store %arg24[%c0_285, %c0_286], %478 {strides = array<i32>} : memref<2x4xf32, #tpu.memory_space<vmem>>, vector<2x4xf32>,
    return
  }
}

</mosaic_0001>

<llo_original>
// kernel: bert_taxonomy_forward.1
$region0: #{bert_taxonomy_forward.1}
  #allocation0 [shape = 'u32[]', space=smem, size = 0x4, offset = 0x4, fixed_abs, tag = 'smem constant byte address 0x4 - core index']
  #allocation1 [shape = 'u32[144,128]{1,0:T(1,128)}', space=vmem, size = 0x12000, scoped, tag = 'internal scratch']
  #allocation2 [shape = 'f32[16,32]{1,0:T(8,128)}', space=vmem, size = 0x2000, scoped, tag = 'scratch operand']
  %s0 = inlined_call_operand.vmem [shape: f32[16,32], index: 0, kind: input, shape index: {}]
  %s1 = inlined_call_operand.vmem [shape: f32[2,8,8], index: 1, kind: input, shape index: {}]
  %s2 = inlined_call_operand.vmem [shape: f32[1,32], index: 2, kind: input, shape index: {}]
  %s3 = inlined_call_operand.vmem [shape: f32[1,32], index: 3, kind: input, shape index: {}]
  %s4 = inlined_call_operand.vmem [shape: f32[4,32,16], index: 4, kind: input, shape index: {}]
  %s5 = inlined_call_operand.vmem [shape: f32[4,1,16], index: 5, kind: input, shape index: {}]
  %s6 = inlined_call_operand.vmem [shape: f32[4,32,16], index: 6, kind: input, shape index: {}]
  %s7 = inlined_call_operand.vmem [shape: f32[4,1,16], index: 7, kind: input, shape index: {}]
  %s8 = inlined_call_operand.vmem [shape: f32[4,32,16], index: 8, kind: input, shape index: {}]
  %s9 = inlined_call_operand.vmem [shape: f32[4,1,16], index: 9, kind: input, shape index: {}]
  %s10 = inlined_call_operand.vmem [shape: f32[4,16,32], index: 10, kind: input, shape index: {}]
  %s11 = inlined_call_operand.vmem [shape: f32[2,1,32], index: 11, kind: input, shape index: {}]
  %s12 = inlined_call_operand.vmem [shape: f32[2,1,32], index: 12, kind: input, shape index: {}]
  %s13 = inlined_call_operand.vmem [shape: f32[2,1,32], index: 13, kind: input, shape index: {}]
  %s14 = inlined_call_operand.vmem [shape: f32[2,32,64], index: 14, kind: input, shape index: {}]
  %s15 = inlined_call_operand.vmem [shape: f32[2,1,64], index: 15, kind: input, shape index: {}]
  %s16 = inlined_call_operand.vmem [shape: f32[2,64,32], index: 16, kind: input, shape index: {}]
  %s17 = inlined_call_operand.vmem [shape: f32[2,1,32], index: 17, kind: input, shape index: {}]
  %s18 = inlined_call_operand.vmem [shape: f32[2,1,32], index: 18, kind: input, shape index: {}]
  %s19 = inlined_call_operand.vmem [shape: f32[2,1,32], index: 19, kind: input, shape index: {}]
  %s20 = inlined_call_operand.vmem [shape: f32[32,32], index: 20, kind: input, shape index: {}]
  %s21 = inlined_call_operand.vmem [shape: f32[1,32], index: 21, kind: input, shape index: {}]
  %s22 = inlined_call_operand.vmem [shape: f32[32,4], index: 22, kind: input, shape index: {}]
  %s23 = inlined_call_operand.vmem [shape: f32[1,4], index: 23, kind: input, shape index: {}]
  %s24 = inlined_call_operand.hbm [shape: f32[2,4], index: 24, kind: output, shape index: {}]
  %s25 = sld [smem:[#allocation0]]
  $region106: #{bert_taxonomy_forward.1} parent=0
    _
  %s27 = ssub.s32 1, %s25
  %s28 = scalar_select 0, %s27, %s25
  $region1: #{bert_taxonomy_forward.1} parent=0
    #allocation3 [shape = 'u8[1024]{0}', space=vmem, size = 0x400, scoped, tag = 'output window, operand 0, single buffered']
    #allocation4 [shape = 's32[1]{0}', space=sflag, size = 0x4, scoped, tag = 'scoped memory for bert_taxonomy_forward.1']
    %29 = vsyncpa [#allocation4], 0
    // Predicated region
    $region2: #{bert_taxonomy_forward.1} parent=1 // pred_check
      _
    $region3: #{bert_taxonomy_forward.1} parent=1 // pred_check_branch
      %31 = sbr.rel (0) target = $region5
    $region4: #{bert_taxonomy_forward.1} parent=1 // pred_region
      _
    $region5: #{bert_taxonomy_forward.1} parent=1 // pred_fallthru
      _
    // Predicated region
    $region6: #{bert_taxonomy_forward.1} parent=1 // pred_check
      _
    $region7: #{bert_taxonomy_forward.1} parent=1 // pred_check_branch
      %33 = sbr.rel (0) target = $region9
    $region8: #{bert_taxonomy_forward.1} parent=1 // pred_region
      _
    $region9: #{bert_taxonomy_forward.1} parent=1 // pred_fallthru
      _
    // Predicated region
    $region10: #{bert_taxonomy_forward.1} parent=1 // pred_check
      _
    $region11: #{bert_taxonomy_forward.1} parent=1 // pred_check_branch
      %35 = sbr.rel (0) target = $region13
    $region12: #{bert_taxonomy_forward.1} parent=1 // pred_region
      _
    $region13: #{bert_taxonomy_forward.1} parent=1 // pred_fallthru
      _
    // Predicated region
    $region14: #{bert_taxonomy_forward.1} parent=1 // pred_check
      _
    $region15: #{bert_taxonomy_forward.1} parent=1 // pred_check_branch
      %37 = sbr.rel (0) target = $region17
    $region16: #{bert_taxonomy_forward.1} parent=1 // pred_region
      _
    $region17: #{bert_taxonomy_forward.1} parent=1 // pred_fallthru
      _
    // Predicated region
    $region18: #{bert_taxonomy_forward.1} parent=1 // pred_check
      _
    $region19: #{bert_taxonomy_forward.1} parent=1 // pred_check_branch
      %39 = sbr.rel (0) target = $region21
    $region20: #{bert_taxonomy_forward.1} parent=1 // pred_region
      _
    $region21: #{bert_taxonomy_forward.1} parent=1 // pred_fallthru
      _
    // Predicated region
    $region22: #{bert_taxonomy_forward.1} parent=1 // pred_check
      _
    $region23: #{bert_taxonomy_forward.1} parent=1 // pred_check_branch
      %41 = sbr.rel (0) target = $region25
    $region24: #{bert_taxonomy_forward.1} parent=1 // pred_region
      _
    $region25: #{bert_taxonomy_forward.1} parent=1 // pred_fallthru
      _
    // Predicated region
    $region26: #{bert_taxonomy_forward.1} parent=1 // pred_check
      _
    $region27: #{bert_taxonomy_forward.1} parent=1 // pred_check_branch
      %43 = sbr.rel (0) target = $region29
    $region28: #{bert_taxonomy_forward.1} parent=1 // pred_region
      _
    $region29: #{bert_taxonomy_forward.1} parent=1 // pred_fallthru
      _
    // Predicated region
    $region30: #{bert_taxonomy_forward.1} parent=1 // pred_check
      _
    $region31: #{bert_taxonomy_forward.1} parent=1 // pred_check_branch
      %45 = sbr.rel (0) target = $region33
    $region32: #{bert_taxonomy_forward.1} parent=1 // pred_region
      _
    $region33: #{bert_taxonomy_forward.1} parent=1 // pred_fallthru
      _
    // Predicated region
    $region34: #{bert_taxonomy_forward.1} parent=1 // pred_check
      _
    $region35: #{bert_taxonomy_forward.1} parent=1 // pred_check_branch
      %47 = sbr.rel (0) target = $region37
    $region36: #{bert_taxonomy_forward.1} parent=1 // pred_region
      _
    $region37: #{bert_taxonomy_forward.1} parent=1 // pred_fallthru
      _
    // Predicated region
    $region38: #{bert_taxonomy_forward.1} parent=1 // pred_check
      _
    $region39: #{bert_taxonomy_forward.1} parent=1 // pred_check_branch
      %49 = sbr.rel (0) target = $region41
    $region40: #{bert_taxonomy_forward.1} parent=1 // pred_region
      _
    $region41: #{bert_taxonomy_forward.1} parent=1 // pred_fallthru
      _
    // Predicated region
    $region42: #{bert_taxonomy_forward.1} parent=1 // pred_check
      _
    $region43: #{bert_taxonomy_forward.1} parent=1 // pred_check_branch
      %51 = sbr.rel (0) target = $region45
    $region44: #{bert_taxonomy_forward.1} parent=1 // pred_region
      _
    $region45: #{bert_taxonomy_forward.1} parent=1 // pred_fallthru
      _
    // Predicated region
    $region46: #{bert_taxonomy_forward.1} parent=1 // pred_check
      _
    $region47: #{bert_taxonomy_forward.1} parent=1 // pred_check_branch
      %53 = sbr.rel (0) target = $region49
    $region48: #{bert_taxonomy_forward.1} parent=1 // pred_region
      _
    $region49: #{bert_taxonomy_forward.1} parent=1 // pred_fallthru
      _
    // Predicated region
    $region50: #{bert_taxonomy_forward.1} parent=1 // pred_check
      _
    $region51: #{bert_taxonomy_forward.1} parent=1 // pred_check_branch
      %55 = sbr.rel (0) target = $region53
    $region52: #{bert_taxonomy_forward.1} parent=1 // pred_region
      _
    $region53: #{bert_taxonomy_forward.1} parent=1 // pred_fallthru
      _
    // Predicated region
    $region54: #{bert_taxonomy_forward.1} parent=1 // pred_check
      _
    $region55: #{bert_taxonomy_forward.1} parent=1 // pred_check_branch
      %57 = sbr.rel (0) target = $region57
    $region56: #{bert_taxonomy_forward.1} parent=1 // pred_region
      _
    $region57: #{bert_taxonomy_forward.1} parent=1 // pred_fallthru
      _
    // Predicated region
    $region58: #{bert_taxonomy_forward.1} parent=1 // pred_check
      _
    $region59: #{bert_taxonomy_forward.1} parent=1 // pred_check_branch
      %59 = sbr.rel (0) target = $region61
    $region60: #{bert_taxonomy_forward.1} parent=1 // pred_region
      _
    $region61: #{bert_taxonomy_forward.1} parent=1 // pred_fallthru
      _
    // Predicated region
    $region62: #{bert_taxonomy_forward.1} parent=1 // pred_check
      _
    $region63: #{bert_taxonomy_forward.1} parent=1 // pred_check_branch
      %61 = sbr.rel (0) target = $region65
    $region64: #{bert_taxonomy_forward.1} parent=1 // pred_region
      _
    $region65: #{bert_taxonomy_forward.1} parent=1 // pred_fallthru
      _
    // Predicated region
    $region66: #{bert_taxonomy_forward.1} parent=1 // pred_check
      _
    $region67: #{bert_taxonomy_forward.1} parent=1 // pred_check_branch
      %63 = sbr.rel (0) target = $region69
    $region68: #{bert_taxonomy_forward.1} parent=1 // pred_region
      _
    $region69: #{bert_taxonomy_forward.1} parent=1 // pred_fallthru
      _
    // Predicated region
    $region70: #{bert_taxonomy_forward.1} parent=1 // pred_check
      _
    $region71: #{bert_taxonomy_forward.1} parent=1 // pred_check_branch
      %65 = sbr.rel (0) target = $region73
    $region72: #{bert_taxonomy_forward.1} parent=1 // pred_region
      _
    $region73: #{bert_taxonomy_forward.1} parent=1 // pred_fallthru
      _
    // Predicated region
    $region74: #{bert_taxonomy_forward.1} parent=1 // pred_check
      _
    $region75: #{bert_taxonomy_forward.1} parent=1 // pred_check_branch
      %67 = sbr.rel (0) target = $region77
    $region76: #{bert_taxonomy_forward.1} parent=1 // pred_region
      _
    $region77: #{bert_taxonomy_forward.1} parent=1 // pred_fallthru
      _
    // Predicated region
    $region78: #{bert_taxonomy_forward.1} parent=1 // pred_check
      _
    $region79: #{bert_taxonomy_forward.1} parent=1 // pred_check_branch
      %69 = sbr.rel (0) target = $region81
    $region80: #{bert_taxonomy_forward.1} parent=1 // pred_region
      _
    $region81: #{bert_taxonomy_forward.1} parent=1 // pred_fallthru
      _
    // Predicated region
    $region82: #{bert_taxonomy_forward.1} parent=1 // pred_check
      _
    $region83: #{bert_taxonomy_forward.1} parent=1 // pred_check_branch
      %71 = sbr.rel (0) target = $region85
    $region84: #{bert_taxonomy_forward.1} parent=1 // pred_region
      _
    $region85: #{bert_taxonomy_forward.1} parent=1 // pred_fallthru
      _
    // Predicated region
    $region86: #{bert_taxonomy_forward.1} parent=1 // pred_check
      _
    $region87: #{bert_taxonomy_forward.1} parent=1 // pred_check_branch
      %73 = sbr.rel (0) target = $region89
    $region88: #{bert_taxonomy_forward.1} parent=1 // pred_region
      _
    $region89: #{bert_taxonomy_forward.1} parent=1 // pred_fallthru
      _
    // Predicated region
    $region90: #{bert_taxonomy_forward.1} parent=1 // pred_check
      _
    $region91: #{bert_taxonomy_forward.1} parent=1 // pred_check_branch
      %75 = sbr.rel (0) target = $region93
    $region92: #{bert_taxonomy_forward.1} parent=1 // pred_region
      _
    $region93: #{bert_taxonomy_forward.1} parent=1 // pred_fallthru
      _
    // Predicated region
    $region94: #{bert_taxonomy_forward.1} parent=1 // pred_check
      _
    $region95: #{bert_taxonomy_forward.1} parent=1 // pred_check_branch
      %77 = sbr.rel (0) target = $region97
    $region96: #{bert_taxonomy_forward.1} parent=1 // pred_region
      _
    $region97: #{bert_taxonomy_forward.1} parent=1 // pred_fallthru
      _
    %v78 = vld [vmem:[%s0] sm:$0xff]
    %v79 = vld [vmem:[%s0 + $0x8] sm:$0xff]
    %v80 = vld [vmem:[%s2] sm:$0x1]
    %v81 = vld [vmem:[%s3] sm:$0x1]
    %vm82 = vcmask 261120
    %v83 = vsel %vm82, %v78, 0.0
    %84 = vadd.xlane.f32.xlu0 %v83
    %v85 = vpop.xlane.xlu0 %84
    %v86 = vsel %vm82, %v79, 0.0
    %87 = vadd.xlane.f32.xlu0 %v86
    %v88 = vpop.xlane.xlu0 %87
    %v89 = vrcp.pop 32.0
    %v90 = vmul.f32 %v85, %v89
    %v91 = vmul.f32 %v88, %v89
    %v92 = vsub.f32 %v78, %v90
    %v93 = vsub.f32 %v79, %v91
    %v94 = vmul.f32 %v92, %v92
    %v95 = vmul.f32 %v93, %v93
    %v96 = vsel %vm82, %v94, 0.0
    %97 = vadd.xlane.f32.xlu0 %v96
    %v98 = vpop.xlane.xlu0 %97
    %v99 = vsel %vm82, %v95, 0.0
    %100 = vadd.xlane.f32.xlu0 %v99
    %v101 = vpop.xlane.xlu0 %100
    %v102 = vmul.f32 %v98, %v89
    %v103 = vmul.f32 %v101, %v89
    %v104 = vadd.f32 %v102, 1e-12
    %v105 = vadd.f32 %v103, 1e-12
    %v106 = vrsqrt.pop %v104
    %v107 = vrsqrt.pop %v105
    %v108 = vmul.f32 %v92, %v106
    %v109 = vmul.f32 %v93, %v107
    %v111 = vlaneseq
    %v112 = vshrl.u32 %v111, 7
    %v113 = vsub.s32 0, %v112
    %v114 = vrot.slane %v80, %v113
    %v116 = vmul.f32 %v108, %v114
    %v117 = vmul.f32 %v109, %v114
    %v119 = vlaneseq
    %v120 = vshrl.u32 %v119, 7
    %v121 = vsub.s32 0, %v120
    %v122 = vrot.slane %v81, %v121
    %v124 = vadd.f32 %v116, %v122
    %v125 = vadd.f32 %v117, %v122
    %v126 = vld [vmem:[%s4] sm:$0xff]
    %v127 = vld [vmem:[%s4 + $0x8] sm:$0xff]
    %v128 = vld [vmem:[%s4 + $0x10] sm:$0xff]
    %v129 = vld [vmem:[%s4 + $0x18] sm:$0xff]
    %v130 = vld [vmem:[%s5] sm:$0x1]
    %v132 = vlaneseq
    %v133 = vshrl.u32 %v132, 7
    %v134 = vsub.s32 0, %v133
    %v135 = vrot.slane %v130, %v134
    %v138 = vsel %vm82, %v124, 0
    %v141 = vsel %vm82, %v125, 0
    %143 = vmatprep.subr.mxu0 0.0
    %144 = vmatpush1.msra.mxu0 %v126
    %145 = vmatprep.subr.mxu0 0.0
    %146 = vmatpush1.msra.mxu0 %v127
    %147 = vmatprep.subr.mxu0 0.0
    %148 = vmatpush1.msra.mxu0 %v128
    %149 = vmatprep.subr.mxu0 0.0
    %150 = vmatpush1.msra.mxu0 %v129
    %151 = vmatprep.subr.mxu0 0.0
    %152 = vmatpush1.msra.mxu0 0.0
    %153 = vmatprep.subr.mxu0 0.0
    %154 = vmatpush1.msra.mxu0 0.0
    %155 = vmatprep.subr.mxu0 0.0
    %156 = vmatpush1.msra.mxu0 0.0
    %157 = vmatprep.subr.mxu0 0.0
    %158 = vmatpush1.msra.mxu0 0.0
    %159 = vmatprep.subr.mxu0 0.0
    %160 = vmatpush1.msra.mxu0 0.0
    %161 = vmatprep.subr.mxu0 0.0
    %162 = vmatpush1.msra.mxu0 0.0
    %163 = vmatprep.subr.mxu0 0.0
    %164 = vmatpush1.msra.mxu0 0.0
    %165 = vmatprep.subr.mxu0 0.0
    %166 = vmatpush1.msra.mxu0 0.0
    %167 = vmatprep.subr.mxu0 0.0
    %168 = vmatpush1.msra.mxu0 0.0
    %169 = vmatprep.subr.mxu0 0.0
    %170 = vmatpush1.msra.mxu0 0.0
    %171 = vmatprep.subr.mxu0 0.0
    %172 = vmatpush1.msra.mxu0 0.0
    %173 = vmatprep.subr.mxu0 0.0
    %174 = vmatpush1.msra.mxu0 0.0
    %175 = vmatprep.subr.mxu0 0.0
    %176 = vmatpush1.msra.mxu0 0.0
    %177 = vmatprep.subr.mxu0 0.0
    %178 = vmatpush1.msra.mxu0 0.0
    %179 = vmatprep.subr.mxu0 0.0
    %180 = vmatpush1.msra.mxu0 0.0
    %181 = vmatprep.subr.mxu0 0.0
    %182 = vmatpush1.msra.mxu0 0.0
    %183 = vmatprep.subr.mxu0 0.0
    %184 = vmatpush1.msra.mxu0 0.0
    %185 = vmatprep.subr.mxu0 0.0
    %186 = vmatpush1.msra.mxu0 0.0
    %187 = vmatprep.subr.mxu0 0.0
    %188 = vmatpush1.msra.mxu0 0.0
    %189 = vmatprep.subr.mxu0 0.0
    %190 = vmatpush1.msra.mxu0 0.0
    %191 = vmatprep.subr.mxu0 0.0
    %192 = vmatpush1.msra.mxu0 0.0
    %193 = vmatprep.subr.mxu0 0.0
    %194 = vmatpush1.msra.mxu0 0.0
    %195 = vmatprep.subr.mxu0 0.0
    %196 = vmatpush1.msra.mxu0 0.0
    %197 = vmatprep.subr.mxu0 0.0
    %198 = vmatpush1.msra.mxu0 0.0
    %199 = vmatprep.subr.mxu0 0.0
    %200 = vmatpush1.msra.mxu0 0.0
    %201 = vmatprep.subr.mxu0 0.0
    %202 = vmatpush1.msra.mxu0 0.0
    %203 = vmatprep.subr.mxu0 0.0
    %204 = vmatpush1.msra.mxu0 0.0
    %205 = vmatprep.subr.mxu0 0.0
    %206 = vmatpush1.msra.mxu0 0.0
    %207 = vmatprep.mubr.f32.mxu0 0.0
    %208 = vmatmul.mubr.f32.gmra.mrb[0].mxu0 %v138
    %v209 = vpop.f32.mrb[0].mxu0
    %v210 = vadd.f32 %v135, %v209
    %v211 = vpop.f32.mrb[0].mxu0
    %212 = vmatprep.mubr.f32.mxu0 0.0
    %213 = vmatmul.mubr.f32.gmra.mrb[0].mxu0 %v141
    %v214 = vpop.f32.mrb[0].mxu0
    %v215 = vadd.f32 %v135, %v214
    %v216 = vpop.f32.mrb[0].mxu0
    %217 = vdwg.mxu0
    %v218 = vmul.f32 %v210, 0.25
    %v219 = vmul.f32 %v215, 0.25
    %v220 = vld [vmem:[%s6] sm:$0xff]
    %v221 = vld [vmem:[%s6 + $0x8] sm:$0xff]
    %v222 = vld [vmem:[%s6 + $0x10] sm:$0xff]
    %v223 = vld [vmem:[%s6 + $0x18] sm:$0xff]
    %v224 = vld [vmem:[%s7] sm:$0x1]
    %v226 = vlaneseq
    %v227 = vshrl.u32 %v226, 7
    %v228 = vsub.s32 0, %v227
    %v229 = vrot.slane %v224, %v228
    %231 = vmatprep.subr.mxu0 0.0
    %232 = vmatpush1.msra.mxu0 %v220
    %233 = vmatprep.subr.mxu0 0.0
    %234 = vmatpush1.msra.mxu0 %v221
    %235 = vmatprep.subr.mxu0 0.0
    %236 = vmatpush1.msra.mxu0 %v222
    %237 = vmatprep.subr.mxu0 0.0
    %238 = vmatpush1.msra.mxu0 %v223
    %239 = vmatprep.subr.mxu0 0.0
    %240 = vmatpush1.msra.mxu0 0.0
    %241 = vmatprep.subr.mxu0 0.0
    %242 = vmatpush1.msra.mxu0 0.0
    %243 = vmatprep.subr.mxu0 0.0
    %244 = vmatpush1.msra.mxu0 0.0
    %245 = vmatprep.subr.mxu0 0.0
    %246 = vmatpush1.msra.mxu0 0.0
    %247 = vmatprep.subr.mxu0 0.0
    %248 = vmatpush1.msra.mxu0 0.0
    %249 = vmatprep.subr.mxu0 0.0
    %250 = vmatpush1.msra.mxu0 0.0
    %251 = vmatprep.subr.mxu0 0.0
    %252 = vmatpush1.msra.mxu0 0.0
    %253 = vmatprep.subr.mxu0 0.0
    %254 = vmatpush1.msra.mxu0 0.0
    %255 = vmatprep.subr.mxu0 0.0
    %256 = vmatpush1.msra.mxu0 0.0
    %257 = vmatprep.subr.mxu0 0.0
    %258 = vmatpush1.msra.mxu0 0.0
    %259 = vmatprep.subr.mxu0 0.0
    %260 = vmatpush1.msra.mxu0 0.0
    %261 = vmatprep.subr.mxu0 0.0
    %262 = vmatpush1.msra.mxu0 0.0
    %263 = vmatprep.subr.mxu0 0.0
    %264 = vmatpush1.msra.mxu0 0.0
    %265 = vmatprep.subr.mxu0 0.0
    %266 = vmatpush1.msra.mxu0 0.0
    %267 = vmatprep.subr.mxu0 0.0
    %268 = vmatpush1.msra.mxu0 0.0
    %269 = vmatprep.subr.mxu0 0.0
    %270 = vmatpush1.msra.mxu0 0.0
    %271 = vmatprep.subr.mxu0 0.0
    %272 = vmatpush1.msra.mxu0 0.0
    %273 = vmatprep.subr.mxu0 0.0
    %274 = vmatpush1.msra.mxu0 0.0
    %275 = vmatprep.subr.mxu0 0.0
    %276 = vmatpush1.msra.mxu0 0.0
    %277 = vmatprep.subr.mxu0 0.0
    %278 = vmatpush1.msra.mxu0 0.0
    %279 = vmatprep.subr.mxu0 0.0
    %280 = vmatpush1.msra.mxu0 0.0
    %281 = vmatprep.subr.mxu0 0.0
    %282 = vmatpush1.msra.mxu0 0.0
    %283 = vmatprep.subr.mxu0 0.0
    %284 = vmatpush1.msra.mxu0 0.0
    %285 = vmatprep.subr.mxu0 0.0
    %286 = vmatpush1.msra.mxu0 0.0
    %287 = vmatprep.subr.mxu0 0.0
    %288 = vmatpush1.msra.mxu0 0.0
    %289 = vmatprep.subr.mxu0 0.0
    %290 = vmatpush1.msra.mxu0 0.0
    %291 = vmatprep.subr.mxu0 0.0
    %292 = vmatpush1.msra.mxu0 0.0
    %293 = vmatprep.subr.mxu0 0.0
    %294 = vmatpush1.msra.mxu0 0.0
    %295 = vmatprep.mubr.f32.mxu0 0.0
    %296 = vmatmul.mubr.f32.gmra.mrb[0].mxu0 %v138
    %v297 = vpop.f32.mrb[0].mxu0
    %v298 = vadd.f32 %v229, %v297
    %v299 = vpop.f32.mrb[0].mxu0
    %300 = vmatprep.mubr.f32.mxu0 0.0
    %301 = vmatmul.mubr.f32.gmra.mrb[0].mxu0 %v141
    %v302 = vpop.f32.mrb[0].mxu0
    %v303 = vadd.f32 %v229, %v302
    %v304 = vpop.f32.mrb[0].mxu0
    %305 = vdwg.mxu0
    %v306 = vld [vmem:[%s8] sm:$0xff]
    %v307 = vld [vmem:[%s8 + $0x8] sm:$0xff]
    %v308 = vld [vmem:[%s8 + $0x10] sm:$0xff]
    %v309 = vld [vmem:[%s8 + $0x18] sm:$0xff]
    %v310 = vld [vmem:[%s9] sm:$0x1]
    %v312 = vlaneseq
    %v313 = vshrl.u32 %v312, 7
    %v314 = vsub.s32 0, %v313
    %v315 = vrot.slane %v310, %v314
    %317 = vmatprep.subr.mxu0 0.0
    %318 = vmatpush1.msra.mxu0 %v306
    %319 = vmatprep.subr.mxu0 0.0
    %320 = vmatpush1.msra.mxu0 %v307
    %321 = vmatprep.subr.mxu0 0.0
    %322 = vmatpush1.msra.mxu0 %v308
    %323 = vmatprep.subr.mxu0 0.0
    %324 = vmatpush1.msra.mxu0 %v309
    %325 = vmatprep.subr.mxu0 0.0
    %326 = vmatpush1.msra.mxu0 0.0
    %327 = vmatprep.subr.mxu0 0.0
    %328 = vmatpush1.msra.mxu0 0.0
    %329 = vmatprep.subr.mxu0 0.0
    %330 = vmatpush1.msra.mxu0 0.0
    %331 = vmatprep.subr.mxu0 0.0
    %332 = vmatpush1.msra.mxu0 0.0
    %333 = vmatprep.subr.mxu0 0.0
    %334 = vmatpush1.msra.mxu0 0.0
    %335 = vmatprep.subr.mxu0 0.0
    %336 = vmatpush1.msra.mxu0 0.0
    %337 = vmatprep.subr.mxu0 0.0
    %338 = vmatpush1.msra.mxu0 0.0
    %339 = vmatprep.subr.mxu0 0.0
    %340 = vmatpush1.msra.mxu0 0.0
    %341 = vmatprep.subr.mxu0 0.0
    %342 = vmatpush1.msra.mxu0 0.0
    %343 = vmatprep.subr.mxu0 0.0
    %344 = vmatpush1.msra.mxu0 0.0
    %345 = vmatprep.subr.mxu0 0.0
    %346 = vmatpush1.msra.mxu0 0.0
    %347 = vmatprep.subr.mxu0 0.0
    %348 = vmatpush1.msra.mxu0 0.0
    %349 = vmatprep.subr.mxu0 0.0
    %350 = vmatpush1.msra.mxu0 0.0
    %351 = vmatprep.subr.mxu0 0.0
    %352 = vmatpush1.msra.mxu0 0.0
    %353 = vmatprep.subr.mxu0 0.0
    %354 = vmatpush1.msra.mxu0 0.0
    %355 = vmatprep.subr.mxu0 0.0
    %356 = vmatpush1.msra.mxu0 0.0
    %357 = vmatprep.subr.mxu0 0.0
    %358 = vmatpush1.msra.mxu0 0.0
    %359 = vmatprep.subr.mxu0 0.0
    %360 = vmatpush1.msra.mxu0 0.0
    %361 = vmatprep.subr.mxu0 0.0
    %362 = vmatpush1.msra.mxu0 0.0
    %363 = vmatprep.subr.mxu0 0.0
    %364 = vmatpush1.msra.mxu0 0.0
    %365 = vmatprep.subr.mxu0 0.0
    %366 = vmatpush1.msra.mxu0 0.0
    %367 = vmatprep.subr.mxu0 0.0
    %368 = vmatpush1.msra.mxu0 0.0
    %369 = vmatprep.subr.mxu0 0.0
    %370 = vmatpush1.msra.mxu0 0.0
    %371 = vmatprep.subr.mxu0 0.0
    %372 = vmatpush1.msra.mxu0 0.0
    %373 = vmatprep.subr.mxu0 0.0
    %374 = vmatpush1.msra.mxu0 0.0
    %375 = vmatprep.subr.mxu0 0.0
    %376 = vmatpush1.msra.mxu0 0.0
    %377 = vmatprep.subr.mxu0 0.0
    %378 = vmatpush1.msra.mxu0 0.0
    %379 = vmatprep.subr.mxu0 0.0
    %380 = vmatpush1.msra.mxu0 0.0
    %381 = vmatprep.mubr.f32.mxu0 0.0
    %382 = vmatmul.mubr.f32.gmra.mrb[0].mxu0 %v138
    %v383 = vpop.f32.mrb[0].mxu0
    %v384 = vadd.f32 %v315, %v383
    %v385 = vpop.f32.mrb[0].mxu0
    %386 = vmatprep.mubr.f32.mxu0 0.0
    %387 = vmatmul.mubr.f32.gmra.mrb[0].mxu0 %v141
    %v388 = vpop.f32.mrb[0].mxu0
    %v389 = vadd.f32 %v315, %v388
    %v390 = vpop.f32.mrb[0].mxu0
    %391 = vdwg.mxu0
    %s392 = scalar_lea.vmem %s4, 32
    %v393 = vld [vmem:[%s392] sm:$0xff]
    %v394 = vld [vmem:[%s392 + $0x8] sm:$0xff]
    %v395 = vld [vmem:[%s392 + $0x10] sm:$0xff]
    %v396 = vld [vmem:[%s392 + $0x18] sm:$0xff]
    %s397 = scalar_lea.vmem %s5, 1
    %v398 = vld [vmem:[%s397] sm:$0x1]
    %v400 = vlaneseq
    %v401 = vshrl.u32 %v400, 7
    %v402 = vsub.s32 0, %v401
    %v403 = vrot.slane %v398, %v402
    %405 = vmatprep.subr.mxu0 0.0
    %406 = vmatpush1.msra.mxu0 %v393
    %407 = vmatprep.subr.mxu0 0.0
    %408 = vmatpush1.msra.mxu0 %v394
    %409 = vmatprep.subr.mxu0 0.0
    %410 = vmatpush1.msra.mxu0 %v395
    %411 = vmatprep.subr.mxu0 0.0
    %412 = vmatpush1.msra.mxu0 %v396
    %413 = vmatprep.subr.mxu0 0.0
    %414 = vmatpush1.msra.mxu0 0.0
    %415 = vmatprep.subr.mxu0 0.0
    %416 = vmatpush1.msra.mxu0 0.0
    %417 = vmatprep.subr.mxu0 0.0
    %418 = vmatpush1.msra.mxu0 0.0
    %419 = vmatprep.subr.mxu0 0.0
    %420 = vmatpush1.msra.mxu0 0.0
    %421 = vmatprep.subr.mxu0 0.0
    %422 = vmatpush1.msra.mxu0 0.0
    %423 = vmatprep.subr.mxu0 0.0
    %424 = vmatpush1.msra.mxu0 0.0
    %425 = vmatprep.subr.mxu0 0.0
    %426 = vmatpush1.msra.mxu0 0.0
    %427 = vmatprep.subr.mxu0 0.0
    %428 = vmatpush1.msra.mxu0 0.0
    %429 = vmatprep.subr.mxu0 0.0
    %430 = vmatpush1.msra.mxu0 0.0
    %431 = vmatprep.subr.mxu0 0.0
    %432 = vmatpush1.msra.mxu0 0.0
    %433 = vmatprep.subr.mxu0 0.0
    %434 = vmatpush1.msra.mxu0 0.0
    %435 = vmatprep.subr.mxu0 0.0
    %436 = vmatpush1.msra.mxu0 0.0
    %437 = vmatprep.subr.mxu0 0.0
    %438 = vmatpush1.msra.mxu0 0.0
    %439 = vmatprep.subr.mxu0 0.0
    %440 = vmatpush1.msra.mxu0 0.0
    %441 = vmatprep.subr.mxu0 0.0
    %442 = vmatpush1.msra.mxu0 0.0
    %443 = vmatprep.subr.mxu0 0.0
    %444 = vmatpush1.msra.mxu0 0.0
    %445 = vmatprep.subr.mxu0 0.0
    %446 = vmatpush1.msra.mxu0 0.0
    %447 = vmatprep.subr.mxu0 0.0
    %448 = vmatpush1.msra.mxu0 0.0
    %449 = vmatprep.subr.mxu0 0.0
    %450 = vmatpush1.msra.mxu0 0.0
    %451 = vmatprep.subr.mxu0 0.0
    %452 = vmatpush1.msra.mxu0 0.0
    %453 = vmatprep.subr.mxu0 0.0
    %454 = vmatpush1.msra.mxu0 0.0
    %455 = vmatprep.subr.mxu0 0.0
    %456 = vmatpush1.msra.mxu0 0.0
    %457 = vmatprep.subr.mxu0 0.0
    %458 = vmatpush1.msra.mxu0 0.0
    %459 = vmatprep.subr.mxu0 0.0
    %460 = vmatpush1.msra.mxu0 0.0
    %461 = vmatprep.subr.mxu0 0.0
    %462 = vmatpush1.msra.mxu0 0.0
    %463 = vmatprep.subr.mxu0 0.0
    %464 = vmatpush1.msra.mxu0 0.0
    %465 = vmatprep.subr.mxu0 0.0
    %466 = vmatpush1.msra.mxu0 0.0
    %467 = vmatprep.subr.mxu0 0.0
    %468 = vmatpush1.msra.mxu0 0.0
    %469 = vmatprep.mubr.f32.mxu0 0.0
    %470 = vmatmul.mubr.f32.gmra.mrb[0].mxu0 %v138
    %v471 = vpop.f32.mrb[0].mxu0
    %v472 = vadd.f32 %v403, %v471
    %v473 = vpop.f32.mrb[0].mxu0
    %474 = vmatprep.mubr.f32.mxu0 0.0
    %475 = vmatmul.mubr.f32.gmra.mrb[0].mxu0 %v141
    %v476 = vpop.f32.mrb[0].mxu0
    %v477 = vadd.f32 %v403, %v476
    %v478 = vpop.f32.mrb[0].mxu0
    %479 = vdwg.mxu0
    %v480 = vmul.f32 %v472, 0.25
    %v481 = vmul.f32 %v477, 0.25
    %s482 = scalar_lea.vmem %s6, 32
    %v483 = vld [vmem:[%s482] sm:$0xff]
    %v484 = vld [vmem:[%s482 + $0x8] sm:$0xff]
    %v485 = vld [vmem:[%s482 + $0x10] sm:$0xff]
    %v486 = vld [vmem:[%s482 + $0x18] sm:$0xff]
    %s487 = scalar_lea.vmem %s7, 1
    %v488 = vld [vmem:[%s487] sm:$0x1]
    %v490 = vlaneseq
    %v491 = vshrl.u32 %v490, 7
    %v492 = vsub.s32 0, %v491
    %v493 = vrot.slane %v488, %v492
    %495 = vmatprep.subr.mxu0 0.0
    %496 = vmatpush1.msra.mxu0 %v483
    %497 = vmatprep.subr.mxu0 0.0
    %498 = vmatpush1.msra.mxu0 %v484
    %499 = vmatprep.subr.mxu0 0.0
    %500 = vmatpush1.msra.mxu0 %v485
    %501 = vmatprep.subr.mxu0 0.0
    %502 = vmatpush1.msra.mxu0 %v486
    %503 = vmatprep.subr.mxu0 0.0
    %504 = vmatpush1.msra.mxu0 0.0
    %505 = vmatprep.subr.mxu0 0.0
    %506 = vmatpush1.msra.mxu0 0.0
    %507 = vmatprep.subr.mxu0 0.0
    %508 = vmatpush1.msra.mxu0 0.0
    %509 = vmatprep.subr.mxu0 0.0
    %510 = vmatpush1.msra.mxu0 0.0
    %511 = vmatprep.subr.mxu0 0.0
    %512 = vmatpush1.msra.mxu0 0.0
    %513 = vmatprep.subr.mxu0 0.0
    %514 = vmatpush1.msra.mxu0 0.0
    %515 = vmatprep.subr.mxu0 0.0
    %516 = vmatpush1.msra.mxu0 0.0
    %517 = vmatprep.subr.mxu0 0.0
    %518 = vmatpush1.msra.mxu0 0.0
    %519 = vmatprep.subr.mxu0 0.0
    %520 = vmatpush1.msra.mxu0 0.0
    %521 = vmatprep.subr.mxu0 0.0
    %522 = vmatpush1.msra.mxu0 0.0
    %523 = vmatprep.subr.mxu0 0.0
    %524 = vmatpush1.msra.mxu0 0.0
    %525 = vmatprep.subr.mxu0 0.0
    %526 = vmatpush1.msra.mxu0 0.0
    %527 = vmatprep.subr.mxu0 0.0
    %528 = vmatpush1.msra.mxu0 0.0
    %529 = vmatprep.subr.mxu0 0.0
    %530 = vmatpush1.msra.mxu0 0.0
    %531 = vmatprep.subr.mxu0 0.0
    %532 = vmatpush1.msra.mxu0 0.0
    %533 = vmatprep.subr.mxu0 0.0
    %534 = vmatpush1.msra.mxu0 0.0
    %535 = vmatprep.subr.mxu0 0.0
    %536 = vmatpush1.msra.mxu0 0.0
    %537 = vmatprep.subr.mxu0 0.0
    %538 = vmatpush1.msra.mxu0 0.0
    %539 = vmatprep.subr.mxu0 0.0
    %540 = vmatpush1.msra.mxu0 0.0
    %541 = vmatprep.subr.mxu0 0.0
    %542 = vmatpush1.msra.mxu0 0.0
    %543 = vmatprep.subr.mxu0 0.0
    %544 = vmatpush1.msra.mxu0 0.0
    %545 = vmatprep.subr.mxu0 0.0
    %546 = vmatpush1.msra.mxu0 0.0
    %547 = vmatprep.subr.mxu0 0.0
    %548 = vmatpush1.msra.mxu0 0.0
    %549 = vmatprep.subr.mxu0 0.0
    %550 = vmatpush1.msra.mxu0 0.0
    %551 = vmatprep.subr.mxu0 0.0
    %552 = vmatpush1.msra.mxu0 0.0
    %553 = vmatprep.subr.mxu0 0.0
    %554 = vmatpush1.msra.mxu0 0.0
    %555 = vmatprep.subr.mxu0 0.0
    %556 = vmatpush1.msra.mxu0 0.0
    %557 = vmatprep.subr.mxu0 0.0
    %558 = vmatpush1.msra.mxu0 0.0
    %559 = vmatprep.mubr.f32.mxu0 0.0
    %560 = vmatmul.mubr.f32.gmra.mrb[0].mxu0 %v138
    %v561 = vpop.f32.mrb[0].mxu0
    %v562 = vadd.f32 %v493, %v561
    %v563 = vpop.f32.mrb[0].mxu0
    %564 = vmatprep.mubr.f32.mxu0 0.0
    %565 = vmatmul.mubr.f32.gmra.mrb[0].mxu0 %v141
    %v566 = vpop.f32.mrb[0].mxu0
    %v567 = vadd.f32 %v493, %v566
    %v568 = vpop.f32.mrb[0].mxu0
    %569 = vdwg.mxu0
    %s570 = scalar_lea.vmem %s8, 32
    %v571 = vld [vmem:[%s570] sm:$0xff]
    %v572 = vld [vmem:[%s570 + $0x8] sm:$0xff]
    %v573 = vld [vmem:[%s570 + $0x10] sm:$0xff]
    %v574 = vld [vmem:[%s570 + $0x18] sm:$0xff]
    %s575 = scalar_lea.vmem %s9, 1
    %v576 = vld [vmem:[%s575] sm:$0x1]
    %v578 = vlaneseq
    %v579 = vshrl.u32 %v578, 7
    %v580 = vsub.s32 0, %v579
    %v581 = vrot.slane %v576, %v580
    %583 = vmatprep.subr.mxu0 0.0
    %584 = vmatpush1.msra.mxu0 %v571
    %585 = vmatprep.subr.mxu0 0.0
    %586 = vmatpush1.msra.mxu0 %v572
    %587 = vmatprep.subr.mxu0 0.0
    %588 = vmatpush1.msra.mxu0 %v573
    %589 = vmatprep.subr.mxu0 0.0
    %590 = vmatpush1.msra.mxu0 %v574
    %591 = vmatprep.subr.mxu0 0.0
    %592 = vmatpush1.msra.mxu0 0.0
    %593 = vmatprep.subr.mxu0 0.0
    %594 = vmatpush1.msra.mxu0 0.0
    %595 = vmatprep.subr.mxu0 0.0
    %596 = vmatpush1.msra.mxu0 0.0
    %597 = vmatprep.subr.mxu0 0.0
    %598 = vmatpush1.msra.mxu0 0.0
    %599 = vmatprep.subr.mxu0 0.0
    %600 = vmatpush1.msra.mxu0 0.0
    %601 = vmatprep.subr.mxu0 0.0
    %602 = vmatpush1.msra.mxu0 0.0
    %603 = vmatprep.subr.mxu0 0.0
    %604 = vmatpush1.msra.mxu0 0.0
    %605 = vmatprep.subr.mxu0 0.0
    %606 = vmatpush1.msra.mxu0 0.0
    %607 = vmatprep.subr.mxu0 0.0
    %608 = vmatpush1.msra.mxu0 0.0
    %609 = vmatprep.subr.mxu0 0.0
    %610 = vmatpush1.msra.mxu0 0.0
    %611 = vmatprep.subr.mxu0 0.0
    %612 = vmatpush1.msra.mxu0 0.0
    %613 = vmatprep.subr.mxu0 0.0
    %614 = vmatpush1.msra.mxu0 0.0
    %615 = vmatprep.subr.mxu0 0.0
    %616 = vmatpush1.msra.mxu0 0.0
    %617 = vmatprep.subr.mxu0 0.0
    %618 = vmatpush1.msra.mxu0 0.0
    %619 = vmatprep.subr.mxu0 0.0
    %620 = vmatpush1.msra.mxu0 0.0
    %621 = vmatprep.subr.mxu0 0.0
    %622 = vmatpush1.msra.mxu0 0.0
    %623 = vmatprep.subr.mxu0 0.0
    %624 = vmatpush1.msra.mxu0 0.0
    %625 = vmatprep.subr.mxu0 0.0
    %626 = vmatpush1.msra.mxu0 0.0
    %627 = vmatprep.subr.mxu0 0.0
    %628 = vmatpush1.msra.mxu0 0.0
    %629 = vmatprep.subr.mxu0 0.0
    %630 = vmatpush1.msra.mxu0 0.0
    %631 = vmatprep.subr.mxu0 0.0
    %632 = vmatpush1.msra.mxu0 0.0
    %633 = vmatprep.subr.mxu0 0.0
    %634 = vmatpush1.msra.mxu0 0.0
    %635 = vmatprep.subr.mxu0 0.0
    %636 = vmatpush1.msra.mxu0 0.0
    %637 = vmatprep.subr.mxu0 0.0
    %638 = vmatpush1.msra.mxu0 0.0
    %639 = vmatprep.subr.mxu0 0.0
    %640 = vmatpush1.msra.mxu0 0.0
    %641 = vmatprep.subr.mxu0 0.0
    %642 = vmatpush1.msra.mxu0 0.0
    %643 = vmatprep.subr.mxu0 0.0
    %644 = vmatpush1.msra.mxu0 0.0
    %645 = vmatprep.subr.mxu0 0.0
    %646 = vmatpush1.msra.mxu0 0.0
    %647 = vmatprep.mubr.f32.mxu0 0.0
    %648 = vmatmul.mubr.f32.gmra.mrb[0].mxu0 %v138
    %v649 = vpop.f32.mrb[0].mxu0
    %v650 = vadd.f32 %v581, %v649
    %v651 = vpop.f32.mrb[0].mxu0
    %652 = vmatprep.mubr.f32.mxu0 0.0
    %653 = vmatmul.mubr.f32.gmra.mrb[0].mxu0 %v141
    %v654 = vpop.f32.mrb[0].mxu0
    %v655 = vadd.f32 %v581, %v654
    %v656 = vpop.f32.mrb[0].mxu0
    %657 = vdwg.mxu0
    %v658 = vld [vmem:[%s1] sm:$0xff]
    %v659 = vld [vmem:[%s11] sm:$0x1]
    %vm660 = vcmask 130048
    %v662 = vsel %vm660, %v218, 0
    %v665 = vsel %vm660, %v298, 0
    %667 = vmatprep.subr.mxu0 0.0
    %668 = vmatpush1.xpose.msra.mxu0 %v665
    %669 = vmatprep.subr.mxu0 0.0
    %670 = vmatpush1.xpose.msra.mxu0 0.0
    %671 = vmatprep.subr.mxu0 0.0
    %672 = vmatpush1.xpose.msra.mxu0 0.0
    %673 = vmatprep.subr.mxu0 0.0
    %674 = vmatpush1.xpose.msra.mxu0 0.0
    %675 = vmatprep.subr.mxu0 0.0
    %676 = vmatpush1.xpose.msra.mxu0 0.0
    %677 = vmatprep.subr.mxu0 0.0
    %678 = vmatpush1.xpose.msra.mxu0 0.0
    %679 = vmatprep.subr.mxu0 0.0
    %680 = vmatpush1.xpose.msra.mxu0 0.0
    %681 = vmatprep.subr.mxu0 0.0
    %682 = vmatpush1.xpose.msra.mxu0 0.0
    %683 = vmatprep.subr.mxu0 0.0
    %684 = vmatpush1.xpose.msra.mxu0 0.0
    %685 = vmatprep.subr.mxu0 0.0
    %686 = vmatpush1.xpose.msra.mxu0 0.0
    %687 = vmatprep.subr.mxu0 0.0
    %688 = vmatpush1.xpose.msra.mxu0 0.0
    %689 = vmatprep.subr.mxu0 0.0
    %690 = vmatpush1.xpose.msra.mxu0 0.0
    %691 = vmatprep.subr.mxu0 0.0
    %692 = vmatpush1.xpose.msra.mxu0 0.0
    %693 = vmatprep.subr.mxu0 0.0
    %694 = vmatpush1.xpose.msra.mxu0 0.0
    %695 = vmatprep.subr.mxu0 0.0
    %696 = vmatpush1.xpose.msra.mxu0 0.0
    %697 = vmatprep.subr.mxu0 0.0
    %698 = vmatpush1.xpose.msra.mxu0 0.0
    %699 = vmatprep.subr.mxu0 0.0
    %700 = vmatpush1.xpose.msra.mxu0 0.0
    %701 = vmatprep.subr.mxu0 0.0
    %702 = vmatpush1.xpose.msra.mxu0 0.0
    %703 = vmatprep.subr.mxu0 0.0
    %704 = vmatpush1.xpose.msra.mxu0 0.0
    %705 = vmatprep.subr.mxu0 0.0
    %706 = vmatpush1.xpose.msra.mxu0 0.0
    %707 = vmatprep.subr.mxu0 0.0
    %708 = vmatpush1.xpose.msra.mxu0 0.0
    %709 = vmatprep.subr.mxu0 0.0
    %710 = vmatpush1.xpose.msra.mxu0 0.0
    %711 = vmatprep.subr.mxu0 0.0
    %712 = vmatpush1.xpose.msra.mxu0 0.0
    %713 = vmatprep.subr.mxu0 0.0
    %714 = vmatpush1.xpose.msra.mxu0 0.0
    %715 = vmatprep.subr.mxu0 0.0
    %716 = vmatpush1.xpose.msra.mxu0 0.0
    %717 = vmatprep.subr.mxu0 0.0
    %718 = vmatpush1.xpose.msra.mxu0 0.0
    %719 = vmatprep.subr.mxu0 0.0
    %720 = vmatpush1.xpose.msra.mxu0 0.0
    %721 = vmatprep.subr.mxu0 0.0
    %722 = vmatpush1.xpose.msra.mxu0 0.0
    %723 = vmatprep.subr.mxu0 0.0
    %724 = vmatpush1.xpose.msra.mxu0 0.0
    %725 = vmatprep.subr.mxu0 0.0
    %726 = vmatpush1.xpose.msra.mxu0 0.0
    %727 = vmatprep.subr.mxu0 0.0
    %728 = vmatpush1.xpose.msra.mxu0 0.0
    %729 = vmatprep.subr.mxu0 0.0
    %730 = vmatpush1.xpose.msra.mxu0 0.0
    %731 = vmatprep.mubr.f32.mxu0 0.0
    %732 = vmatmul.mubr.f32.gmra.mrb[0].mxu0 %v662
    %v733 = vpop.f32.mrb[0].mxu0
    %v734 = vadd.f32 %v658, %v733
    %v735 = vpop.f32.mrb[0].mxu0
    %736 = vdwg.mxu0
    %vm737 = vcmask 64512
    %v738 = vsel %vm737, %v734, -inf
    %739 = vmax.xlane.f32.xlu0 %v738
    %v740 = vpop.xlane.xlu0 %739
    %v741 = vsub.f32 %v734, %v740
    %v742 = vmul.f32 %v741, 1.442695
    %v743 = vpow.pop %v742
    %v744 = vsel %vm737, %v743, 0.0
    %745 = vadd.xlane.f32.xlu0 %v744
    %v746 = vpop.xlane.xlu0 %745
    %v747 = vrcp.pop %v746
    %v748 = vmul.f32 %v743, %v747
    %v750 = vsel %vm737, %v748, 0
    %752 = vmatprep.subr.mxu0 0.0
    %753 = vmatpush1.msra.mxu0 %v384
    %754 = vmatprep.subr.mxu0 0.0
    %755 = vmatpush1.msra.mxu0 0.0
    %756 = vmatprep.subr.mxu0 0.0
    %757 = vmatpush1.msra.mxu0 0.0
    %758 = vmatprep.subr.mxu0 0.0
    %759 = vmatpush1.msra.mxu0 0.0
    %760 = vmatprep.subr.mxu0 0.0
    %761 = vmatpush1.msra.mxu0 0.0
    %762 = vmatprep.subr.mxu0 0.0
    %763 = vmatpush1.msra.mxu0 0.0
    %764 = vmatprep.subr.mxu0 0.0
    %765 = vmatpush1.msra.mxu0 0.0
    %766 = vmatprep.subr.mxu0 0.0
    %767 = vmatpush1.msra.mxu0 0.0
    %768 = vmatprep.subr.mxu0 0.0
    %769 = vmatpush1.msra.mxu0 0.0
    %770 = vmatprep.subr.mxu0 0.0
    %771 = vmatpush1.msra.mxu0 0.0
    %772 = vmatprep.subr.mxu0 0.0
    %773 = vmatpush1.msra.mxu0 0.0
    %774 = vmatprep.subr.mxu0 0.0
    %775 = vmatpush1.msra.mxu0 0.0
    %776 = vmatprep.subr.mxu0 0.0
    %777 = vmatpush1.msra.mxu0 0.0
    %778 = vmatprep.subr.mxu0 0.0
    %779 = vmatpush1.msra.mxu0 0.0
    %780 = vmatprep.subr.mxu0 0.0
    %781 = vmatpush1.msra.mxu0 0.0
    %782 = vmatprep.subr.mxu0 0.0
    %783 = vmatpush1.msra.mxu0 0.0
    %784 = vmatprep.subr.mxu0 0.0
    %785 = vmatpush1.msra.mxu0 0.0
    %786 = vmatprep.subr.mxu0 0.0
    %787 = vmatpush1.msra.mxu0 0.0
    %788 = vmatprep.subr.mxu0 0.0
    %789 = vmatpush1.msra.mxu0 0.0
    %790 = vmatprep.subr.mxu0 0.0
    %791 = vmatpush1.msra.mxu0 0.0
    %792 = vmatprep.subr.mxu0 0.0
    %793 = vmatpush1.msra.mxu0 0.0
    %794 = vmatprep.subr.mxu0 0.0
    %795 = vmatpush1.msra.mxu0 0.0
    %796 = vmatprep.subr.mxu0 0.0
    %797 = vmatpush1.msra.mxu0 0.0
    %798 = vmatprep.subr.mxu0 0.0
    %799 = vmatpush1.msra.mxu0 0.0
    %800 = vmatprep.subr.mxu0 0.0
    %801 = vmatpush1.msra.mxu0 0.0
    %802 = vmatprep.subr.mxu0 0.0
    %803 = vmatpush1.msra.mxu0 0.0
    %804 = vmatprep.subr.mxu0 0.0
    %805 = vmatpush1.msra.mxu0 0.0
    %806 = vmatprep.subr.mxu0 0.0
    %807 = vmatpush1.msra.mxu0 0.0
    %808 = vmatprep.subr.mxu0 0.0
    %809 = vmatpush1.msra.mxu0 0.0
    %810 = vmatprep.subr.mxu0 0.0
    %811 = vmatpush1.msra.mxu0 0.0
    %812 = vmatprep.subr.mxu0 0.0
    %813 = vmatpush1.msra.mxu0 0.0
    %814 = vmatprep.subr.mxu0 0.0
    %815 = vmatpush1.msra.mxu0 0.0
    %816 = vmatprep.mubr.f32.mxu0 0.0
    %817 = vmatmul.mubr.f32.gmra.mrb[0].mxu0 %v750
    %v818 = vpop.f32.mrb[0].mxu0
    %v819 = vadd.f32 0.0, %v818
    %v820 = vpop.f32.mrb[0].mxu0
    %821 = vdwg.mxu0
    %v822 = vld [vmem:[%s10] sm:$0xff]
    %v823 = vld [vmem:[%s10 + $0x8] sm:$0xff]
    %v825 = vsel %vm660, %v819, 0
    %827 = vmatprep.subr.mxu0 0.0
    %828 = vmatpush1.msra.mxu0 %v822
    %829 = vmatprep.subr.mxu0 0.0
    %830 = vmatpush1.msra.mxu0 %v823
    %831 = vmatprep.subr.mxu0 0.0
    %832 = vmatpush1.msra.mxu0 0.0
    %833 = vmatprep.subr.mxu0 0.0
    %834 = vmatpush1.msra.mxu0 0.0
    %835 = vmatprep.subr.mxu0 0.0
    %836 = vmatpush1.msra.mxu0 0.0
    %837 = vmatprep.subr.mxu0 0.0
    %838 = vmatpush1.msra.mxu0 0.0
    %839 = vmatprep.subr.mxu0 0.0
    %840 = vmatpush1.msra.mxu0 0.0
    %841 = vmatprep.subr.mxu0 0.0
    %842 = vmatpush1.msra.mxu0 0.0
    %843 = vmatprep.subr.mxu0 0.0
    %844 = vmatpush1.msra.mxu0 0.0
    %845 = vmatprep.subr.mxu0 0.0
    %846 = vmatpush1.msra.mxu0 0.0
    %847 = vmatprep.subr.mxu0 0.0
    %848 = vmatpush1.msra.mxu0 0.0
    %849 = vmatprep.subr.mxu0 0.0
    %850 = vmatpush1.msra.mxu0 0.0
    %851 = vmatprep.subr.mxu0 0.0
    %852 = vmatpush1.msra.mxu0 0.0
    %853 = vmatprep.subr.mxu0 0.0
    %854 = vmatpush1.msra.mxu0 0.0
    %855 = vmatprep.subr.mxu0 0.0
    %856 = vmatpush1.msra.mxu0 0.0
    %857 = vmatprep.subr.mxu0 0.0
    %858 = vmatpush1.msra.mxu0 0.0
    %859 = vmatprep.subr.mxu0 0.0
    %860 = vmatpush1.msra.mxu0 0.0
    %861 = vmatprep.subr.mxu0 0.0
    %862 = vmatpush1.msra.mxu0 0.0
    %863 = vmatprep.subr.mxu0 0.0
    %864 = vmatpush1.msra.mxu0 0.0
    %865 = vmatprep.subr.mxu0 0.0
    %866 = vmatpush1.msra.mxu0 0.0
    %867 = vmatprep.subr.mxu0 0.0
    %868 = vmatpush1.msra.mxu0 0.0
    %869 = vmatprep.subr.mxu0 0.0
    %870 = vmatpush1.msra.mxu0 0.0
    %871 = vmatprep.subr.mxu0 0.0
    %872 = vmatpush1.msra.mxu0 0.0
    %873 = vmatprep.subr.mxu0 0.0
    %874 = vmatpush1.msra.mxu0 0.0
    %875 = vmatprep.subr.mxu0 0.0
    %876 = vmatpush1.msra.mxu0 0.0
    %877 = vmatprep.subr.mxu0 0.0
    %878 = vmatpush1.msra.mxu0 0.0
    %879 = vmatprep.subr.mxu0 0.0
    %880 = vmatpush1.msra.mxu0 0.0
    %881 = vmatprep.subr.mxu0 0.0
    %882 = vmatpush1.msra.mxu0 0.0
    %883 = vmatprep.subr.mxu0 0.0
    %884 = vmatpush1.msra.mxu0 0.0
    %885 = vmatprep.subr.mxu0 0.0
    %886 = vmatpush1.msra.mxu0 0.0
    %887 = vmatprep.subr.mxu0 0.0
    %888 = vmatpush1.msra.mxu0 0.0
    %889 = vmatprep.subr.mxu0 0.0
    %890 = vmatpush1.msra.mxu0 0.0
    %891 = vmatprep.mubr.f32.mxu0 0.0
    %892 = vmatmul.mubr.f32.gmra.mrb[0].mxu0 %v825
    %v893 = vpop.f32.mrb[0].mxu0
    %v894 = vadd.f32 0.0, %v893
    %v895 = vpop.f32.mrb[0].mxu0
    %896 = vdwg.mxu0
    %v898 = vlaneseq
    %v899 = vshrl.u32 %v898, 7
    %v900 = vsub.s32 0, %v899
    %v901 = vrot.slane %v659, %v900
    %v903 = vadd.f32 %v901, %v894
    %v905 = vsel %vm660, %v480, 0
    %v908 = vsel %vm660, %v562, 0
    %910 = vmatprep.subr.mxu0 0.0
    %911 = vmatpush1.xpose.msra.mxu0 %v908
    %912 = vmatprep.subr.mxu0 0.0
    %913 = vmatpush1.xpose.msra.mxu0 0.0
    %914 = vmatprep.subr.mxu0 0.0
    %915 = vmatpush1.xpose.msra.mxu0 0.0
    %916 = vmatprep.subr.mxu0 0.0
    %917 = vmatpush1.xpose.msra.mxu0 0.0
    %918 = vmatprep.subr.mxu0 0.0
    %919 = vmatpush1.xpose.msra.mxu0 0.0
    %920 = vmatprep.subr.mxu0 0.0
    %921 = vmatpush1.xpose.msra.mxu0 0.0
    %922 = vmatprep.subr.mxu0 0.0
    %923 = vmatpush1.xpose.msra.mxu0 0.0
    %924 = vmatprep.subr.mxu0 0.0
    %925 = vmatpush1.xpose.msra.mxu0 0.0
    %926 = vmatprep.subr.mxu0 0.0
    %927 = vmatpush1.xpose.msra.mxu0 0.0
    %928 = vmatprep.subr.mxu0 0.0
    %929 = vmatpush1.xpose.msra.mxu0 0.0
    %930 = vmatprep.subr.mxu0 0.0
    %931 = vmatpush1.xpose.msra.mxu0 0.0
    %932 = vmatprep.subr.mxu0 0.0
    %933 = vmatpush1.xpose.msra.mxu0 0.0
    %934 = vmatprep.subr.mxu0 0.0
    %935 = vmatpush1.xpose.msra.mxu0 0.0
    %936 = vmatprep.subr.mxu0 0.0
    %937 = vmatpush1.xpose.msra.mxu0 0.0
    %938 = vmatprep.subr.mxu0 0.0
    %939 = vmatpush1.xpose.msra.mxu0 0.0
    %940 = vmatprep.subr.mxu0 0.0
    %941 = vmatpush1.xpose.msra.mxu0 0.0
    %942 = vmatprep.subr.mxu0 0.0
    %943 = vmatpush1.xpose.msra.mxu0 0.0
    %944 = vmatprep.subr.mxu0 0.0
    %945 = vmatpush1.xpose.msra.mxu0 0.0
    %946 = vmatprep.subr.mxu0 0.0
    %947 = vmatpush1.xpose.msra.mxu0 0.0
    %948 = vmatprep.subr.mxu0 0.0
    %949 = vmatpush1.xpose.msra.mxu0 0.0
    %950 = vmatprep.subr.mxu0 0.0
    %951 = vmatpush1.xpose.msra.mxu0 0.0
    %952 = vmatprep.subr.mxu0 0.0
    %953 = vmatpush1.xpose.msra.mxu0 0.0
    %954 = vmatprep.subr.mxu0 0.0
    %955 = vmatpush1.xpose.msra.mxu0 0.0
    %956 = vmatprep.subr.mxu0 0.0
    %957 = vmatpush1.xpose.msra.mxu0 0.0
    %958 = vmatprep.subr.mxu0 0.0
    %959 = vmatpush1.xpose.msra.mxu0 0.0
    %960 = vmatprep.subr.mxu0 0.0
    %961 = vmatpush1.xpose.msra.mxu0 0.0
    %962 = vmatprep.subr.mxu0 0.0
    %963 = vmatpush1.xpose.msra.mxu0 0.0
    %964 = vmatprep.subr.mxu0 0.0
    %965 = vmatpush1.xpose.msra.mxu0 0.0
    %966 = vmatprep.subr.mxu0 0.0
    %967 = vmatpush1.xpose.msra.mxu0 0.0
    %968 = vmatprep.subr.mxu0 0.0
    %969 = vmatpush1.xpose.msra.mxu0 0.0
    %970 = vmatprep.subr.mxu0 0.0
    %971 = vmatpush1.xpose.msra.mxu0 0.0
    %972 = vmatprep.subr.mxu0 0.0
    %973 = vmatpush1.xpose.msra.mxu0 0.0
    %974 = vmatprep.mubr.f32.mxu0 0.0
    %975 = vmatmul.mubr.f32.gmra.mrb[0].mxu0 %v905
    %v976 = vpop.f32.mrb[0].mxu0
    %v977 = vadd.f32 %v658, %v976
    %v978 = vpop.f32.mrb[0].mxu0
    %979 = vdwg.mxu0
    %v980 = vsel %vm737, %v977, -inf
    %981 = vmax.xlane.f32.xlu0 %v980
    %v982 = vpop.xlane.xlu0 %981
    %v983 = vsub.f32 %v977, %v982
    %v984 = vmul.f32 %v983, 1.442695
    %v985 = vpow.pop %v984
    %v986 = vsel %vm737, %v985, 0.0
    %987 = vadd.xlane.f32.xlu0 %v986
    %v988 = vpop.xlane.xlu0 %987
    %v989 = vrcp.pop %v988
    %v990 = vmul.f32 %v985, %v989
    %v992 = vsel %vm737, %v990, 0
    %994 = vmatprep.subr.mxu0 0.0
    %995 = vmatpush1.msra.mxu0 %v650
    %996 = vmatprep.subr.mxu0 0.0
    %997 = vmatpush1.msra.mxu0 0.0
    %998 = vmatprep.subr.mxu0 0.0
    %999 = vmatpush1.msra.mxu0 0.0
    %1000 = vmatprep.subr.mxu0 0.0
    %1001 = vmatpush1.msra.mxu0 0.0
    %1002 = vmatprep.subr.mxu0 0.0
    %1003 = vmatpush1.msra.mxu0 0.0
    %1004 = vmatprep.subr.mxu0 0.0
    %1005 = vmatpush1.msra.mxu0 0.0
    %1006 = vmatprep.subr.mxu0 0.0
    %1007 = vmatpush1.msra.mxu0 0.0
    %1008 = vmatprep.subr.mxu0 0.0
    %1009 = vmatpush1.msra.mxu0 0.0
    %1010 = vmatprep.subr.mxu0 0.0
    %1011 = vmatpush1.msra.mxu0 0.0
    %1012 = vmatprep.subr.mxu0 0.0
    %1013 = vmatpush1.msra.mxu0 0.0
    %1014 = vmatprep.subr.mxu0 0.0
    %1015 = vmatpush1.msra.mxu0 0.0
    %1016 = vmatprep.subr.mxu0 0.0
    %1017 = vmatpush1.msra.mxu0 0.0
    %1018 = vmatprep.subr.mxu0 0.0
    %1019 = vmatpush1.msra.mxu0 0.0
    %1020 = vmatprep.subr.mxu0 0.0
    %1021 = vmatpush1.msra.mxu0 0.0
    %1022 = vmatprep.subr.mxu0 0.0
    %1023 = vmatpush1.msra.mxu0 0.0
    %1024 = vmatprep.subr.mxu0 0.0
    %1025 = vmatpush1.msra.mxu0 0.0
    %1026 = vmatprep.subr.mxu0 0.0
    %1027 = vmatpush1.msra.mxu0 0.0
    %1028 = vmatprep.subr.mxu0 0.0
    %1029 = vmatpush1.msra.mxu0 0.0
    %1030 = vmatprep.subr.mxu0 0.0
    %1031 = vmatpush1.msra.mxu0 0.0
    %1032 = vmatprep.subr.mxu0 0.0
    %1033 = vmatpush1.msra.mxu0 0.0
    %1034 = vmatprep.subr.mxu0 0.0
    %1035 = vmatpush1.msra.mxu0 0.0
    %1036 = vmatprep.subr.mxu0 0.0
    %1037 = vmatpush1.msra.mxu0 0.0
    %1038 = vmatprep.subr.mxu0 0.0
    %1039 = vmatpush1.msra.mxu0 0.0
    %1040 = vmatprep.subr.mxu0 0.0
    %1041 = vmatpush1.msra.mxu0 0.0
    %1042 = vmatprep.subr.mxu0 0.0
    %1043 = vmatpush1.msra.mxu0 0.0
    %1044 = vmatprep.subr.mxu0 0.0
    %1045 = vmatpush1.msra.mxu0 0.0
    %1046 = vmatprep.subr.mxu0 0.0
    %1047 = vmatpush1.msra.mxu0 0.0
    %1048 = vmatprep.subr.mxu0 0.0
    %1049 = vmatpush1.msra.mxu0 0.0
    %1050 = vmatprep.subr.mxu0 0.0
    %1051 = vmatpush1.msra.mxu0 0.0
    %1052 = vmatprep.subr.mxu0 0.0
    %1053 = vmatpush1.msra.mxu0 0.0
    %1054 = vmatprep.subr.mxu0 0.0
    %1055 = vmatpush1.msra.mxu0 0.0
    %1056 = vmatprep.subr.mxu0 0.0
    %1057 = vmatpush1.msra.mxu0 0.0
    %1058 = vmatprep.mubr.f32.mxu0 0.0
    %1059 = vmatmul.mubr.f32.gmra.mrb[0].mxu0 %v992
    %v1060 = vpop.f32.mrb[0].mxu0
    %v1061 = vadd.f32 0.0, %v1060
    %v1062 = vpop.f32.mrb[0].mxu0
    %1063 = vdwg.mxu0
    %s1064 = scalar_lea.vmem %s10, 16
    %v1065 = vld [vmem:[%s1064] sm:$0xff]
    %v1066 = vld [vmem:[%s1064 + $0x8] sm:$0xff]
    %v1068 = vsel %vm660, %v1061, 0
    %1070 = vmatprep.subr.mxu0 0.0
    %1071 = vmatpush1.msra.mxu0 %v1065
    %1072 = vmatprep.subr.mxu0 0.0
    %1073 = vmatpush1.msra.mxu0 %v1066
    %1074 = vmatprep.subr.mxu0 0.0
    %1075 = vmatpush1.msra.mxu0 0.0
    %1076 = vmatprep.subr.mxu0 0.0
    %1077 = vmatpush1.msra.mxu0 0.0
    %1078 = vmatprep.subr.mxu0 0.0
    %1079 = vmatpush1.msra.mxu0 0.0
    %1080 = vmatprep.subr.mxu0 0.0
    %1081 = vmatpush1.msra.mxu0 0.0
    %1082 = vmatprep.subr.mxu0 0.0
    %1083 = vmatpush1.msra.mxu0 0.0
    %1084 = vmatprep.subr.mxu0 0.0
    %1085 = vmatpush1.msra.mxu0 0.0
    %1086 = vmatprep.subr.mxu0 0.0
    %1087 = vmatpush1.msra.mxu0 0.0
    %1088 = vmatprep.subr.mxu0 0.0
    %1089 = vmatpush1.msra.mxu0 0.0
    %1090 = vmatprep.subr.mxu0 0.0
    %1091 = vmatpush1.msra.mxu0 0.0
    %1092 = vmatprep.subr.mxu0 0.0
    %1093 = vmatpush1.msra.mxu0 0.0
    %1094 = vmatprep.subr.mxu0 0.0
    %1095 = vmatpush1.msra.mxu0 0.0
    %1096 = vmatprep.subr.mxu0 0.0
    %1097 = vmatpush1.msra.mxu0 0.0
    %1098 = vmatprep.subr.mxu0 0.0
    %1099 = vmatpush1.msra.mxu0 0.0
    %1100 = vmatprep.subr.mxu0 0.0
    %1101 = vmatpush1.msra.mxu0 0.0
    %1102 = vmatprep.subr.mxu0 0.0
    %1103 = vmatpush1.msra.mxu0 0.0
    %1104 = vmatprep.subr.mxu0 0.0
    %1105 = vmatpush1.msra.mxu0 0.0
    %1106 = vmatprep.subr.mxu0 0.0
    %1107 = vmatpush1.msra.mxu0 0.0
    %1108 = vmatprep.subr.mxu0 0.0
    %1109 = vmatpush1.msra.mxu0 0.0
    %1110 = vmatprep.subr.mxu0 0.0
    %1111 = vmatpush1.msra.mxu0 0.0
    %1112 = vmatprep.subr.mxu0 0.0
    %1113 = vmatpush1.msra.mxu0 0.0
    %1114 = vmatprep.subr.mxu0 0.0
    %1115 = vmatpush1.msra.mxu0 0.0
    %1116 = vmatprep.subr.mxu0 0.0
    %1117 = vmatpush1.msra.mxu0 0.0
    %1118 = vmatprep.subr.mxu0 0.0
    %1119 = vmatpush1.msra.mxu0 0.0
    %1120 = vmatprep.subr.mxu0 0.0
    %1121 = vmatpush1.msra.mxu0 0.0
    %1122 = vmatprep.subr.mxu0 0.0
    %1123 = vmatpush1.msra.mxu0 0.0
    %1124 = vmatprep.subr.mxu0 0.0
    %1125 = vmatpush1.msra.mxu0 0.0
    %1126 = vmatprep.subr.mxu0 0.0
    %1127 = vmatpush1.msra.mxu0 0.0
    %1128 = vmatprep.subr.mxu0 0.0
    %1129 = vmatpush1.msra.mxu0 0.0
    %1130 = vmatprep.subr.mxu0 0.0
    %1131 = vmatpush1.msra.mxu0 0.0
    %1132 = vmatprep.subr.mxu0 0.0
    %1133 = vmatpush1.msra.mxu0 0.0
    %1134 = vmatprep.mubr.f32.mxu0 0.0
    %1135 = vmatmul.mubr.f32.gmra.mrb[0].mxu0 %v1068
    %v1136 = vpop.f32.mrb[0].mxu0
    %v1137 = vadd.f32 0.0, %v1136
    %v1138 = vpop.f32.mrb[0].mxu0
    %1139 = vdwg.mxu0
    %v1140 = vadd.f32 %v903, %v1137
    %1141 = vst.msk [vmem:[#allocation2] sm:$0xff] %vm82, %v1140
    %s1142 = scalar_lea.vmem %s1, 8
    %v1143 = vld [vmem:[%s1142] sm:$0xff]
    %v1144 = vld [vmem:[%s11] sm:$0x1]
    %v1146 = vsel %vm660, %v219, 0
    %v1149 = vsel %vm660, %v303, 0
    %1151 = vmatprep.subr.mxu0 0.0
    %1152 = vmatpush1.xpose.msra.mxu0 %v1149
    %1153 = vmatprep.subr.mxu0 0.0
    %1154 = vmatpush1.xpose.msra.mxu0 0.0
    %1155 = vmatprep.subr.mxu0 0.0
    %1156 = vmatpush1.xpose.msra.mxu0 0.0
    %1157 = vmatprep.subr.mxu0 0.0
    %1158 = vmatpush1.xpose.msra.mxu0 0.0
    %1159 = vmatprep.subr.mxu0 0.0
    %1160 = vmatpush1.xpose.msra.mxu0 0.0
    %1161 = vmatprep.subr.mxu0 0.0
    %1162 = vmatpush1.xpose.msra.mxu0 0.0
    %1163 = vmatprep.subr.mxu0 0.0
    %1164 = vmatpush1.xpose.msra.mxu0 0.0
    %1165 = vmatprep.subr.mxu0 0.0
    %1166 = vmatpush1.xpose.msra.mxu0 0.0
    %1167 = vmatprep.subr.mxu0 0.0
    %1168 = vmatpush1.xpose.msra.mxu0 0.0
    %1169 = vmatprep.subr.mxu0 0.0
    %1170 = vmatpush1.xpose.msra.mxu0 0.0
    %1171 = vmatprep.subr.mxu0 0.0
    %1172 = vmatpush1.xpose.msra.mxu0 0.0
    %1173 = vmatprep.subr.mxu0 0.0
    %1174 = vmatpush1.xpose.msra.mxu0 0.0
    %1175 = vmatprep.subr.mxu0 0.0
    %1176 = vmatpush1.xpose.msra.mxu0 0.0
    %1177 = vmatprep.subr.mxu0 0.0
    %1178 = vmatpush1.xpose.msra.mxu0 0.0
    %1179 = vmatprep.subr.mxu0 0.0
    %1180 = vmatpush1.xpose.msra.mxu0 0.0
    %1181 = vmatprep.subr.mxu0 0.0
    %1182 = vmatpush1.xpose.msra.mxu0 0.0
    %1183 = vmatprep.subr.mxu0 0.0
    %1184 = vmatpush1.xpose.msra.mxu0 0.0
    %1185 = vmatprep.subr.mxu0 0.0
    %1186 = vmatpush1.xpose.msra.mxu0 0.0
    %1187 = vmatprep.subr.mxu0 0.0
    %1188 = vmatpush1.xpose.msra.mxu0 0.0
    %1189 = vmatprep.subr.mxu0 0.0
    %1190 = vmatpush1.xpose.msra.mxu0 0.0
    %1191 = vmatprep.subr.mxu0 0.0
    %1192 = vmatpush1.xpose.msra.mxu0 0.0
    %1193 = vmatprep.subr.mxu0 0.0
    %1194 = vmatpush1.xpose.msra.mxu0 0.0
    %1195 = vmatprep.subr.mxu0 0.0
    %1196 = vmatpush1.xpose.msra.mxu0 0.0
    %1197 = vmatprep.subr.mxu0 0.0
    %1198 = vmatpush1.xpose.msra.mxu0 0.0
    %1199 = vmatprep.subr.mxu0 0.0
    %1200 = vmatpush1.xpose.msra.mxu0 0.0
    %1201 = vmatprep.subr.mxu0 0.0
    %1202 = vmatpush1.xpose.msra.mxu0 0.0
    %1203 = vmatprep.subr.mxu0 0.0
    %1204 = vmatpush1.xpose.msra.mxu0 0.0
    %1205 = vmatprep.subr.mxu0 0.0
    %1206 = vmatpush1.xpose.msra.mxu0 0.0
    %1207 = vmatprep.subr.mxu0 0.0
    %1208 = vmatpush1.xpose.msra.mxu0 0.0
    %1209 = vmatprep.subr.mxu0 0.0
    %1210 = vmatpush1.xpose.msra.mxu0 0.0
    %1211 = vmatprep.subr.mxu0 0.0
    %1212 = vmatpush1.xpose.msra.mxu0 0.0
    %1213 = vmatprep.subr.mxu0 0.0
    %1214 = vmatpush1.xpose.msra.mxu0 0.0
    %1215 = vmatprep.mubr.f32.mxu0 0.0
    %1216 = vmatmul.mubr.f32.gmra.mrb[0].mxu0 %v1146
    %v1217 = vpop.f32.mrb[0].mxu0
    %v1218 = vadd.f32 %v1143, %v1217
    %v1219 = vpop.f32.mrb[0].mxu0
    %1220 = vdwg.mxu0
    %v1221 = vsel %vm737, %v1218, -inf
    %1222 = vmax.xlane.f32.xlu0 %v1221
    %v1223 = vpop.xlane.xlu0 %1222
    %v1224 = vsub.f32 %v1218, %v1223
    %v1225 = vmul.f32 %v1224, 1.442695
    %v1226 = vpow.pop %v1225
    %v1227 = vsel %vm737, %v1226, 0.0
    %1228 = vadd.xlane.f32.xlu0 %v1227
    %v1229 = vpop.xlane.xlu0 %1228
    %v1230 = vrcp.pop %v1229
    %v1231 = vmul.f32 %v1226, %v1230
    %v1233 = vsel %vm737, %v1231, 0
    %1235 = vmatprep.subr.mxu0 0.0
    %1236 = vmatpush1.msra.mxu0 %v389
    %1237 = vmatprep.subr.mxu0 0.0
    %1238 = vmatpush1.msra.mxu0 0.0
    %1239 = vmatprep.subr.mxu0 0.0
    %1240 = vmatpush1.msra.mxu0 0.0
    %1241 = vmatprep.subr.mxu0 0.0
    %1242 = vmatpush1.msra.mxu0 0.0
    %1243 = vmatprep.subr.mxu0 0.0
    %1244 = vmatpush1.msra.mxu0 0.0
    %1245 = vmatprep.subr.mxu0 0.0
    %1246 = vmatpush1.msra.mxu0 0.0
    %1247 = vmatprep.subr.mxu0 0.0
    %1248 = vmatpush1.msra.mxu0 0.0
    %1249 = vmatprep.subr.mxu0 0.0
    %1250 = vmatpush1.msra.mxu0 0.0
    %1251 = vmatprep.subr.mxu0 0.0
    %1252 = vmatpush1.msra.mxu0 0.0
    %1253 = vmatprep.subr.mxu0 0.0
    %1254 = vmatpush1.msra.mxu0 0.0
    %1255 = vmatprep.subr.mxu0 0.0
    %1256 = vmatpush1.msra.mxu0 0.0
    %1257 = vmatprep.subr.mxu0 0.0
    %1258 = vmatpush1.msra.mxu0 0.0
    %1259 = vmatprep.subr.mxu0 0.0
    %1260 = vmatpush1.msra.mxu0 0.0
    %1261 = vmatprep.subr.mxu0 0.0
    %1262 = vmatpush1.msra.mxu0 0.0
    %1263 = vmatprep.subr.mxu0 0.0
    %1264 = vmatpush1.msra.mxu0 0.0
    %1265 = vmatprep.subr.mxu0 0.0
    %1266 = vmatpush1.msra.mxu0 0.0
    %1267 = vmatprep.subr.mxu0 0.0
    %1268 = vmatpush1.msra.mxu0 0.0
    %1269 = vmatprep.subr.mxu0 0.0
    %1270 = vmatpush1.msra.mxu0 0.0
    %1271 = vmatprep.subr.mxu0 0.0
    %1272 = vmatpush1.msra.mxu0 0.0
    %1273 = vmatprep.subr.mxu0 0.0
    %1274 = vmatpush1.msra.mxu0 0.0
    %1275 = vmatprep.subr.mxu0 0.0
    %1276 = vmatpush1.msra.mxu0 0.0
    %1277 = vmatprep.subr.mxu0 0.0
    %1278 = vmatpush1.msra.mxu0 0.0
    %1279 = vmatprep.subr.mxu0 0.0
    %1280 = vmatpush1.msra.mxu0 0.0
    %1281 = vmatprep.subr.mxu0 0.0
    %1282 = vmatpush1.msra.mxu0 0.0
    %1283 = vmatprep.subr.mxu0 0.0
    %1284 = vmatpush1.msra.mxu0 0.0
    %1285 = vmatprep.subr.mxu0 0.0
    %1286 = vmatpush1.msra.mxu0 0.0
    %1287 = vmatprep.subr.mxu0 0.0
    %1288 = vmatpush1.msra.mxu0 0.0
    %1289 = vmatprep.subr.mxu0 0.0
    %1290 = vmatpush1.msra.mxu0 0.0
    %1291 = vmatprep.subr.mxu0 0.0
    %1292 = vmatpush1.msra.mxu0 0.0
    %1293 = vmatprep.subr.mxu0 0.0
    %1294 = vmatpush1.msra.mxu0 0.0
    %1295 = vmatprep.subr.mxu0 0.0
    %1296 = vmatpush1.msra.mxu0 0.0
    %1297 = vmatprep.subr.mxu0 0.0
    %1298 = vmatpush1.msra.mxu0 0.0
    %1299 = vmatprep.mubr.f32.mxu0 0.0
    %1300 = vmatmul.mubr.f32.gmra.mrb[0].mxu0 %v1233
    %v1301 = vpop.f32.mrb[0].mxu0
    %v1302 = vadd.f32 0.0, %v1301
    %v1303 = vpop.f32.mrb[0].mxu0
    %1304 = vdwg.mxu0
    %v1305 = vld [vmem:[%s10] sm:$0xff]
    %v1306 = vld [vmem:[%s10 + $0x8] sm:$0xff]
    %v1308 = vsel %vm660, %v1302, 0
    %1310 = vmatprep.subr.mxu0 0.0
    %1311 = vmatpush1.msra.mxu0 %v1305
    %1312 = vmatprep.subr.mxu0 0.0
    %1313 = vmatpush1.msra.mxu0 %v1306
    %1314 = vmatprep.subr.mxu0 0.0
    %1315 = vmatpush1.msra.mxu0 0.0
    %1316 = vmatprep.subr.mxu0 0.0
    %1317 = vmatpush1.msra.mxu0 0.0
    %1318 = vmatprep.subr.mxu0 0.0
    %1319 = vmatpush1.msra.mxu0 0.0
    %1320 = vmatprep.subr.mxu0 0.0
    %1321 = vmatpush1.msra.mxu0 0.0
    %1322 = vmatprep.subr.mxu0 0.0
    %1323 = vmatpush1.msra.mxu0 0.0
    %1324 = vmatprep.subr.mxu0 0.0
    %1325 = vmatpush1.msra.mxu0 0.0
    %1326 = vmatprep.subr.mxu0 0.0
    %1327 = vmatpush1.msra.mxu0 0.0
    %1328 = vmatprep.subr.mxu0 0.0
    %1329 = vmatpush1.msra.mxu0 0.0
    %1330 = vmatprep.subr.mxu0 0.0
    %1331 = vmatpush1.msra.mxu0 0.0
    %1332 = vmatprep.subr.mxu0 0.0
    %1333 = vmatpush1.msra.mxu0 0.0
    %1334 = vmatprep.subr.mxu0 0.0
    %1335 = vmatpush1.msra.mxu0 0.0
    %1336 = vmatprep.subr.mxu0 0.0
    %1337 = vmatpush1.msra.mxu0 0.0
    %1338 = vmatprep.subr.mxu0 0.0
    %1339 = vmatpush1.msra.mxu0 0.0
    %1340 = vmatprep.subr.mxu0 0.0
    %1341 = vmatpush1.msra.mxu0 0.0
    %1342 = vmatprep.subr.mxu0 0.0
    %1343 = vmatpush1.msra.mxu0 0.0
    %1344 = vmatprep.subr.mxu0 0.0
    %1345 = vmatpush1.msra.mxu0 0.0
    %1346 = vmatprep.subr.mxu0 0.0
    %1347 = vmatpush1.msra.mxu0 0.0
    %1348 = vmatprep.subr.mxu0 0.0
    %1349 = vmatpush1.msra.mxu0 0.0
    %1350 = vmatprep.subr.mxu0 0.0
    %1351 = vmatpush1.msra.mxu0 0.0
    %1352 = vmatprep.subr.mxu0 0.0
    %1353 = vmatpush1.msra.mxu0 0.0
    %1354 = vmatprep.subr.mxu0 0.0
    %1355 = vmatpush1.msra.mxu0 0.0
    %1356 = vmatprep.subr.mxu0 0.0
    %1357 = vmatpush1.msra.mxu0 0.0
    %1358 = vmatprep.subr.mxu0 0.0
    %1359 = vmatpush1.msra.mxu0 0.0
    %1360 = vmatprep.subr.mxu0 0.0
    %1361 = vmatpush1.msra.mxu0 0.0
    %1362 = vmatprep.subr.mxu0 0.0
    %1363 = vmatpush1.msra.mxu0 0.0
    %1364 = vmatprep.subr.mxu0 0.0
    %1365 = vmatpush1.msra.mxu0 0.0
    %1366 = vmatprep.subr.mxu0 0.0
    %1367 = vmatpush1.msra.mxu0 0.0
    %1368 = vmatprep.subr.mxu0 0.0
    %1369 = vmatpush1.msra.mxu0 0.0
    %1370 = vmatprep.subr.mxu0 0.0
    %1371 = vmatpush1.msra.mxu0 0.0
    %1372 = vmatprep.subr.mxu0 0.0
    %1373 = vmatpush1.msra.mxu0 0.0
    %1374 = vmatprep.mubr.f32.mxu0 0.0
    %1375 = vmatmul.mubr.f32.gmra.mrb[0].mxu0 %v1308
    %v1376 = vpop.f32.mrb[0].mxu0
    %v1377 = vadd.f32 0.0, %v1376
    %v1378 = vpop.f32.mrb[0].mxu0
    %1379 = vdwg.mxu0
    %v1381 = vlaneseq
    %v1382 = vshrl.u32 %v1381, 7
    %v1383 = vsub.s32 0, %v1382
    %v1384 = vrot.slane %v1144, %v1383
    %v1386 = vadd.f32 %v1384, %v1377
    %v1388 = vsel %vm660, %v481, 0
    %v1391 = vsel %vm660, %v567, 0
    %1393 = vmatprep.subr.mxu0 0.0
    %1394 = vmatpush1.xpose.msra.mxu0 %v1391
    %1395 = vmatprep.subr.mxu0 0.0
    %1396 = vmatpush1.xpose.msra.mxu0 0.0
    %1397 = vmatprep.subr.mxu0 0.0
    %1398 = vmatpush1.xpose.msra.mxu0 0.0
    %1399 = vmatprep.subr.mxu0 0.0
    %1400 = vmatpush1.xpose.msra.mxu0 0.0
    %1401 = vmatprep.subr.mxu0 0.0
    %1402 = vmatpush1.xpose.msra.mxu0 0.0
    %1403 = vmatprep.subr.mxu0 0.0
    %1404 = vmatpush1.xpose.msra.mxu0 0.0
    %1405 = vmatprep.subr.mxu0 0.0
    %1406 = vmatpush1.xpose.msra.mxu0 0.0
    %1407 = vmatprep.subr.mxu0 0.0
    %1408 = vmatpush1.xpose.msra.mxu0 0.0
    %1409 = vmatprep.subr.mxu0 0.0
    %1410 = vmatpush1.xpose.msra.mxu0 0.0
    %1411 = vmatprep.subr.mxu0 0.0
    %1412 = vmatpush1.xpose.msra.mxu0 0.0
    %1413 = vmatprep.subr.mxu0 0.0
    %1414 = vmatpush1.xpose.msra.mxu0 0.0
    %1415 = vmatprep.subr.mxu0 0.0
    %1416 = vmatpush1.xpose.msra.mxu0 0.0
    %1417 = vmatprep.subr.mxu0 0.0
    %1418 = vmatpush1.xpose.msra.mxu0 0.0
    %1419 = vmatprep.subr.mxu0 0.0
    %1420 = vmatpush1.xpose.msra.mxu0 0.0
    %1421 = vmatprep.subr.mxu0 0.0
    %1422 = vmatpush1.xpose.msra.mxu0 0.0
    %1423 = vmatprep.subr.mxu0 0.0
    %1424 = vmatpush1.xpose.msra.mxu0 0.0
    %1425 = vmatprep.subr.mxu0 0.0
    %1426 = vmatpush1.xpose.msra.mxu0 0.0
    %1427 = vmatprep.subr.mxu0 0.0
    %1428 = vmatpush1.xpose.msra.mxu0 0.0
    %1429 = vmatprep.subr.mxu0 0.0
    %1430 = vmatpush1.xpose.msra.mxu0 0.0
    %1431 = vmatprep.subr.mxu0 0.0
    %1432 = vmatpush1.xpose.msra.mxu0 0.0
    %1433 = vmatprep.subr.mxu0 0.0
    %1434 = vmatpush1.xpose.msra.mxu0 0.0
    %1435 = vmatprep.subr.mxu0 0.0
    %1436 = vmatpush1.xpose.msra.mxu0 0.0
    %1437 = vmatprep.subr.mxu0 0.0
    %1438 = vmatpush1.xpose.msra.mxu0 0.0
    %1439 = vmatprep.subr.mxu0 0.0
    %1440 = vmatpush1.xpose.msra.mxu0 0.0
    %1441 = vmatprep.subr.mxu0 0.0
    %1442 = vmatpush1.xpose.msra.mxu0 0.0
    %1443 = vmatprep.subr.mxu0 0.0
    %1444 = vmatpush1.xpose.msra.mxu0 0.0
    %1445 = vmatprep.subr.mxu0 0.0
    %1446 = vmatpush1.xpose.msra.mxu0 0.0
    %1447 = vmatprep.subr.mxu0 0.0
    %1448 = vmatpush1.xpose.msra.mxu0 0.0
    %1449 = vmatprep.subr.mxu0 0.0
    %1450 = vmatpush1.xpose.msra.mxu0 0.0
    %1451 = vmatprep.subr.mxu0 0.0
    %1452 = vmatpush1.xpose.msra.mxu0 0.0
    %1453 = vmatprep.subr.mxu0 0.0
    %1454 = vmatpush1.xpose.msra.mxu0 0.0
    %1455 = vmatprep.subr.mxu0 0.0
    %1456 = vmatpush1.xpose.msra.mxu0 0.0
    %1457 = vmatprep.mubr.f32.mxu0 0.0
    %1458 = vmatmul.mubr.f32.gmra.mrb[0].mxu0 %v1388
    %v1459 = vpop.f32.mrb[0].mxu0
    %v1460 = vadd.f32 %v1143, %v1459
    %v1461 = vpop.f32.mrb[0].mxu0
    %1462 = vdwg.mxu0
    %v1463 = vsel %vm737, %v1460, -inf
    %1464 = vmax.xlane.f32.xlu0 %v1463
    %v1465 = vpop.xlane.xlu0 %1464
    %v1466 = vsub.f32 %v1460, %v1465
    %v1467 = vmul.f32 %v1466, 1.442695
    %v1468 = vpow.pop %v1467
    %v1469 = vsel %vm737, %v1468, 0.0
    %1470 = vadd.xlane.f32.xlu0 %v1469
    %v1471 = vpop.xlane.xlu0 %1470
    %v1472 = vrcp.pop %v1471
    %v1473 = vmul.f32 %v1468, %v1472
    %v1475 = vsel %vm737, %v1473, 0
    %1477 = vmatprep.subr.mxu0 0.0
    %1478 = vmatpush1.msra.mxu0 %v655
    %1479 = vmatprep.subr.mxu0 0.0
    %1480 = vmatpush1.msra.mxu0 0.0
    %1481 = vmatprep.subr.mxu0 0.0
    %1482 = vmatpush1.msra.mxu0 0.0
    %1483 = vmatprep.subr.mxu0 0.0
    %1484 = vmatpush1.msra.mxu0 0.0
    %1485 = vmatprep.subr.mxu0 0.0
    %1486 = vmatpush1.msra.mxu0 0.0
    %1487 = vmatprep.subr.mxu0 0.0
    %1488 = vmatpush1.msra.mxu0 0.0
    %1489 = vmatprep.subr.mxu0 0.0
    %1490 = vmatpush1.msra.mxu0 0.0
    %1491 = vmatprep.subr.mxu0 0.0
    %1492 = vmatpush1.msra.mxu0 0.0
    %1493 = vmatprep.subr.mxu0 0.0
    %1494 = vmatpush1.msra.mxu0 0.0
    %1495 = vmatprep.subr.mxu0 0.0
    %1496 = vmatpush1.msra.mxu0 0.0
    %1497 = vmatprep.subr.mxu0 0.0
    %1498 = vmatpush1.msra.mxu0 0.0
    %1499 = vmatprep.subr.mxu0 0.0
    %1500 = vmatpush1.msra.mxu0 0.0
    %1501 = vmatprep.subr.mxu0 0.0
    %1502 = vmatpush1.msra.mxu0 0.0
    %1503 = vmatprep.subr.mxu0 0.0
    %1504 = vmatpush1.msra.mxu0 0.0
    %1505 = vmatprep.subr.mxu0 0.0
    %1506 = vmatpush1.msra.mxu0 0.0
    %1507 = vmatprep.subr.mxu0 0.0
    %1508 = vmatpush1.msra.mxu0 0.0
    %1509 = vmatprep.subr.mxu0 0.0
    %1510 = vmatpush1.msra.mxu0 0.0
    %1511 = vmatprep.subr.mxu0 0.0
    %1512 = vmatpush1.msra.mxu0 0.0
    %1513 = vmatprep.subr.mxu0 0.0
    %1514 = vmatpush1.msra.mxu0 0.0
    %1515 = vmatprep.subr.mxu0 0.0
    %1516 = vmatpush1.msra.mxu0 0.0
    %1517 = vmatprep.subr.mxu0 0.0
    %1518 = vmatpush1.msra.mxu0 0.0
    %1519 = vmatprep.subr.mxu0 0.0
    %1520 = vmatpush1.msra.mxu0 0.0
    %1521 = vmatprep.subr.mxu0 0.0
    %1522 = vmatpush1.msra.mxu0 0.0
    %1523 = vmatprep.subr.mxu0 0.0
    %1524 = vmatpush1.msra.mxu0 0.0
    %1525 = vmatprep.subr.mxu0 0.0
    %1526 = vmatpush1.msra.mxu0 0.0
    %1527 = vmatprep.subr.mxu0 0.0
    %1528 = vmatpush1.msra.mxu0 0.0
    %1529 = vmatprep.subr.mxu0 0.0
    %1530 = vmatpush1.msra.mxu0 0.0
    %1531 = vmatprep.subr.mxu0 0.0
    %1532 = vmatpush1.msra.mxu0 0.0
    %1533 = vmatprep.subr.mxu0 0.0
    %1534 = vmatpush1.msra.mxu0 0.0
    %1535 = vmatprep.subr.mxu0 0.0
    %1536 = vmatpush1.msra.mxu0 0.0
    %1537 = vmatprep.subr.mxu0 0.0
    %1538 = vmatpush1.msra.mxu0 0.0
    %1539 = vmatprep.subr.mxu0 0.0
    %1540 = vmatpush1.msra.mxu0 0.0
    %1541 = vmatprep.mubr.f32.mxu0 0.0
    %1542 = vmatmul.mubr.f32.gmra.mrb[0].mxu0 %v1475
    %v1543 = vpop.f32.mrb[0].mxu0
    %v1544 = vadd.f32 0.0, %v1543
    %v1545 = vpop.f32.mrb[0].mxu0
    %1546 = vdwg.mxu0
    %v1547 = vld [vmem:[%s1064] sm:$0xff]
    %v1548 = vld [vmem:[%s1064 + $0x8] sm:$0xff]
    %v1550 = vsel %vm660, %v1544, 0
    %1552 = vmatprep.subr.mxu0 0.0
    %1553 = vmatpush1.msra.mxu0 %v1547
    %1554 = vmatprep.subr.mxu0 0.0
    %1555 = vmatpush1.msra.mxu0 %v1548
    %1556 = vmatprep.subr.mxu0 0.0
    %1557 = vmatpush1.msra.mxu0 0.0
    %1558 = vmatprep.subr.mxu0 0.0
    %1559 = vmatpush1.msra.mxu0 0.0
    %1560 = vmatprep.subr.mxu0 0.0
    %1561 = vmatpush1.msra.mxu0 0.0
    %1562 = vmatprep.subr.mxu0 0.0
    %1563 = vmatpush1.msra.mxu0 0.0
    %1564 = vmatprep.subr.mxu0 0.0
    %1565 = vmatpush1.msra.mxu0 0.0
    %1566 = vmatprep.subr.mxu0 0.0
    %1567 = vmatpush1.msra.mxu0 0.0
    %1568 = vmatprep.subr.mxu0 0.0
    %1569 = vmatpush1.msra.mxu0 0.0
    %1570 = vmatprep.subr.mxu0 0.0
    %1571 = vmatpush1.msra.mxu0 0.0
    %1572 = vmatprep.subr.mxu0 0.0
    %1573 = vmatpush1.msra.mxu0 0.0
    %1574 = vmatprep.subr.mxu0 0.0
    %1575 = vmatpush1.msra.mxu0 0.0
    %1576 = vmatprep.subr.mxu0 0.0
    %1577 = vmatpush1.msra.mxu0 0.0
    %1578 = vmatprep.subr.mxu0 0.0
    %1579 = vmatpush1.msra.mxu0 0.0
    %1580 = vmatprep.subr.mxu0 0.0
    %1581 = vmatpush1.msra.mxu0 0.0
    %1582 = vmatprep.subr.mxu0 0.0
    %1583 = vmatpush1.msra.mxu0 0.0
    %1584 = vmatprep.subr.mxu0 0.0
    %1585 = vmatpush1.msra.mxu0 0.0
    %1586 = vmatprep.subr.mxu0 0.0
    %1587 = vmatpush1.msra.mxu0 0.0
    %1588 = vmatprep.subr.mxu0 0.0
    %1589 = vmatpush1.msra.mxu0 0.0
    %1590 = vmatprep.subr.mxu0 0.0
    %1591 = vmatpush1.msra.mxu0 0.0
    %1592 = vmatprep.subr.mxu0 0.0
    %1593 = vmatpush1.msra.mxu0 0.0
    %1594 = vmatprep.subr.mxu0 0.0
    %1595 = vmatpush1.msra.mxu0 0.0
    %1596 = vmatprep.subr.mxu0 0.0
    %1597 = vmatpush1.msra.mxu0 0.0
    %1598 = vmatprep.subr.mxu0 0.0
    %1599 = vmatpush1.msra.mxu0 0.0
    %1600 = vmatprep.subr.mxu0 0.0
    %1601 = vmatpush1.msra.mxu0 0.0
    %1602 = vmatprep.subr.mxu0 0.0
    %1603 = vmatpush1.msra.mxu0 0.0
    %1604 = vmatprep.subr.mxu0 0.0
    %1605 = vmatpush1.msra.mxu0 0.0
    %1606 = vmatprep.subr.mxu0 0.0
    %1607 = vmatpush1.msra.mxu0 0.0
    %1608 = vmatprep.subr.mxu0 0.0
    %1609 = vmatpush1.msra.mxu0 0.0
    %1610 = vmatprep.subr.mxu0 0.0
    %1611 = vmatpush1.msra.mxu0 0.0
    %1612 = vmatprep.subr.mxu0 0.0
    %1613 = vmatpush1.msra.mxu0 0.0
    %1614 = vmatprep.subr.mxu0 0.0
    %1615 = vmatpush1.msra.mxu0 0.0
    %1616 = vmatprep.mubr.f32.mxu0 0.0
    %1617 = vmatmul.mubr.f32.gmra.mrb[0].mxu0 %v1550
    %v1618 = vpop.f32.mrb[0].mxu0
    %v1619 = vadd.f32 0.0, %v1618
    %v1620 = vpop.f32.mrb[0].mxu0
    %1621 = vdwg.mxu0
    %v1622 = vadd.f32 %v1386, %v1619
    %1623 = vst.msk [vmem:[#allocation2 + $0x8] sm:$0xff] %vm82, %v1622
    %v1624 = vld [vmem:[#allocation2] sm:$0xff]
    %v1625 = vld [vmem:[#allocation2 + $0x8] sm:$0xff]
    %v1626 = vadd.f32 %v1624, %v124
    %v1627 = vadd.f32 %v1625, %v125
    %v1628 = vld [vmem:[%s12] sm:$0x1]
    %v1629 = vld [vmem:[%s13] sm:$0x1]
    %v1630 = vsel %vm82, %v1626, 0.0
    %1631 = vadd.xlane.f32.xlu0 %v1630
    %v1632 = vpop.xlane.xlu0 %1631
    %v1633 = vsel %vm82, %v1627, 0.0
    %1634 = vadd.xlane.f32.xlu0 %v1633
    %v1635 = vpop.xlane.xlu0 %1634
    %v1636 = vmul.f32 %v1632, %v89
    %v1637 = vmul.f32 %v1635, %v89
    %v1638 = vsub.f32 %v1626, %v1636
    %v1639 = vsub.f32 %v1627, %v1637
    %v1640 = vmul.f32 %v1638, %v1638
    %v1641 = vmul.f32 %v1639, %v1639
    %v1642 = vsel %vm82, %v1640, 0.0
    %1643 = vadd.xlane.f32.xlu0 %v1642
    %v1644 = vpop.xlane.xlu0 %1643
    %v1645 = vsel %vm82, %v1641, 0.0
    %1646 = vadd.xlane.f32.xlu0 %v1645
    %v1647 = vpop.xlane.xlu0 %1646
    %v1648 = vmul.f32 %v1644, %v89
    %v1649 = vmul.f32 %v1647, %v89
    %v1650 = vadd.f32 %v1648, 1e-12
    %v1651 = vadd.f32 %v1649, 1e-12
    %v1652 = vrsqrt.pop %v1650
    %v1653 = vrsqrt.pop %v1651
    %v1654 = vmul.f32 %v1638, %v1652
    %v1655 = vmul.f32 %v1639, %v1653
    %v1657 = vlaneseq
    %v1658 = vshrl.u32 %v1657, 7
    %v1659 = vsub.s32 0, %v1658
    %v1660 = vrot.slane %v1628, %v1659
    %v1662 = vmul.f32 %v1654, %v1660
    %v1663 = vmul.f32 %v1655, %v1660
    %v1665 = vlaneseq
    %v1666 = vshrl.u32 %v1665, 7
    %v1667 = vsub.s32 0, %v1666
    %v1668 = vrot.slane %v1629, %v1667
    %v1670 = vadd.f32 %v1662, %v1668
    %v1671 = vadd.f32 %v1663, %v1668
    %v1672 = vld [vmem:[%s14] sm:$0xff]
    %v1673 = vld [vmem:[%s14 + $0x8] sm:$0xff]
    %v1674 = vld [vmem:[%s14 + $0x10] sm:$0xff]
    %v1675 = vld [vmem:[%s14 + $0x18] sm:$0xff]
    %v1676 = vld [vmem:[%s15] sm:$0x1]
    %v1678 = vlaneseq
    %v1679 = vshrl.u32 %v1678, 7
    %v1680 = vsub.s32 0, %v1679
    %v1681 = vrot.slane %v1676, %v1680
    %v1684 = vsel %vm82, %v1670, 0
    %v1687 = vsel %vm82, %v1671, 0
    %1689 = vmatprep.subr.mxu0 0.0
    %1690 = vmatpush1.msra.mxu0 %v1672
    %1691 = vmatprep.subr.mxu0 0.0
    %1692 = vmatpush1.msra.mxu0 %v1673
    %1693 = vmatprep.subr.mxu0 0.0
    %1694 = vmatpush1.msra.mxu0 %v1674
    %1695 = vmatprep.subr.mxu0 0.0
    %1696 = vmatpush1.msra.mxu0 %v1675
    %1697 = vmatprep.subr.mxu0 0.0
    %1698 = vmatpush1.msra.mxu0 0.0
    %1699 = vmatprep.subr.mxu0 0.0
    %1700 = vmatpush1.msra.mxu0 0.0
    %1701 = vmatprep.subr.mxu0 0.0
    %1702 = vmatpush1.msra.mxu0 0.0
    %1703 = vmatprep.subr.mxu0 0.0
    %1704 = vmatpush1.msra.mxu0 0.0
    %1705 = vmatprep.subr.mxu0 0.0
    %1706 = vmatpush1.msra.mxu0 0.0
    %1707 = vmatprep.subr.mxu0 0.0
    %1708 = vmatpush1.msra.mxu0 0.0
    %1709 = vmatprep.subr.mxu0 0.0
    %1710 = vmatpush1.msra.mxu0 0.0
    %1711 = vmatprep.subr.mxu0 0.0
    %1712 = vmatpush1.msra.mxu0 0.0
    %1713 = vmatprep.subr.mxu0 0.0
    %1714 = vmatpush1.msra.mxu0 0.0
    %1715 = vmatprep.subr.mxu0 0.0
    %1716 = vmatpush1.msra.mxu0 0.0
    %1717 = vmatprep.subr.mxu0 0.0
    %1718 = vmatpush1.msra.mxu0 0.0
    %1719 = vmatprep.subr.mxu0 0.0
    %1720 = vmatpush1.msra.mxu0 0.0
    %1721 = vmatprep.subr.mxu0 0.0
    %1722 = vmatpush1.msra.mxu0 0.0
    %1723 = vmatprep.subr.mxu0 0.0
    %1724 = vmatpush1.msra.mxu0 0.0
    %1725 = vmatprep.subr.mxu0 0.0
    %1726 = vmatpush1.msra.mxu0 0.0
    %1727 = vmatprep.subr.mxu0 0.0
    %1728 = vmatpush1.msra.mxu0 0.0
    %1729 = vmatprep.subr.mxu0 0.0
    %1730 = vmatpush1.msra.mxu0 0.0
    %1731 = vmatprep.subr.mxu0 0.0
    %1732 = vmatpush1.msra.mxu0 0.0
    %1733 = vmatprep.subr.mxu0 0.0
    %1734 = vmatpush1.msra.mxu0 0.0
    %1735 = vmatprep.subr.mxu0 0.0
    %1736 = vmatpush1.msra.mxu0 0.0
    %1737 = vmatprep.subr.mxu0 0.0
    %1738 = vmatpush1.msra.mxu0 0.0
    %1739 = vmatprep.subr.mxu0 0.0
    %1740 = vmatpush1.msra.mxu0 0.0
    %1741 = vmatprep.subr.mxu0 0.0
    %1742 = vmatpush1.msra.mxu0 0.0
    %1743 = vmatprep.subr.mxu0 0.0
    %1744 = vmatpush1.msra.mxu0 0.0
    %1745 = vmatprep.subr.mxu0 0.0
    %1746 = vmatpush1.msra.mxu0 0.0
    %1747 = vmatprep.subr.mxu0 0.0
    %1748 = vmatpush1.msra.mxu0 0.0
    %1749 = vmatprep.subr.mxu0 0.0
    %1750 = vmatpush1.msra.mxu0 0.0
    %1751 = vmatprep.subr.mxu0 0.0
    %1752 = vmatpush1.msra.mxu0 0.0
    %1753 = vmatprep.mubr.f32.mxu0 0.0
    %1754 = vmatmul.mubr.f32.gmra.mrb[0].mxu0 %v1684
    %v1755 = vpop.f32.mrb[0].mxu0
    %v1756 = vadd.f32 %v1681, %v1755
    %v1757 = vpop.f32.mrb[0].mxu0
    %1758 = vmatprep.mubr.f32.mxu0 0.0
    %1759 = vmatmul.mubr.f32.gmra.mrb[0].mxu0 %v1687
    %v1760 = vpop.f32.mrb[0].mxu0
    %v1761 = vadd.f32 %v1681, %v1760
    %v1762 = vpop.f32.mrb[0].mxu0
    %1763 = vdwg.mxu0
    %v1764 = vmul.f32 %v1756, 0.5
    %v1765 = vmul.f32 %v1761, 0.5
    %v1766 = vmul.f32 %v1756, 0.044715
    %v1767 = vmul.f32 %v1761, 0.044715
    %v1768 = vmul.f32 %v1766, %v1756
    %v1769 = vmul.f32 %v1767, %v1761
    %v1770 = vmul.f32 %v1768, %v1756
    %v1771 = vmul.f32 %v1769, %v1761
    %v1772 = vadd.f32 %v1756, %v1770
    %v1773 = vadd.f32 %v1761, %v1771
    %v1774 = vmul.f32 %v1772, 0.7978846
    %v1775 = vmul.f32 %v1773, 0.7978846
    %v1776 = vtanh.pop %v1774
    %v1777 = vtanh.pop %v1775
    %v1778 = vadd.f32 %v1776, 1.0
    %v1779 = vadd.f32 %v1777, 1.0
    %v1780 = vmul.f32 %v1764, %v1778
    %v1781 = vmul.f32 %v1765, %v1779
    %v1782 = vld [vmem:[%s16] sm:$0xff]
    %v1783 = vld [vmem:[%s16 + $0x8] sm:$0xff]
    %v1784 = vld [vmem:[%s16 + $0x10] sm:$0xff]
    %v1785 = vld [vmem:[%s16 + $0x18] sm:$0xff]
    %v1786 = vld [vmem:[%s16 + $0x20] sm:$0xff]
    %v1787 = vld [vmem:[%s16 + $0x28] sm:$0xff]
    %v1788 = vld [vmem:[%s16 + $0x30] sm:$0xff]
    %v1789 = vld [vmem:[%s16 + $0x38] sm:$0xff]
    %v1790 = vld [vmem:[%s17] sm:$0x1]
    %v1792 = vlaneseq
    %v1793 = vshrl.u32 %v1792, 7
    %v1794 = vsub.s32 0, %v1793
    %v1795 = vrot.slane %v1790, %v1794
    %vm1797 = vcmask 523264
    %v1799 = vsel %vm1797, %v1780, 0
    %v1802 = vsel %vm1797, %v1781, 0
    %1804 = vmatprep.subr.mxu0 0.0
    %1805 = vmatpush1.msra.mxu0 %v1782
    %1806 = vmatprep.subr.mxu0 0.0
    %1807 = vmatpush1.msra.mxu0 %v1783
    %1808 = vmatprep.subr.mxu0 0.0
    %1809 = vmatpush1.msra.mxu0 %v1784
    %1810 = vmatprep.subr.mxu0 0.0
    %1811 = vmatpush1.msra.mxu0 %v1785
    %1812 = vmatprep.subr.mxu0 0.0
    %1813 = vmatpush1.msra.mxu0 %v1786
    %1814 = vmatprep.subr.mxu0 0.0
    %1815 = vmatpush1.msra.mxu0 %v1787
    %1816 = vmatprep.subr.mxu0 0.0
    %1817 = vmatpush1.msra.mxu0 %v1788
    %1818 = vmatprep.subr.mxu0 0.0
    %1819 = vmatpush1.msra.mxu0 %v1789
    %1820 = vmatprep.subr.mxu0 0.0
    %1821 = vmatpush1.msra.mxu0 0.0
    %1822 = vmatprep.subr.mxu0 0.0
    %1823 = vmatpush1.msra.mxu0 0.0
    %1824 = vmatprep.subr.mxu0 0.0
    %1825 = vmatpush1.msra.mxu0 0.0
    %1826 = vmatprep.subr.mxu0 0.0
    %1827 = vmatpush1.msra.mxu0 0.0
    %1828 = vmatprep.subr.mxu0 0.0
    %1829 = vmatpush1.msra.mxu0 0.0
    %1830 = vmatprep.subr.mxu0 0.0
    %1831 = vmatpush1.msra.mxu0 0.0
    %1832 = vmatprep.subr.mxu0 0.0
    %1833 = vmatpush1.msra.mxu0 0.0
    %1834 = vmatprep.subr.mxu0 0.0
    %1835 = vmatpush1.msra.mxu0 0.0
    %1836 = vmatprep.subr.mxu0 0.0
    %1837 = vmatpush1.msra.mxu0 0.0
    %1838 = vmatprep.subr.mxu0 0.0
    %1839 = vmatpush1.msra.mxu0 0.0
    %1840 = vmatprep.subr.mxu0 0.0
    %1841 = vmatpush1.msra.mxu0 0.0
    %1842 = vmatprep.subr.mxu0 0.0
    %1843 = vmatpush1.msra.mxu0 0.0
    %1844 = vmatprep.subr.mxu0 0.0
    %1845 = vmatpush1.msra.mxu0 0.0
    %1846 = vmatprep.subr.mxu0 0.0
    %1847 = vmatpush1.msra.mxu0 0.0
    %1848 = vmatprep.subr.mxu0 0.0
    %1849 = vmatpush1.msra.mxu0 0.0
    %1850 = vmatprep.subr.mxu0 0.0
    %1851 = vmatpush1.msra.mxu0 0.0
    %1852 = vmatprep.subr.mxu0 0.0
    %1853 = vmatpush1.msra.mxu0 0.0
    %1854 = vmatprep.subr.mxu0 0.0
    %1855 = vmatpush1.msra.mxu0 0.0
    %1856 = vmatprep.subr.mxu0 0.0
    %1857 = vmatpush1.msra.mxu0 0.0
    %1858 = vmatprep.subr.mxu0 0.0
    %1859 = vmatpush1.msra.mxu0 0.0
    %1860 = vmatprep.subr.mxu0 0.0
    %1861 = vmatpush1.msra.mxu0 0.0
    %1862 = vmatprep.subr.mxu0 0.0
    %1863 = vmatpush1.msra.mxu0 0.0
    %1864 = vmatprep.subr.mxu0 0.0
    %1865 = vmatpush1.msra.mxu0 0.0
    %1866 = vmatprep.subr.mxu0 0.0
    %1867 = vmatpush1.msra.mxu0 0.0
    %1868 = vmatprep.mubr.f32.mxu0 0.0
    %1869 = vmatmul.mubr.f32.gmra.mrb[0].mxu0 %v1799
    %v1870 = vpop.f32.mrb[0].mxu0
    %v1871 = vadd.f32 %v1795, %v1870
    %v1872 = vpop.f32.mrb[0].mxu0
    %1873 = vmatprep.mubr.f32.mxu0 0.0
    %1874 = vmatmul.mubr.f32.gmra.mrb[0].mxu0 %v1802
    %v1875 = vpop.f32.mrb[0].mxu0
    %v1876 = vadd.f32 %v1795, %v1875
    %v1877 = vpop.f32.mrb[0].mxu0
    %1878 = vdwg.mxu0
    %v1879 = vadd.f32 %v1871, %v1670
    %v1880 = vadd.f32 %v1876, %v1671
    %v1881 = vld [vmem:[%s18] sm:$0x1]
    %v1882 = vld [vmem:[%s19] sm:$0x1]
    %v1883 = vsel %vm82, %v1879, 0.0
    %1884 = vadd.xlane.f32.xlu0 %v1883
    %v1885 = vpop.xlane.xlu0 %1884
    %v1886 = vsel %vm82, %v1880, 0.0
    %1887 = vadd.xlane.f32.xlu0 %v1886
    %v1888 = vpop.xlane.xlu0 %1887
    %v1889 = vmul.f32 %v1885, %v89
    %v1890 = vmul.f32 %v1888, %v89
    %v1891 = vsub.f32 %v1879, %v1889
    %v1892 = vsub.f32 %v1880, %v1890
    %v1893 = vmul.f32 %v1891, %v1891
    %v1894 = vmul.f32 %v1892, %v1892
    %v1895 = vsel %vm82, %v1893, 0.0
    %1896 = vadd.xlane.f32.xlu0 %v1895
    %v1897 = vpop.xlane.xlu0 %1896
    %v1898 = vsel %vm82, %v1894, 0.0
    %1899 = vadd.xlane.f32.xlu0 %v1898
    %v1900 = vpop.xlane.xlu0 %1899
    %v1901 = vmul.f32 %v1897, %v89
    %v1902 = vmul.f32 %v1900, %v89
    %v1903 = vadd.f32 %v1901, 1e-12
    %v1904 = vadd.f32 %v1902, 1e-12
    %v1905 = vrsqrt.pop %v1903
    %v1906 = vrsqrt.pop %v1904
    %v1907 = vmul.f32 %v1891, %v1905
    %v1908 = vmul.f32 %v1892, %v1906
    %v1910 = vlaneseq
    %v1911 = vshrl.u32 %v1910, 7
    %v1912 = vsub.s32 0, %v1911
    %v1913 = vrot.slane %v1881, %v1912
    %v1915 = vmul.f32 %v1907, %v1913
    %v1916 = vmul.f32 %v1908, %v1913
    %v1918 = vlaneseq
    %v1919 = vshrl.u32 %v1918, 7
    %v1920 = vsub.s32 0, %v1919
    %v1921 = vrot.slane %v1882, %v1920
    %v1923 = vadd.f32 %v1915, %v1921
    %v1924 = vadd.f32 %v1916, %v1921
    %s1925 = scalar_lea.vmem %s4, 64
    %v1926 = vld [vmem:[%s1925] sm:$0xff]
    %v1927 = vld [vmem:[%s1925 + $0x8] sm:$0xff]
    %v1928 = vld [vmem:[%s1925 + $0x10] sm:$0xff]
    %v1929 = vld [vmem:[%s1925 + $0x18] sm:$0xff]
    %s1930 = scalar_lea.vmem %s5, 2
    %v1931 = vld [vmem:[%s1930] sm:$0x1]
    %v1933 = vlaneseq
    %v1934 = vshrl.u32 %v1933, 7
    %v1935 = vsub.s32 0, %v1934
    %v1936 = vrot.slane %v1931, %v1935
    %v1939 = vsel %vm82, %v1923, 0
    %v1942 = vsel %vm82, %v1924, 0
    %1944 = vmatprep.subr.mxu0 0.0
    %1945 = vmatpush1.msra.mxu0 %v1926
    %1946 = vmatprep.subr.mxu0 0.0
    %1947 = vmatpush1.msra.mxu0 %v1927
    %1948 = vmatprep.subr.mxu0 0.0
    %1949 = vmatpush1.msra.mxu0 %v1928
    %1950 = vmatprep.subr.mxu0 0.0
    %1951 = vmatpush1.msra.mxu0 %v1929
    %1952 = vmatprep.subr.mxu0 0.0
    %1953 = vmatpush1.msra.mxu0 0.0
    %1954 = vmatprep.subr.mxu0 0.0
    %1955 = vmatpush1.msra.mxu0 0.0
    %1956 = vmatprep.subr.mxu0 0.0
    %1957 = vmatpush1.msra.mxu0 0.0
    %1958 = vmatprep.subr.mxu0 0.0
    %1959 = vmatpush1.msra.mxu0 0.0
    %1960 = vmatprep.subr.mxu0 0.0
    %1961 = vmatpush1.msra.mxu0 0.0
    %1962 = vmatprep.subr.mxu0 0.0
    %1963 = vmatpush1.msra.mxu0 0.0
    %1964 = vmatprep.subr.mxu0 0.0
    %1965 = vmatpush1.msra.mxu0 0.0
    %1966 = vmatprep.subr.mxu0 0.0
    %1967 = vmatpush1.msra.mxu0 0.0
    %1968 = vmatprep.subr.mxu0 0.0
    %1969 = vmatpush1.msra.mxu0 0.0
    %1970 = vmatprep.subr.mxu0 0.0
    %1971 = vmatpush1.msra.mxu0 0.0
    %1972 = vmatprep.subr.mxu0 0.0
    %1973 = vmatpush1.msra.mxu0 0.0
    %1974 = vmatprep.subr.mxu0 0.0
    %1975 = vmatpush1.msra.mxu0 0.0
    %1976 = vmatprep.subr.mxu0 0.0
    %1977 = vmatpush1.msra.mxu0 0.0
    %1978 = vmatprep.subr.mxu0 0.0
    %1979 = vmatpush1.msra.mxu0 0.0
    %1980 = vmatprep.subr.mxu0 0.0
    %1981 = vmatpush1.msra.mxu0 0.0
    %1982 = vmatprep.subr.mxu0 0.0
    %1983 = vmatpush1.msra.mxu0 0.0
    %1984 = vmatprep.subr.mxu0 0.0
    %1985 = vmatpush1.msra.mxu0 0.0
    %1986 = vmatprep.subr.mxu0 0.0
    %1987 = vmatpush1.msra.mxu0 0.0
    %1988 = vmatprep.subr.mxu0 0.0
    %1989 = vmatpush1.msra.mxu0 0.0
    %1990 = vmatprep.subr.mxu0 0.0
    %1991 = vmatpush1.msra.mxu0 0.0
    %1992 = vmatprep.subr.mxu0 0.0
    %1993 = vmatpush1.msra.mxu0 0.0
    %1994 = vmatprep.subr.mxu0 0.0
    %1995 = vmatpush1.msra.mxu0 0.0
    %1996 = vmatprep.subr.mxu0 0.0
    %1997 = vmatpush1.msra.mxu0 0.0
    %1998 = vmatprep.subr.mxu0 0.0
    %1999 = vmatpush1.msra.mxu0 0.0
    %2000 = vmatprep.subr.mxu0 0.0
    %2001 = vmatpush1.msra.mxu0 0.0
    %2002 = vmatprep.subr.mxu0 0.0
    %2003 = vmatpush1.msra.mxu0 0.0
    %2004 = vmatprep.subr.mxu0 0.0
    %2005 = vmatpush1.msra.mxu0 0.0
    %2006 = vmatprep.subr.mxu0 0.0
    %2007 = vmatpush1.msra.mxu0 0.0
    %2008 = vmatprep.mubr.f32.mxu0 0.0
    %2009 = vmatmul.mubr.f32.gmra.mrb[0].mxu0 %v1939
    %v2010 = vpop.f32.mrb[0].mxu0
    %v2011 = vadd.f32 %v1936, %v2010
    %v2012 = vpop.f32.mrb[0].mxu0
    %2013 = vmatprep.mubr.f32.mxu0 0.0
    %2014 = vmatmul.mubr.f32.gmra.mrb[0].mxu0 %v1942
    %v2015 = vpop.f32.mrb[0].mxu0
    %v2016 = vadd.f32 %v1936, %v2015
    %v2017 = vpop.f32.mrb[0].mxu0
    %2018 = vdwg.mxu0
    %v2019 = vmul.f32 %v2011, 0.25
    %v2020 = vmul.f32 %v2016, 0.25
    %s2021 = scalar_lea.vmem %s6, 64
    %v2022 = vld [vmem:[%s2021] sm:$0xff]
    %v2023 = vld [vmem:[%s2021 + $0x8] sm:$0xff]
    %v2024 = vld [vmem:[%s2021 + $0x10] sm:$0xff]
    %v2025 = vld [vmem:[%s2021 + $0x18] sm:$0xff]
    %s2026 = scalar_lea.vmem %s7, 2
    %v2027 = vld [vmem:[%s2026] sm:$0x1]
    %v2029 = vlaneseq
    %v2030 = vshrl.u32 %v2029, 7
    %v2031 = vsub.s32 0, %v2030
    %v2032 = vrot.slane %v2027, %v2031
    %2034 = vmatprep.subr.mxu0 0.0
    %2035 = vmatpush1.msra.mxu0 %v2022
    %2036 = vmatprep.subr.mxu0 0.0
    %2037 = vmatpush1.msra.mxu0 %v2023
    %2038 = vmatprep.subr.mxu0 0.0
    %2039 = vmatpush1.msra.mxu0 %v2024
    %2040 = vmatprep.subr.mxu0 0.0
    %2041 = vmatpush1.msra.mxu0 %v2025
    %2042 = vmatprep.subr.mxu0 0.0
    %2043 = vmatpush1.msra.mxu0 0.0
    %2044 = vmatprep.subr.mxu0 0.0
    %2045 = vmatpush1.msra.mxu0 0.0
    %2046 = vmatprep.subr.mxu0 0.0
    %2047 = vmatpush1.msra.mxu0 0.0
    %2048 = vmatprep.subr.mxu0 0.0
    %2049 = vmatpush1.msra.mxu0 0.0
    %2050 = vmatprep.subr.mxu0 0.0
    %2051 = vmatpush1.msra.mxu0 0.0
    %2052 = vmatprep.subr.mxu0 0.0
    %2053 = vmatpush1.msra.mxu0 0.0
    %2054 = vmatprep.subr.mxu0 0.0
    %2055 = vmatpush1.msra.mxu0 0.0
    %2056 = vmatprep.subr.mxu0 0.0
    %2057 = vmatpush1.msra.mxu0 0.0
    %2058 = vmatprep.subr.mxu0 0.0
    %2059 = vmatpush1.msra.mxu0 0.0
    %2060 = vmatprep.subr.mxu0 0.0
    %2061 = vmatpush1.msra.mxu0 0.0
    %2062 = vmatprep.subr.mxu0 0.0
    %2063 = vmatpush1.msra.mxu0 0.0
    %2064 = vmatprep.subr.mxu0 0.0
    %2065 = vmatpush1.msra.mxu0 0.0
    %2066 = vmatprep.subr.mxu0 0.0
    %2067 = vmatpush1.msra.mxu0 0.0
    %2068 = vmatprep.subr.mxu0 0.0
    %2069 = vmatpush1.msra.mxu0 0.0
    %2070 = vmatprep.subr.mxu0 0.0
    %2071 = vmatpush1.msra.mxu0 0.0
    %2072 = vmatprep.subr.mxu0 0.0
    %2073 = vmatpush1.msra.mxu0 0.0
    %2074 = vmatprep.subr.mxu0 0.0
    %2075 = vmatpush1.msra.mxu0 0.0
    %2076 = vmatprep.subr.mxu0 0.0
    %2077 = vmatpush1.msra.mxu0 0.0
    %2078 = vmatprep.subr.mxu0 0.0
    %2079 = vmatpush1.msra.mxu0 0.0
    %2080 = vmatprep.subr.mxu0 0.0
    %2081 = vmatpush1.msra.mxu0 0.0
    %2082 = vmatprep.subr.mxu0 0.0
    %2083 = vmatpush1.msra.mxu0 0.0
    %2084 = vmatprep.subr.mxu0 0.0
    %2085 = vmatpush1.msra.mxu0 0.0
    %2086 = vmatprep.subr.mxu0 0.0
    %2087 = vmatpush1.msra.mxu0 0.0
    %2088 = vmatprep.subr.mxu0 0.0
    %2089 = vmatpush1.msra.mxu0 0.0
    %2090 = vmatprep.subr.mxu0 0.0
    %2091 = vmatpush1.msra.mxu0 0.0
    %2092 = vmatprep.subr.mxu0 0.0
    %2093 = vmatpush1.msra.mxu0 0.0
    %2094 = vmatprep.subr.mxu0 0.0
    %2095 = vmatpush1.msra.mxu0 0.0
    %2096 = vmatprep.subr.mxu0 0.0
    %2097 = vmatpush1.msra.mxu0 0.0
    %2098 = vmatprep.mubr.f32.mxu0 0.0
    %2099 = vmatmul.mubr.f32.gmra.mrb[0].mxu0 %v1939
    %v2100 = vpop.f32.mrb[0].mxu0
    %v2101 = vadd.f32 %v2032, %v2100
    %v2102 = vpop.f32.mrb[0].mxu0
    %2103 = vmatprep.mubr.f32.mxu0 0.0
    %2104 = vmatmul.mubr.f32.gmra.mrb[0].mxu0 %v1942
    %v2105 = vpop.f32.mrb[0].mxu0
    %v2106 = vadd.f32 %v2032, %v2105
    %v2107 = vpop.f32.mrb[0].mxu0
    %2108 = vdwg.mxu0
    %s2109 = scalar_lea.vmem %s8, 64
    %v2110 = vld [vmem:[%s2109] sm:$0xff]
    %v2111 = vld [vmem:[%s2109 + $0x8] sm:$0xff]
    %v2112 = vld [vmem:[%s2109 + $0x10] sm:$0xff]
    %v2113 = vld [vmem:[%s2109 + $0x18] sm:$0xff]
    %s2114 = scalar_lea.vmem %s9, 2
    %v2115 = vld [vmem:[%s2114] sm:$0x1]
    %v2117 = vlaneseq
    %v2118 = vshrl.u32 %v2117, 7
    %v2119 = vsub.s32 0, %v2118
    %v2120 = vrot.slane %v2115, %v2119
    %2122 = vmatprep.subr.mxu0 0.0
    %2123 = vmatpush1.msra.mxu0 %v2110
    %2124 = vmatprep.subr.mxu0 0.0
    %2125 = vmatpush1.msra.mxu0 %v2111
    %2126 = vmatprep.subr.mxu0 0.0
    %2127 = vmatpush1.msra.mxu0 %v2112
    %2128 = vmatprep.subr.mxu0 0.0
    %2129 = vmatpush1.msra.mxu0 %v2113
    %2130 = vmatprep.subr.mxu0 0.0
    %2131 = vmatpush1.msra.mxu0 0.0
    %2132 = vmatprep.subr.mxu0 0.0
    %2133 = vmatpush1.msra.mxu0 0.0
    %2134 = vmatprep.subr.mxu0 0.0
    %2135 = vmatpush1.msra.mxu0 0.0
    %2136 = vmatprep.subr.mxu0 0.0
    %2137 = vmatpush1.msra.mxu0 0.0
    %2138 = vmatprep.subr.mxu0 0.0
    %2139 = vmatpush1.msra.mxu0 0.0
    %2140 = vmatprep.subr.mxu0 0.0
    %2141 = vmatpush1.msra.mxu0 0.0
    %2142 = vmatprep.subr.mxu0 0.0
    %2143 = vmatpush1.msra.mxu0 0.0
    %2144 = vmatprep.subr.mxu0 0.0
    %2145 = vmatpush1.msra.mxu0 0.0
    %2146 = vmatprep.subr.mxu0 0.0
    %2147 = vmatpush1.msra.mxu0 0.0
    %2148 = vmatprep.subr.mxu0 0.0
    %2149 = vmatpush1.msra.mxu0 0.0
    %2150 = vmatprep.subr.mxu0 0.0
    %2151 = vmatpush1.msra.mxu0 0.0
    %2152 = vmatprep.subr.mxu0 0.0
    %2153 = vmatpush1.msra.mxu0 0.0
    %2154 = vmatprep.subr.mxu0 0.0
    %2155 = vmatpush1.msra.mxu0 0.0
    %2156 = vmatprep.subr.mxu0 0.0
    %2157 = vmatpush1.msra.mxu0 0.0
    %2158 = vmatprep.subr.mxu0 0.0
    %2159 = vmatpush1.msra.mxu0 0.0
    %2160 = vmatprep.subr.mxu0 0.0
    %2161 = vmatpush1.msra.mxu0 0.0
    %2162 = vmatprep.subr.mxu0 0.0
    %2163 = vmatpush1.msra.mxu0 0.0
    %2164 = vmatprep.subr.mxu0 0.0
    %2165 = vmatpush1.msra.mxu0 0.0
    %2166 = vmatprep.subr.mxu0 0.0
    %2167 = vmatpush1.msra.mxu0 0.0
    %2168 = vmatprep.subr.mxu0 0.0
    %2169 = vmatpush1.msra.mxu0 0.0
    %2170 = vmatprep.subr.mxu0 0.0
    %2171 = vmatpush1.msra.mxu0 0.0
    %2172 = vmatprep.subr.mxu0 0.0
    %2173 = vmatpush1.msra.mxu0 0.0
    %2174 = vmatprep.subr.mxu0 0.0
    %2175 = vmatpush1.msra.mxu0 0.0
    %2176 = vmatprep.subr.mxu0 0.0
    %2177 = vmatpush1.msra.mxu0 0.0
    %2178 = vmatprep.subr.mxu0 0.0
    %2179 = vmatpush1.msra.mxu0 0.0
    %2180 = vmatprep.subr.mxu0 0.0
    %2181 = vmatpush1.msra.mxu0 0.0
    %2182 = vmatprep.subr.mxu0 0.0
    %2183 = vmatpush1.msra.mxu0 0.0
    %2184 = vmatprep.subr.mxu0 0.0
    %2185 = vmatpush1.msra.mxu0 0.0
    %2186 = vmatprep.mubr.f32.mxu0 0.0
    %2187 = vmatmul.mubr.f32.gmra.mrb[0].mxu0 %v1939
    %v2188 = vpop.f32.mrb[0].mxu0
    %v2189 = vadd.f32 %v2120, %v2188
    %v2190 = vpop.f32.mrb[0].mxu0
    %2191 = vmatprep.mubr.f32.mxu0 0.0
    %2192 = vmatmul.mubr.f32.gmra.mrb[0].mxu0 %v1942
    %v2193 = vpop.f32.mrb[0].mxu0
    %v2194 = vadd.f32 %v2120, %v2193
    %v2195 = vpop.f32.mrb[0].mxu0
    %2196 = vdwg.mxu0
    %s2197 = scalar_lea.vmem %s4, 96
    %v2198 = vld [vmem:[%s2197] sm:$0xff]
    %v2199 = vld [vmem:[%s2197 + $0x8] sm:$0xff]
    %v2200 = vld [vmem:[%s2197 + $0x10] sm:$0xff]
    %v2201 = vld [vmem:[%s2197 + $0x18] sm:$0xff]
    %s2202 = scalar_lea.vmem %s5, 3
    %v2203 = vld [vmem:[%s2202] sm:$0x1]
    %v2205 = vlaneseq
    %v2206 = vshrl.u32 %v2205, 7
    %v2207 = vsub.s32 0, %v2206
    %v2208 = vrot.slane %v2203, %v2207
    %2210 = vmatprep.subr.mxu0 0.0
    %2211 = vmatpush1.msra.mxu0 %v2198
    %2212 = vmatprep.subr.mxu0 0.0
    %2213 = vmatpush1.msra.mxu0 %v2199
    %2214 = vmatprep.subr.mxu0 0.0
    %2215 = vmatpush1.msra.mxu0 %v2200
    %2216 = vmatprep.subr.mxu0 0.0
    %2217 = vmatpush1.msra.mxu0 %v2201
    %2218 = vmatprep.subr.mxu0 0.0
    %2219 = vmatpush1.msra.mxu0 0.0
    %2220 = vmatprep.subr.mxu0 0.0
    %2221 = vmatpush1.msra.mxu0 0.0
    %2222 = vmatprep.subr.mxu0 0.0
    %2223 = vmatpush1.msra.mxu0 0.0
    %2224 = vmatprep.subr.mxu0 0.0
    %2225 = vmatpush1.msra.mxu0 0.0
    %2226 = vmatprep.subr.mxu0 0.0
    %2227 = vmatpush1.msra.mxu0 0.0
    %2228 = vmatprep.subr.mxu0 0.0
    %2229 = vmatpush1.msra.mxu0 0.0
    %2230 = vmatprep.subr.mxu0 0.0
    %2231 = vmatpush1.msra.mxu0 0.0
    %2232 = vmatprep.subr.mxu0 0.0
    %2233 = vmatpush1.msra.mxu0 0.0
    %2234 = vmatprep.subr.mxu0 0.0
    %2235 = vmatpush1.msra.mxu0 0.0
    %2236 = vmatprep.subr.mxu0 0.0
    %2237 = vmatpush1.msra.mxu0 0.0
    %2238 = vmatprep.subr.mxu0 0.0
    %2239 = vmatpush1.msra.mxu0 0.0
    %2240 = vmatprep.subr.mxu0 0.0
    %2241 = vmatpush1.msra.mxu0 0.0
    %2242 = vmatprep.subr.mxu0 0.0
    %2243 = vmatpush1.msra.mxu0 0.0
    %2244 = vmatprep.subr.mxu0 0.0
    %2245 = vmatpush1.msra.mxu0 0.0
    %2246 = vmatprep.subr.mxu0 0.0
    %2247 = vmatpush1.msra.mxu0 0.0
    %2248 = vmatprep.subr.mxu0 0.0
    %2249 = vmatpush1.msra.mxu0 0.0
    %2250 = vmatprep.subr.mxu0 0.0
    %2251 = vmatpush1.msra.mxu0 0.0
    %2252 = vmatprep.subr.mxu0 0.0
    %2253 = vmatpush1.msra.mxu0 0.0
    %2254 = vmatprep.subr.mxu0 0.0
    %2255 = vmatpush1.msra.mxu0 0.0
    %2256 = vmatprep.subr.mxu0 0.0
    %2257 = vmatpush1.msra.mxu0 0.0
    %2258 = vmatprep.subr.mxu0 0.0
    %2259 = vmatpush1.msra.mxu0 0.0
    %2260 = vmatprep.subr.mxu0 0.0
    %2261 = vmatpush1.msra.mxu0 0.0
    %2262 = vmatprep.subr.mxu0 0.0
    %2263 = vmatpush1.msra.mxu0 0.0
    %2264 = vmatprep.subr.mxu0 0.0
    %2265 = vmatpush1.msra.mxu0 0.0
    %2266 = vmatprep.subr.mxu0 0.0
    %2267 = vmatpush1.msra.mxu0 0.0
    %2268 = vmatprep.subr.mxu0 0.0
    %2269 = vmatpush1.msra.mxu0 0.0
    %2270 = vmatprep.subr.mxu0 0.0
    %2271 = vmatpush1.msra.mxu0 0.0
    %2272 = vmatprep.subr.mxu0 0.0
    %2273 = vmatpush1.msra.mxu0 0.0
    %2274 = vmatprep.mubr.f32.mxu0 0.0
    %2275 = vmatmul.mubr.f32.gmra.mrb[0].mxu0 %v1939
    %v2276 = vpop.f32.mrb[0].mxu0
    %v2277 = vadd.f32 %v2208, %v2276
    %v2278 = vpop.f32.mrb[0].mxu0
    %2279 = vmatprep.mubr.f32.mxu0 0.0
    %2280 = vmatmul.mubr.f32.gmra.mrb[0].mxu0 %v1942
    %v2281 = vpop.f32.mrb[0].mxu0
    %v2282 = vadd.f32 %v2208, %v2281
    %v2283 = vpop.f32.mrb[0].mxu0
    %2284 = vdwg.mxu0
    %v2285 = vmul.f32 %v2277, 0.25
    %v2286 = vmul.f32 %v2282, 0.25
    %s2287 = scalar_lea.vmem %s6, 96
    %v2288 = vld [vmem:[%s2287] sm:$0xff]
    %v2289 = vld [vmem:[%s2287 + $0x8] sm:$0xff]
    %v2290 = vld [vmem:[%s2287 + $0x10] sm:$0xff]
    %v2291 = vld [vmem:[%s2287 + $0x18] sm:$0xff]
    %s2292 = scalar_lea.vmem %s7, 3
    %v2293 = vld [vmem:[%s2292] sm:$0x1]
    %v2295 = vlaneseq
    %v2296 = vshrl.u32 %v2295, 7
    %v2297 = vsub.s32 0, %v2296
    %v2298 = vrot.slane %v2293, %v2297
    %2300 = vmatprep.subr.mxu0 0.0
    %2301 = vmatpush1.msra.mxu0 %v2288
    %2302 = vmatprep.subr.mxu0 0.0
    %2303 = vmatpush1.msra.mxu0 %v2289
    %2304 = vmatprep.subr.mxu0 0.0
    %2305 = vmatpush1.msra.mxu0 %v2290
    %2306 = vmatprep.subr.mxu0 0.0
    %2307 = vmatpush1.msra.mxu0 %v2291
    %2308 = vmatprep.subr.mxu0 0.0
    %2309 = vmatpush1.msra.mxu0 0.0
    %2310 = vmatprep.subr.mxu0 0.0
    %2311 = vmatpush1.msra.mxu0 0.0
    %2312 = vmatprep.subr.mxu0 0.0
    %2313 = vmatpush1.msra.mxu0 0.0
    %2314 = vmatprep.subr.mxu0 0.0
    %2315 = vmatpush1.msra.mxu0 0.0
    %2316 = vmatprep.subr.mxu0 0.0
    %2317 = vmatpush1.msra.mxu0 0.0
    %2318 = vmatprep.subr.mxu0 0.0
    %2319 = vmatpush1.msra.mxu0 0.0
    %2320 = vmatprep.subr.mxu0 0.0
    %2321 = vmatpush1.msra.mxu0 0.0
    %2322 = vmatprep.subr.mxu0 0.0
    %2323 = vmatpush1.msra.mxu0 0.0
    %2324 = vmatprep.subr.mxu0 0.0
    %2325 = vmatpush1.msra.mxu0 0.0
    %2326 = vmatprep.subr.mxu0 0.0
    %2327 = vmatpush1.msra.mxu0 0.0
    %2328 = vmatprep.subr.mxu0 0.0
    %2329 = vmatpush1.msra.mxu0 0.0
    %2330 = vmatprep.subr.mxu0 0.0
    %2331 = vmatpush1.msra.mxu0 0.0
    %2332 = vmatprep.subr.mxu0 0.0
    %2333 = vmatpush1.msra.mxu0 0.0
    %2334 = vmatprep.subr.mxu0 0.0
    %2335 = vmatpush1.msra.mxu0 0.0
    %2336 = vmatprep.subr.mxu0 0.0
    %2337 = vmatpush1.msra.mxu0 0.0
    %2338 = vmatprep.subr.mxu0 0.0
    %2339 = vmatpush1.msra.mxu0 0.0
    %2340 = vmatprep.subr.mxu0 0.0
    %2341 = vmatpush1.msra.mxu0 0.0
    %2342 = vmatprep.subr.mxu0 0.0
    %2343 = vmatpush1.msra.mxu0 0.0
    %2344 = vmatprep.subr.mxu0 0.0
    %2345 = vmatpush1.msra.mxu0 0.0
    %2346 = vmatprep.subr.mxu0 0.0
    %2347 = vmatpush1.msra.mxu0 0.0
    %2348 = vmatprep.subr.mxu0 0.0
    %2349 = vmatpush1.msra.mxu0 0.0
    %2350 = vmatprep.subr.mxu0 0.0
    %2351 = vmatpush1.msra.mxu0 0.0
    %2352 = vmatprep.subr.mxu0 0.0
    %2353 = vmatpush1.msra.mxu0 0.0
    %2354 = vmatprep.subr.mxu0 0.0
    %2355 = vmatpush1.msra.mxu0 0.0
    %2356 = vmatprep.subr.mxu0 0.0
    %2357 = vmatpush1.msra.mxu0 0.0
    %2358 = vmatprep.subr.mxu0 0.0
    %2359 = vmatpush1.msra.mxu0 0.0
    %2360 = vmatprep.subr.mxu0 0.0
    %2361 = vmatpush1.msra.mxu0 0.0
    %2362 = vmatprep.subr.mxu0 0.0
    %2363 = vmatpush1.msra.mxu0 0.0
    %2364 = vmatprep.mubr.f32.mxu0 0.0
    %2365 = vmatmul.mubr.f32.gmra.mrb[0].mxu0 %v1939
    %v2366 = vpop.f32.mrb[0].mxu0
    %v2367 = vadd.f32 %v2298, %v2366
    %v2368 = vpop.f32.mrb[0].mxu0
    %2369 = vmatprep.mubr.f32.mxu0 0.0
    %2370 = vmatmul.mubr.f32.gmra.mrb[0].mxu0 %v1942
    %v2371 = vpop.f32.mrb[0].mxu0
    %v2372 = vadd.f32 %v2298, %v2371
    %v2373 = vpop.f32.mrb[0].mxu0
    %2374 = vdwg.mxu0
    %s2375 = scalar_lea.vmem %s8, 96
    %v2376 = vld [vmem:[%s2375] sm:$0xff]
    %v2377 = vld [vmem:[%s2375 + $0x8] sm:$0xff]
    %v2378 = vld [vmem:[%s2375 + $0x10] sm:$0xff]
    %v2379 = vld [vmem:[%s2375 + $0x18] sm:$0xff]
    %s2380 = scalar_lea.vmem %s9, 3
    %v2381 = vld [vmem:[%s2380] sm:$0x1]
    %v2383 = vlaneseq
    %v2384 = vshrl.u32 %v2383, 7
    %v2385 = vsub.s32 0, %v2384
    %v2386 = vrot.slane %v2381, %v2385
    %2388 = vmatprep.subr.mxu0 0.0
    %2389 = vmatpush1.msra.mxu0 %v2376
    %2390 = vmatprep.subr.mxu0 0.0
    %2391 = vmatpush1.msra.mxu0 %v2377
    %2392 = vmatprep.subr.mxu0 0.0
    %2393 = vmatpush1.msra.mxu0 %v2378
    %2394 = vmatprep.subr.mxu0 0.0
    %2395 = vmatpush1.msra.mxu0 %v2379
    %2396 = vmatprep.subr.mxu0 0.0
    %2397 = vmatpush1.msra.mxu0 0.0
    %2398 = vmatprep.subr.mxu0 0.0
    %2399 = vmatpush1.msra.mxu0 0.0
    %2400 = vmatprep.subr.mxu0 0.0
    %2401 = vmatpush1.msra.mxu0 0.0
    %2402 = vmatprep.subr.mxu0 0.0
    %2403 = vmatpush1.msra.mxu0 0.0
    %2404 = vmatprep.subr.mxu0 0.0
    %2405 = vmatpush1.msra.mxu0 0.0
    %2406 = vmatprep.subr.mxu0 0.0
    %2407 = vmatpush1.msra.mxu0 0.0
    %2408 = vmatprep.subr.mxu0 0.0
    %2409 = vmatpush1.msra.mxu0 0.0
    %2410 = vmatprep.subr.mxu0 0.0
    %2411 = vmatpush1.msra.mxu0 0.0
    %2412 = vmatprep.subr.mxu0 0.0
    %2413 = vmatpush1.msra.mxu0 0.0
    %2414 = vmatprep.subr.mxu0 0.0
    %2415 = vmatpush1.msra.mxu0 0.0
    %2416 = vmatprep.subr.mxu0 0.0
    %2417 = vmatpush1.msra.mxu0 0.0
    %2418 = vmatprep.subr.mxu0 0.0
    %2419 = vmatpush1.msra.mxu0 0.0
    %2420 = vmatprep.subr.mxu0 0.0
    %2421 = vmatpush1.msra.mxu0 0.0
    %2422 = vmatprep.subr.mxu0 0.0
    %2423 = vmatpush1.msra.mxu0 0.0
    %2424 = vmatprep.subr.mxu0 0.0
    %2425 = vmatpush1.msra.mxu0 0.0
    %2426 = vmatprep.subr.mxu0 0.0
    %2427 = vmatpush1.msra.mxu0 0.0
    %2428 = vmatprep.subr.mxu0 0.0
    %2429 = vmatpush1.msra.mxu0 0.0
    %2430 = vmatprep.subr.mxu0 0.0
    %2431 = vmatpush1.msra.mxu0 0.0
    %2432 = vmatprep.subr.mxu0 0.0
    %2433 = vmatpush1.msra.mxu0 0.0
    %2434 = vmatprep.subr.mxu0 0.0
    %2435 = vmatpush1.msra.mxu0 0.0
    %2436 = vmatprep.subr.mxu0 0.0
    %2437 = vmatpush1.msra.mxu0 0.0
    %2438 = vmatprep.subr.mxu0 0.0
    %2439 = vmatpush1.msra.mxu0 0.0
    %2440 = vmatprep.subr.mxu0 0.0
    %2441 = vmatpush1.msra.mxu0 0.0
    %2442 = vmatprep.subr.mxu0 0.0
    %2443 = vmatpush1.msra.mxu0 0.0
    %2444 = vmatprep.subr.mxu0 0.0
    %2445 = vmatpush1.msra.mxu0 0.0
    %2446 = vmatprep.subr.mxu0 0.0
    %2447 = vmatpush1.msra.mxu0 0.0
    %2448 = vmatprep.subr.mxu0 0.0
    %2449 = vmatpush1.msra.mxu0 0.0
    %2450 = vmatprep.subr.mxu0 0.0
    %2451 = vmatpush1.msra.mxu0 0.0
    %2452 = vmatprep.mubr.f32.mxu0 0.0
    %2453 = vmatmul.mubr.f32.gmra.mrb[0].mxu0 %v1939
    %v2454 = vpop.f32.mrb[0].mxu0
    %v2455 = vadd.f32 %v2386, %v2454
    %v2456 = vpop.f32.mrb[0].mxu0
    %2457 = vmatprep.mubr.f32.mxu0 0.0
    %2458 = vmatmul.mubr.f32.gmra.mrb[0].mxu0 %v1942
    %v2459 = vpop.f32.mrb[0].mxu0
    %v2460 = vadd.f32 %v2386, %v2459
    %v2461 = vpop.f32.mrb[0].mxu0
    %2462 = vdwg.mxu0
    %v2463 = vld [vmem:[%s1] sm:$0xff]
    %s2464 = scalar_lea.vmem %s11, 1
    %v2465 = vld [vmem:[%s2464] sm:$0x1]
    %v2467 = vsel %vm660, %v2019, 0
    %v2470 = vsel %vm660, %v2101, 0
    %2472 = vmatprep.subr.mxu0 0.0
    %2473 = vmatpush1.xpose.msra.mxu0 %v2470
    %2474 = vmatprep.subr.mxu0 0.0
    %2475 = vmatpush1.xpose.msra.mxu0 0.0
    %2476 = vmatprep.subr.mxu0 0.0
    %2477 = vmatpush1.xpose.msra.mxu0 0.0
    %2478 = vmatprep.subr.mxu0 0.0
    %2479 = vmatpush1.xpose.msra.mxu0 0.0
    %2480 = vmatprep.subr.mxu0 0.0
    %2481 = vmatpush1.xpose.msra.mxu0 0.0
    %2482 = vmatprep.subr.mxu0 0.0
    %2483 = vmatpush1.xpose.msra.mxu0 0.0
    %2484 = vmatprep.subr.mxu0 0.0
    %2485 = vmatpush1.xpose.msra.mxu0 0.0
    %2486 = vmatprep.subr.mxu0 0.0
    %2487 = vmatpush1.xpose.msra.mxu0 0.0
    %2488 = vmatprep.subr.mxu0 0.0
    %2489 = vmatpush1.xpose.msra.mxu0 0.0
    %2490 = vmatprep.subr.mxu0 0.0
    %2491 = vmatpush1.xpose.msra.mxu0 0.0
    %2492 = vmatprep.subr.mxu0 0.0
    %2493 = vmatpush1.xpose.msra.mxu0 0.0
    %2494 = vmatprep.subr.mxu0 0.0
    %2495 = vmatpush1.xpose.msra.mxu0 0.0
    %2496 = vmatprep.subr.mxu0 0.0
    %2497 = vmatpush1.xpose.msra.mxu0 0.0
    %2498 = vmatprep.subr.mxu0 0.0
    %2499 = vmatpush1.xpose.msra.mxu0 0.0
    %2500 = vmatprep.subr.mxu0 0.0
    %2501 = vmatpush1.xpose.msra.mxu0 0.0
    %2502 = vmatprep.subr.mxu0 0.0
    %2503 = vmatpush1.xpose.msra.mxu0 0.0
    %2504 = vmatprep.subr.mxu0 0.0
    %2505 = vmatpush1.xpose.msra.mxu0 0.0
    %2506 = vmatprep.subr.mxu0 0.0
    %2507 = vmatpush1.xpose.msra.mxu0 0.0
    %2508 = vmatprep.subr.mxu0 0.0
    %2509 = vmatpush1.xpose.msra.mxu0 0.0
    %2510 = vmatprep.subr.mxu0 0.0
    %2511 = vmatpush1.xpose.msra.mxu0 0.0
    %2512 = vmatprep.subr.mxu0 0.0
    %2513 = vmatpush1.xpose.msra.mxu0 0.0
    %2514 = vmatprep.subr.mxu0 0.0
    %2515 = vmatpush1.xpose.msra.mxu0 0.0
    %2516 = vmatprep.subr.mxu0 0.0
    %2517 = vmatpush1.xpose.msra.mxu0 0.0
    %2518 = vmatprep.subr.mxu0 0.0
    %2519 = vmatpush1.xpose.msra.mxu0 0.0
    %2520 = vmatprep.subr.mxu0 0.0
    %2521 = vmatpush1.xpose.msra.mxu0 0.0
    %2522 = vmatprep.subr.mxu0 0.0
    %2523 = vmatpush1.xpose.msra.mxu0 0.0
    %2524 = vmatprep.subr.mxu0 0.0
    %2525 = vmatpush1.xpose.msra.mxu0 0.0
    %2526 = vmatprep.subr.mxu0 0.0
    %2527 = vmatpush1.xpose.msra.mxu0 0.0
    %2528 = vmatprep.subr.mxu0 0.0
    %2529 = vmatpush1.xpose.msra.mxu0 0.0
    %2530 = vmatprep.subr.mxu0 0.0
    %2531 = vmatpush1.xpose.msra.mxu0 0.0
    %2532 = vmatprep.subr.mxu0 0.0
    %2533 = vmatpush1.xpose.msra.mxu0 0.0
    %2534 = vmatprep.subr.mxu0 0.0
    %2535 = vmatpush1.xpose.msra.mxu0 0.0
    %2536 = vmatprep.mubr.f32.mxu0 0.0
    %2537 = vmatmul.mubr.f32.gmra.mrb[0].mxu0 %v2467
    %v2538 = vpop.f32.mrb[0].mxu0
    %v2539 = vadd.f32 %v2463, %v2538
    %v2540 = vpop.f32.mrb[0].mxu0
    %2541 = vdwg.mxu0
    %v2542 = vsel %vm737, %v2539, -inf
    %2543 = vmax.xlane.f32.xlu0 %v2542
    %v2544 = vpop.xlane.xlu0 %2543
    %v2545 = vsub.f32 %v2539, %v2544
    %v2546 = vmul.f32 %v2545, 1.442695
    %v2547 = vpow.pop %v2546
    %v2548 = vsel %vm737, %v2547, 0.0
    %2549 = vadd.xlane.f32.xlu0 %v2548
    %v2550 = vpop.xlane.xlu0 %2549
    %v2551 = vrcp.pop %v2550
    %v2552 = vmul.f32 %v2547, %v2551
    %v2554 = vsel %vm737, %v2552, 0
    %2556 = vmatprep.subr.mxu0 0.0
    %2557 = vmatpush1.msra.mxu0 %v2189
    %2558 = vmatprep.subr.mxu0 0.0
    %2559 = vmatpush1.msra.mxu0 0.0
    %2560 = vmatprep.subr.mxu0 0.0
    %2561 = vmatpush1.msra.mxu0 0.0
    %2562 = vmatprep.subr.mxu0 0.0
    %2563 = vmatpush1.msra.mxu0 0.0
    %2564 = vmatprep.subr.mxu0 0.0
    %2565 = vmatpush1.msra.mxu0 0.0
    %2566 = vmatprep.subr.mxu0 0.0
    %2567 = vmatpush1.msra.mxu0 0.0
    %2568 = vmatprep.subr.mxu0 0.0
    %2569 = vmatpush1.msra.mxu0 0.0
    %2570 = vmatprep.subr.mxu0 0.0
    %2571 = vmatpush1.msra.mxu0 0.0
    %2572 = vmatprep.subr.mxu0 0.0
    %2573 = vmatpush1.msra.mxu0 0.0
    %2574 = vmatprep.subr.mxu0 0.0
    %2575 = vmatpush1.msra.mxu0 0.0
    %2576 = vmatprep.subr.mxu0 0.0
    %2577 = vmatpush1.msra.mxu0 0.0
    %2578 = vmatprep.subr.mxu0 0.0
    %2579 = vmatpush1.msra.mxu0 0.0
    %2580 = vmatprep.subr.mxu0 0.0
    %2581 = vmatpush1.msra.mxu0 0.0
    %2582 = vmatprep.subr.mxu0 0.0
    %2583 = vmatpush1.msra.mxu0 0.0
    %2584 = vmatprep.subr.mxu0 0.0
    %2585 = vmatpush1.msra.mxu0 0.0
    %2586 = vmatprep.subr.mxu0 0.0
    %2587 = vmatpush1.msra.mxu0 0.0
    %2588 = vmatprep.subr.mxu0 0.0
    %2589 = vmatpush1.msra.mxu0 0.0
    %2590 = vmatprep.subr.mxu0 0.0
    %2591 = vmatpush1.msra.mxu0 0.0
    %2592 = vmatprep.subr.mxu0 0.0
    %2593 = vmatpush1.msra.mxu0 0.0
    %2594 = vmatprep.subr.mxu0 0.0
    %2595 = vmatpush1.msra.mxu0 0.0
    %2596 = vmatprep.subr.mxu0 0.0
    %2597 = vmatpush1.msra.mxu0 0.0
    %2598 = vmatprep.subr.mxu0 0.0
    %2599 = vmatpush1.msra.mxu0 0.0
    %2600 = vmatprep.subr.mxu0 0.0
    %2601 = vmatpush1.msra.mxu0 0.0
    %2602 = vmatprep.subr.mxu0 0.0
    %2603 = vmatpush1.msra.mxu0 0.0
    %2604 = vmatprep.subr.mxu0 0.0
    %2605 = vmatpush1.msra.mxu0 0.0
    %2606 = vmatprep.subr.mxu0 0.0
    %2607 = vmatpush1.msra.mxu0 0.0
    %2608 = vmatprep.subr.mxu0 0.0
    %2609 = vmatpush1.msra.mxu0 0.0
    %2610 = vmatprep.subr.mxu0 0.0
    %2611 = vmatpush1.msra.mxu0 0.0
    %2612 = vmatprep.subr.mxu0 0.0
    %2613 = vmatpush1.msra.mxu0 0.0
    %2614 = vmatprep.subr.mxu0 0.0
    %2615 = vmatpush1.msra.mxu0 0.0
    %2616 = vmatprep.subr.mxu0 0.0
    %2617 = vmatpush1.msra.mxu0 0.0
    %2618 = vmatprep.subr.mxu0 0.0
    %2619 = vmatpush1.msra.mxu0 0.0
    %2620 = vmatprep.mubr.f32.mxu0 0.0
    %2621 = vmatmul.mubr.f32.gmra.mrb[0].mxu0 %v2554
    %v2622 = vpop.f32.mrb[0].mxu0
    %v2623 = vadd.f32 0.0, %v2622
    %v2624 = vpop.f32.mrb[0].mxu0
    %2625 = vdwg.mxu0
    %s2626 = scalar_lea.vmem %s10, 32
    %v2627 = vld [vmem:[%s2626] sm:$0xff]
    %v2628 = vld [vmem:[%s2626 + $0x8] sm:$0xff]
    %v2630 = vsel %vm660, %v2623, 0
    %2632 = vmatprep.subr.mxu0 0.0
    %2633 = vmatpush1.msra.mxu0 %v2627
    %2634 = vmatprep.subr.mxu0 0.0
    %2635 = vmatpush1.msra.mxu0 %v2628
    %2636 = vmatprep.subr.mxu0 0.0
    %2637 = vmatpush1.msra.mxu0 0.0
    %2638 = vmatprep.subr.mxu0 0.0
    %2639 = vmatpush1.msra.mxu0 0.0
    %2640 = vmatprep.subr.mxu0 0.0
    %2641 = vmatpush1.msra.mxu0 0.0
    %2642 = vmatprep.subr.mxu0 0.0
    %2643 = vmatpush1.msra.mxu0 0.0
    %2644 = vmatprep.subr.mxu0 0.0
    %2645 = vmatpush1.msra.mxu0 0.0
    %2646 = vmatprep.subr.mxu0 0.0
    %2647 = vmatpush1.msra.mxu0 0.0
    %2648 = vmatprep.subr.mxu0 0.0
    %2649 = vmatpush1.msra.mxu0 0.0
    %2650 = vmatprep.subr.mxu0 0.0
    %2651 = vmatpush1.msra.mxu0 0.0
    %2652 = vmatprep.subr.mxu0 0.0
    %2653 = vmatpush1.msra.mxu0 0.0
    %2654 = vmatprep.subr.mxu0 0.0
    %2655 = vmatpush1.msra.mxu0 0.0
    %2656 = vmatprep.subr.mxu0 0.0
    %2657 = vmatpush1.msra.mxu0 0.0
    %2658 = vmatprep.subr.mxu0 0.0
    %2659 = vmatpush1.msra.mxu0 0.0
    %2660 = vmatprep.subr.mxu0 0.0
    %2661 = vmatpush1.msra.mxu0 0.0
    %2662 = vmatprep.subr.mxu0 0.0
    %2663 = vmatpush1.msra.mxu0 0.0
    %2664 = vmatprep.subr.mxu0 0.0
    %2665 = vmatpush1.msra.mxu0 0.0
    %2666 = vmatprep.subr.mxu0 0.0
    %2667 = vmatpush1.msra.mxu0 0.0
    %2668 = vmatprep.subr.mxu0 0.0
    %2669 = vmatpush1.msra.mxu0 0.0
    %2670 = vmatprep.subr.mxu0 0.0
    %2671 = vmatpush1.msra.mxu0 0.0
    %2672 = vmatprep.subr.mxu0 0.0
    %2673 = vmatpush1.msra.mxu0 0.0
    %2674 = vmatprep.subr.mxu0 0.0
    %2675 = vmatpush1.msra.mxu0 0.0
    %2676 = vmatprep.subr.mxu0 0.0
    %2677 = vmatpush1.msra.mxu0 0.0
    %2678 = vmatprep.subr.mxu0 0.0
    %2679 = vmatpush1.msra.mxu0 0.0
    %2680 = vmatprep.subr.mxu0 0.0
    %2681 = vmatpush1.msra.mxu0 0.0
    %2682 = vmatprep.subr.mxu0 0.0
    %2683 = vmatpush1.msra.mxu0 0.0
    %2684 = vmatprep.subr.mxu0 0.0
    %2685 = vmatpush1.msra.mxu0 0.0
    %2686 = vmatprep.subr.mxu0 0.0
    %2687 = vmatpush1.msra.mxu0 0.0
    %2688 = vmatprep.subr.mxu0 0.0
    %2689 = vmatpush1.msra.mxu0 0.0
    %2690 = vmatprep.subr.mxu0 0.0
    %2691 = vmatpush1.msra.mxu0 0.0
    %2692 = vmatprep.subr.mxu0 0.0
    %2693 = vmatpush1.msra.mxu0 0.0
    %2694 = vmatprep.subr.mxu0 0.0
    %2695 = vmatpush1.msra.mxu0 0.0
    %2696 = vmatprep.mubr.f32.mxu0 0.0
    %2697 = vmatmul.mubr.f32.gmra.mrb[0].mxu0 %v2630
    %v2698 = vpop.f32.mrb[0].mxu0
    %v2699 = vadd.f32 0.0, %v2698
    %v2700 = vpop.f32.mrb[0].mxu0
    %2701 = vdwg.mxu0
    %v2703 = vlaneseq
    %v2704 = vshrl.u32 %v2703, 7
    %v2705 = vsub.s32 0, %v2704
    %v2706 = vrot.slane %v2465, %v2705
    %v2708 = vadd.f32 %v2706, %v2699
    %v2710 = vsel %vm660, %v2285, 0
    %v2713 = vsel %vm660, %v2367, 0
    %2715 = vmatprep.subr.mxu0 0.0
    %2716 = vmatpush1.xpose.msra.mxu0 %v2713
    %2717 = vmatprep.subr.mxu0 0.0
    %2718 = vmatpush1.xpose.msra.mxu0 0.0
    %2719 = vmatprep.subr.mxu0 0.0
    %2720 = vmatpush1.xpose.msra.mxu0 0.0
    %2721 = vmatprep.subr.mxu0 0.0
    %2722 = vmatpush1.xpose.msra.mxu0 0.0
    %2723 = vmatprep.subr.mxu0 0.0
    %2724 = vmatpush1.xpose.msra.mxu0 0.0
    %2725 = vmatprep.subr.mxu0 0.0
    %2726 = vmatpush1.xpose.msra.mxu0 0.0
    %2727 = vmatprep.subr.mxu0 0.0
    %2728 = vmatpush1.xpose.msra.mxu0 0.0
    %2729 = vmatprep.subr.mxu0 0.0
    %2730 = vmatpush1.xpose.msra.mxu0 0.0
    %2731 = vmatprep.subr.mxu0 0.0
    %2732 = vmatpush1.xpose.msra.mxu0 0.0
    %2733 = vmatprep.subr.mxu0 0.0
    %2734 = vmatpush1.xpose.msra.mxu0 0.0
    %2735 = vmatprep.subr.mxu0 0.0
    %2736 = vmatpush1.xpose.msra.mxu0 0.0
    %2737 = vmatprep.subr.mxu0 0.0
    %2738 = vmatpush1.xpose.msra.mxu0 0.0
    %2739 = vmatprep.subr.mxu0 0.0
    %2740 = vmatpush1.xpose.msra.mxu0 0.0
    %2741 = vmatprep.subr.mxu0 0.0
    %2742 = vmatpush1.xpose.msra.mxu0 0.0
    %2743 = vmatprep.subr.mxu0 0.0
    %2744 = vmatpush1.xpose.msra.mxu0 0.0
    %2745 = vmatprep.subr.mxu0 0.0
    %2746 = vmatpush1.xpose.msra.mxu0 0.0
    %2747 = vmatprep.subr.mxu0 0.0
    %2748 = vmatpush1.xpose.msra.mxu0 0.0
    %2749 = vmatprep.subr.mxu0 0.0
    %2750 = vmatpush1.xpose.msra.mxu0 0.0
    %2751 = vmatprep.subr.mxu0 0.0
    %2752 = vmatpush1.xpose.msra.mxu0 0.0
    %2753 = vmatprep.subr.mxu0 0.0
    %2754 = vmatpush1.xpose.msra.mxu0 0.0
    %2755 = vmatprep.subr.mxu0 0.0
    %2756 = vmatpush1.xpose.msra.mxu0 0.0
    %2757 = vmatprep.subr.mxu0 0.0
    %2758 = vmatpush1.xpose.msra.mxu0 0.0
    %2759 = vmatprep.subr.mxu0 0.0
    %2760 = vmatpush1.xpose.msra.mxu0 0.0
    %2761 = vmatprep.subr.mxu0 0.0
    %2762 = vmatpush1.xpose.msra.mxu0 0.0
    %2763 = vmatprep.subr.mxu0 0.0
    %2764 = vmatpush1.xpose.msra.mxu0 0.0
    %2765 = vmatprep.subr.mxu0 0.0
    %2766 = vmatpush1.xpose.msra.mxu0 0.0
    %2767 = vmatprep.subr.mxu0 0.0
    %2768 = vmatpush1.xpose.msra.mxu0 0.0
    %2769 = vmatprep.subr.mxu0 0.0
    %2770 = vmatpush1.xpose.msra.mxu0 0.0
    %2771 = vmatprep.subr.mxu0 0.0
    %2772 = vmatpush1.xpose.msra.mxu0 0.0
    %2773 = vmatprep.subr.mxu0 0.0
    %2774 = vmatpush1.xpose.msra.mxu0 0.0
    %2775 = vmatprep.subr.mxu0 0.0
    %2776 = vmatpush1.xpose.msra.mxu0 0.0
    %2777 = vmatprep.subr.mxu0 0.0
    %2778 = vmatpush1.xpose.msra.mxu0 0.0
    %2779 = vmatprep.mubr.f32.mxu0 0.0
    %2780 = vmatmul.mubr.f32.gmra.mrb[0].mxu0 %v2710
    %v2781 = vpop.f32.mrb[0].mxu0
    %v2782 = vadd.f32 %v2463, %v2781
    %v2783 = vpop.f32.mrb[0].mxu0
    %2784 = vdwg.mxu0
    %v2785 = vsel %vm737, %v2782, -inf
    %2786 = vmax.xlane.f32.xlu0 %v2785
    %v2787 = vpop.xlane.xlu0 %2786
    %v2788 = vsub.f32 %v2782, %v2787
    %v2789 = vmul.f32 %v2788, 1.442695
    %v2790 = vpow.pop %v2789
    %v2791 = vsel %vm737, %v2790, 0.0
    %2792 = vadd.xlane.f32.xlu0 %v2791
    %v2793 = vpop.xlane.xlu0 %2792
    %v2794 = vrcp.pop %v2793
    %v2795 = vmul.f32 %v2790, %v2794
    %v2797 = vsel %vm737, %v2795, 0
    %2799 = vmatprep.subr.mxu0 0.0
    %2800 = vmatpush1.msra.mxu0 %v2455
    %2801 = vmatprep.subr.mxu0 0.0
    %2802 = vmatpush1.msra.mxu0 0.0
    %2803 = vmatprep.subr.mxu0 0.0
    %2804 = vmatpush1.msra.mxu0 0.0
    %2805 = vmatprep.subr.mxu0 0.0
    %2806 = vmatpush1.msra.mxu0 0.0
    %2807 = vmatprep.subr.mxu0 0.0
    %2808 = vmatpush1.msra.mxu0 0.0
    %2809 = vmatprep.subr.mxu0 0.0
    %2810 = vmatpush1.msra.mxu0 0.0
    %2811 = vmatprep.subr.mxu0 0.0
    %2812 = vmatpush1.msra.mxu0 0.0
    %2813 = vmatprep.subr.mxu0 0.0
    %2814 = vmatpush1.msra.mxu0 0.0
    %2815 = vmatprep.subr.mxu0 0.0
    %2816 = vmatpush1.msra.mxu0 0.0
    %2817 = vmatprep.subr.mxu0 0.0
    %2818 = vmatpush1.msra.mxu0 0.0
    %2819 = vmatprep.subr.mxu0 0.0
    %2820 = vmatpush1.msra.mxu0 0.0
    %2821 = vmatprep.subr.mxu0 0.0
    %2822 = vmatpush1.msra.mxu0 0.0
    %2823 = vmatprep.subr.mxu0 0.0
    %2824 = vmatpush1.msra.mxu0 0.0
    %2825 = vmatprep.subr.mxu0 0.0
    %2826 = vmatpush1.msra.mxu0 0.0
    %2827 = vmatprep.subr.mxu0 0.0
    %2828 = vmatpush1.msra.mxu0 0.0
    %2829 = vmatprep.subr.mxu0 0.0
    %2830 = vmatpush1.msra.mxu0 0.0
    %2831 = vmatprep.subr.mxu0 0.0
    %2832 = vmatpush1.msra.mxu0 0.0
    %2833 = vmatprep.subr.mxu0 0.0
    %2834 = vmatpush1.msra.mxu0 0.0
    %2835 = vmatprep.subr.mxu0 0.0
    %2836 = vmatpush1.msra.mxu0 0.0
    %2837 = vmatprep.subr.mxu0 0.0
    %2838 = vmatpush1.msra.mxu0 0.0
    %2839 = vmatprep.subr.mxu0 0.0
    %2840 = vmatpush1.msra.mxu0 0.0
    %2841 = vmatprep.subr.mxu0 0.0
    %2842 = vmatpush1.msra.mxu0 0.0
    %2843 = vmatprep.subr.mxu0 0.0
    %2844 = vmatpush1.msra.mxu0 0.0
    %2845 = vmatprep.subr.mxu0 0.0
    %2846 = vmatpush1.msra.mxu0 0.0
    %2847 = vmatprep.subr.mxu0 0.0
    %2848 = vmatpush1.msra.mxu0 0.0
    %2849 = vmatprep.subr.mxu0 0.0
    %2850 = vmatpush1.msra.mxu0 0.0
    %2851 = vmatprep.subr.mxu0 0.0
    %2852 = vmatpush1.msra.mxu0 0.0
    %2853 = vmatprep.subr.mxu0 0.0
    %2854 = vmatpush1.msra.mxu0 0.0
    %2855 = vmatprep.subr.mxu0 0.0
    %2856 = vmatpush1.msra.mxu0 0.0
    %2857 = vmatprep.subr.mxu0 0.0
    %2858 = vmatpush1.msra.mxu0 0.0
    %2859 = vmatprep.subr.mxu0 0.0
    %2860 = vmatpush1.msra.mxu0 0.0
    %2861 = vmatprep.subr.mxu0 0.0
    %2862 = vmatpush1.msra.mxu0 0.0
    %2863 = vmatprep.mubr.f32.mxu0 0.0
    %2864 = vmatmul.mubr.f32.gmra.mrb[0].mxu0 %v2797
    %v2865 = vpop.f32.mrb[0].mxu0
    %v2866 = vadd.f32 0.0, %v2865
    %v2867 = vpop.f32.mrb[0].mxu0
    %2868 = vdwg.mxu0
    %s2869 = scalar_lea.vmem %s10, 48
    %v2870 = vld [vmem:[%s2869] sm:$0xff]
    %v2871 = vld [vmem:[%s2869 + $0x8] sm:$0xff]
    %v2873 = vsel %vm660, %v2866, 0
    %2875 = vmatprep.subr.mxu0 0.0
    %2876 = vmatpush1.msra.mxu0 %v2870
    %2877 = vmatprep.subr.mxu0 0.0
    %2878 = vmatpush1.msra.mxu0 %v2871
    %2879 = vmatprep.subr.mxu0 0.0
    %2880 = vmatpush1.msra.mxu0 0.0
    %2881 = vmatprep.subr.mxu0 0.0
    %2882 = vmatpush1.msra.mxu0 0.0
    %2883 = vmatprep.subr.mxu0 0.0
    %2884 = vmatpush1.msra.mxu0 0.0
    %2885 = vmatprep.subr.mxu0 0.0
    %2886 = vmatpush1.msra.mxu0 0.0
    %2887 = vmatprep.subr.mxu0 0.0
    %2888 = vmatpush1.msra.mxu0 0.0
    %2889 = vmatprep.subr.mxu0 0.0
    %2890 = vmatpush1.msra.mxu0 0.0
    %2891 = vmatprep.subr.mxu0 0.0
    %2892 = vmatpush1.msra.mxu0 0.0
    %2893 = vmatprep.subr.mxu0 0.0
    %2894 = vmatpush1.msra.mxu0 0.0
    %2895 = vmatprep.subr.mxu0 0.0
    %2896 = vmatpush1.msra.mxu0 0.0
    %2897 = vmatprep.subr.mxu0 0.0
    %2898 = vmatpush1.msra.mxu0 0.0
    %2899 = vmatprep.subr.mxu0 0.0
    %2900 = vmatpush1.msra.mxu0 0.0
    %2901 = vmatprep.subr.mxu0 0.0
    %2902 = vmatpush1.msra.mxu0 0.0
    %2903 = vmatprep.subr.mxu0 0.0
    %2904 = vmatpush1.msra.mxu0 0.0
    %2905 = vmatprep.subr.mxu0 0.0
    %2906 = vmatpush1.msra.mxu0 0.0
    %2907 = vmatprep.subr.mxu0 0.0
    %2908 = vmatpush1.msra.mxu0 0.0
    %2909 = vmatprep.subr.mxu0 0.0
    %2910 = vmatpush1.msra.mxu0 0.0
    %2911 = vmatprep.subr.mxu0 0.0
    %2912 = vmatpush1.msra.mxu0 0.0
    %2913 = vmatprep.subr.mxu0 0.0
    %2914 = vmatpush1.msra.mxu0 0.0
    %2915 = vmatprep.subr.mxu0 0.0
    %2916 = vmatpush1.msra.mxu0 0.0
    %2917 = vmatprep.subr.mxu0 0.0
    %2918 = vmatpush1.msra.mxu0 0.0
    %2919 = vmatprep.subr.mxu0 0.0
    %2920 = vmatpush1.msra.mxu0 0.0
    %2921 = vmatprep.subr.mxu0 0.0
    %2922 = vmatpush1.msra.mxu0 0.0
    %2923 = vmatprep.subr.mxu0 0.0
    %2924 = vmatpush1.msra.mxu0 0.0
    %2925 = vmatprep.subr.mxu0 0.0
    %2926 = vmatpush1.msra.mxu0 0.0
    %2927 = vmatprep.subr.mxu0 0.0
    %2928 = vmatpush1.msra.mxu0 0.0
    %2929 = vmatprep.subr.mxu0 0.0
    %2930 = vmatpush1.msra.mxu0 0.0
    %2931 = vmatprep.subr.mxu0 0.0
    %2932 = vmatpush1.msra.mxu0 0.0
    %2933 = vmatprep.subr.mxu0 0.0
    %2934 = vmatpush1.msra.mxu0 0.0
    %2935 = vmatprep.subr.mxu0 0.0
    %2936 = vmatpush1.msra.mxu0 0.0
    %2937 = vmatprep.subr.mxu0 0.0
    %2938 = vmatpush1.msra.mxu0 0.0
    %2939 = vmatprep.mubr.f32.mxu0 0.0
    %2940 = vmatmul.mubr.f32.gmra.mrb[0].mxu0 %v2873
    %v2941 = vpop.f32.mrb[0].mxu0
    %v2942 = vadd.f32 0.0, %v2941
    %v2943 = vpop.f32.mrb[0].mxu0
    %2944 = vdwg.mxu0
    %v2945 = vadd.f32 %v2708, %v2942
    %2946 = vst.msk [vmem:[#allocation2] sm:$0xff] %vm82, %v2945
    %v2947 = vld [vmem:[%s1142] sm:$0xff]
    %v2948 = vld [vmem:[%s2464] sm:$0x1]
    %v2950 = vsel %vm660, %v2020, 0
    %v2953 = vsel %vm660, %v2106, 0
    %2955 = vmatprep.subr.mxu0 0.0
    %2956 = vmatpush1.xpose.msra.mxu0 %v2953
    %2957 = vmatprep.subr.mxu0 0.0
    %2958 = vmatpush1.xpose.msra.mxu0 0.0
    %2959 = vmatprep.subr.mxu0 0.0
    %2960 = vmatpush1.xpose.msra.mxu0 0.0
    %2961 = vmatprep.subr.mxu0 0.0
    %2962 = vmatpush1.xpose.msra.mxu0 0.0
    %2963 = vmatprep.subr.mxu0 0.0
    %2964 = vmatpush1.xpose.msra.mxu0 0.0
    %2965 = vmatprep.subr.mxu0 0.0
    %2966 = vmatpush1.xpose.msra.mxu0 0.0
    %2967 = vmatprep.subr.mxu0 0.0
    %2968 = vmatpush1.xpose.msra.mxu0 0.0
    %2969 = vmatprep.subr.mxu0 0.0
    %2970 = vmatpush1.xpose.msra.mxu0 0.0
    %2971 = vmatprep.subr.mxu0 0.0
    %2972 = vmatpush1.xpose.msra.mxu0 0.0
    %2973 = vmatprep.subr.mxu0 0.0
    %2974 = vmatpush1.xpose.msra.mxu0 0.0
    %2975 = vmatprep.subr.mxu0 0.0
    %2976 = vmatpush1.xpose.msra.mxu0 0.0
    %2977 = vmatprep.subr.mxu0 0.0
    %2978 = vmatpush1.xpose.msra.mxu0 0.0
    %2979 = vmatprep.subr.mxu0 0.0
    %2980 = vmatpush1.xpose.msra.mxu0 0.0
    %2981 = vmatprep.subr.mxu0 0.0
    %2982 = vmatpush1.xpose.msra.mxu0 0.0
    %2983 = vmatprep.subr.mxu0 0.0
    %2984 = vmatpush1.xpose.msra.mxu0 0.0
    %2985 = vmatprep.subr.mxu0 0.0
    %2986 = vmatpush1.xpose.msra.mxu0 0.0
    %2987 = vmatprep.subr.mxu0 0.0
    %2988 = vmatpush1.xpose.msra.mxu0 0.0
    %2989 = vmatprep.subr.mxu0 0.0
    %2990 = vmatpush1.xpose.msra.mxu0 0.0
    %2991 = vmatprep.subr.mxu0 0.0
    %2992 = vmatpush1.xpose.msra.mxu0 0.0
    %2993 = vmatprep.subr.mxu0 0.0
    %2994 = vmatpush1.xpose.msra.mxu0 0.0
    %2995 = vmatprep.subr.mxu0 0.0
    %2996 = vmatpush1.xpose.msra.mxu0 0.0
    %2997 = vmatprep.subr.mxu0 0.0
    %2998 = vmatpush1.xpose.msra.mxu0 0.0
    %2999 = vmatprep.subr.mxu0 0.0
    %3000 = vmatpush1.xpose.msra.mxu0 0.0
    %3001 = vmatprep.subr.mxu0 0.0
    %3002 = vmatpush1.xpose.msra.mxu0 0.0
    %3003 = vmatprep.subr.mxu0 0.0
    %3004 = vmatpush1.xpose.msra.mxu0 0.0
    %3005 = vmatprep.subr.mxu0 0.0
    %3006 = vmatpush1.xpose.msra.mxu0 0.0
    %3007 = vmatprep.subr.mxu0 0.0
    %3008 = vmatpush1.xpose.msra.mxu0 0.0
    %3009 = vmatprep.subr.mxu0 0.0
    %3010 = vmatpush1.xpose.msra.mxu0 0.0
    %3011 = vmatprep.subr.mxu0 0.0
    %3012 = vmatpush1.xpose.msra.mxu0 0.0
    %3013 = vmatprep.subr.mxu0 0.0
    %3014 = vmatpush1.xpose.msra.mxu0 0.0
    %3015 = vmatprep.subr.mxu0 0.0
    %3016 = vmatpush1.xpose.msra.mxu0 0.0
    %3017 = vmatprep.subr.mxu0 0.0
    %3018 = vmatpush1.xpose.msra.mxu0 0.0
    %3019 = vmatprep.mubr.f32.mxu0 0.0
    %3020 = vmatmul.mubr.f32.gmra.mrb[0].mxu0 %v2950
    %v3021 = vpop.f32.mrb[0].mxu0
    %v3022 = vadd.f32 %v2947, %v3021
    %v3023 = vpop.f32.mrb[0].mxu0
    %3024 = vdwg.mxu0
    %v3025 = vsel %vm737, %v3022, -inf
    %3026 = vmax.xlane.f32.xlu0 %v3025
    %v3027 = vpop.xlane.xlu0 %3026
    %v3028 = vsub.f32 %v3022, %v3027
    %v3029 = vmul.f32 %v3028, 1.442695
    %v3030 = vpow.pop %v3029
    %v3031 = vsel %vm737, %v3030, 0.0
    %3032 = vadd.xlane.f32.xlu0 %v3031
    %v3033 = vpop.xlane.xlu0 %3032
    %v3034 = vrcp.pop %v3033
    %v3035 = vmul.f32 %v3030, %v3034
    %v3037 = vsel %vm737, %v3035, 0
    %3039 = vmatprep.subr.mxu0 0.0
    %3040 = vmatpush1.msra.mxu0 %v2194
    %3041 = vmatprep.subr.mxu0 0.0
    %3042 = vmatpush1.msra.mxu0 0.0
    %3043 = vmatprep.subr.mxu0 0.0
    %3044 = vmatpush1.msra.mxu0 0.0
    %3045 = vmatprep.subr.mxu0 0.0
    %3046 = vmatpush1.msra.mxu0 0.0
    %3047 = vmatprep.subr.mxu0 0.0
    %3048 = vmatpush1.msra.mxu0 0.0
    %3049 = vmatprep.subr.mxu0 0.0
    %3050 = vmatpush1.msra.mxu0 0.0
    %3051 = vmatprep.subr.mxu0 0.0
    %3052 = vmatpush1.msra.mxu0 0.0
    %3053 = vmatprep.subr.mxu0 0.0
    %3054 = vmatpush1.msra.mxu0 0.0
    %3055 = vmatprep.subr.mxu0 0.0
    %3056 = vmatpush1.msra.mxu0 0.0
    %3057 = vmatprep.subr.mxu0 0.0
    %3058 = vmatpush1.msra.mxu0 0.0
    %3059 = vmatprep.subr.mxu0 0.0
    %3060 = vmatpush1.msra.mxu0 0.0
    %3061 = vmatprep.subr.mxu0 0.0
    %3062 = vmatpush1.msra.mxu0 0.0
    %3063 = vmatprep.subr.mxu0 0.0
    %3064 = vmatpush1.msra.mxu0 0.0
    %3065 = vmatprep.subr.mxu0 0.0
    %3066 = vmatpush1.msra.mxu0 0.0
    %3067 = vmatprep.subr.mxu0 0.0
    %3068 = vmatpush1.msra.mxu0 0.0
    %3069 = vmatprep.subr.mxu0 0.0
    %3070 = vmatpush1.msra.mxu0 0.0
    %3071 = vmatprep.subr.mxu0 0.0
    %3072 = vmatpush1.msra.mxu0 0.0
    %3073 = vmatprep.subr.mxu0 0.0
    %3074 = vmatpush1.msra.mxu0 0.0
    %3075 = vmatprep.subr.mxu0 0.0
    %3076 = vmatpush1.msra.mxu0 0.0
    %3077 = vmatprep.subr.mxu0 0.0
    %3078 = vmatpush1.msra.mxu0 0.0
    %3079 = vmatprep.subr.mxu0 0.0
    %3080 = vmatpush1.msra.mxu0 0.0
    %3081 = vmatprep.subr.mxu0 0.0
    %3082 = vmatpush1.msra.mxu0 0.0
    %3083 = vmatprep.subr.mxu0 0.0
    %3084 = vmatpush1.msra.mxu0 0.0
    %3085 = vmatprep.subr.mxu0 0.0
    %3086 = vmatpush1.msra.mxu0 0.0
    %3087 = vmatprep.subr.mxu0 0.0
    %3088 = vmatpush1.msra.mxu0 0.0
    %3089 = vmatprep.subr.mxu0 0.0
    %3090 = vmatpush1.msra.mxu0 0.0
    %3091 = vmatprep.subr.mxu0 0.0
    %3092 = vmatpush1.msra.mxu0 0.0
    %3093 = vmatprep.subr.mxu0 0.0
    %3094 = vmatpush1.msra.mxu0 0.0
    %3095 = vmatprep.subr.mxu0 0.0
    %3096 = vmatpush1.msra.mxu0 0.0
    %3097 = vmatprep.subr.mxu0 0.0
    %3098 = vmatpush1.msra.mxu0 0.0
    %3099 = vmatprep.subr.mxu0 0.0
    %3100 = vmatpush1.msra.mxu0 0.0
    %3101 = vmatprep.subr.mxu0 0.0
    %3102 = vmatpush1.msra.mxu0 0.0
    %3103 = vmatprep.mubr.f32.mxu0 0.0
    %3104 = vmatmul.mubr.f32.gmra.mrb[0].mxu0 %v3037
    %v3105 = vpop.f32.mrb[0].mxu0
    %v3106 = vadd.f32 0.0, %v3105
    %v3107 = vpop.f32.mrb[0].mxu0
    %3108 = vdwg.mxu0
    %v3109 = vld [vmem:[%s2626] sm:$0xff]
    %v3110 = vld [vmem:[%s2626 + $0x8] sm:$0xff]
    %v3112 = vsel %vm660, %v3106, 0
    %3114 = vmatprep.subr.mxu0 0.0
    %3115 = vmatpush1.msra.mxu0 %v3109
    %3116 = vmatprep.subr.mxu0 0.0
    %3117 = vmatpush1.msra.mxu0 %v3110
    %3118 = vmatprep.subr.mxu0 0.0
    %3119 = vmatpush1.msra.mxu0 0.0
    %3120 = vmatprep.subr.mxu0 0.0
    %3121 = vmatpush1.msra.mxu0 0.0
    %3122 = vmatprep.subr.mxu0 0.0
    %3123 = vmatpush1.msra.mxu0 0.0
    %3124 = vmatprep.subr.mxu0 0.0
    %3125 = vmatpush1.msra.mxu0 0.0
    %3126 = vmatprep.subr.mxu0 0.0
    %3127 = vmatpush1.msra.mxu0 0.0
    %3128 = vmatprep.subr.mxu0 0.0
    %3129 = vmatpush1.msra.mxu0 0.0
    %3130 = vmatprep.subr.mxu0 0.0
    %3131 = vmatpush1.msra.mxu0 0.0
    %3132 = vmatprep.subr.mxu0 0.0
    %3133 = vmatpush1.msra.mxu0 0.0
    %3134 = vmatprep.subr.mxu0 0.0
    %3135 = vmatpush1.msra.mxu0 0.0
    %3136 = vmatprep.subr.mxu0 0.0
    %3137 = vmatpush1.msra.mxu0 0.0
    %3138 = vmatprep.subr.mxu0 0.0
    %3139 = vmatpush1.msra.mxu0 0.0
    %3140 = vmatprep.subr.mxu0 0.0
    %3141 = vmatpush1.msra.mxu0 0.0
    %3142 = vmatprep.subr.mxu0 0.0
    %3143 = vmatpush1.msra.mxu0 0.0
    %3144 = vmatprep.subr.mxu0 0.0
    %3145 = vmatpush1.msra.mxu0 0.0
    %3146 = vmatprep.subr.mxu0 0.0
    %3147 = vmatpush1.msra.mxu0 0.0
    %3148 = vmatprep.subr.mxu0 0.0
    %3149 = vmatpush1.msra.mxu0 0.0
    %3150 = vmatprep.subr.mxu0 0.0
    %3151 = vmatpush1.msra.mxu0 0.0
    %3152 = vmatprep.subr.mxu0 0.0
    %3153 = vmatpush1.msra.mxu0 0.0
    %3154 = vmatprep.subr.mxu0 0.0
    %3155 = vmatpush1.msra.mxu0 0.0
    %3156 = vmatprep.subr.mxu0 0.0
    %3157 = vmatpush1.msra.mxu0 0.0
    %3158 = vmatprep.subr.mxu0 0.0
    %3159 = vmatpush1.msra.mxu0 0.0
    %3160 = vmatprep.subr.mxu0 0.0
    %3161 = vmatpush1.msra.mxu0 0.0
    %3162 = vmatprep.subr.mxu0 0.0
    %3163 = vmatpush1.msra.mxu0 0.0
    %3164 = vmatprep.subr.mxu0 0.0
    %3165 = vmatpush1.msra.mxu0 0.0
    %3166 = vmatprep.subr.mxu0 0.0
    %3167 = vmatpush1.msra.mxu0 0.0
    %3168 = vmatprep.subr.mxu0 0.0
    %3169 = vmatpush1.msra.mxu0 0.0
    %3170 = vmatprep.subr.mxu0 0.0
    %3171 = vmatpush1.msra.mxu0 0.0
    %3172 = vmatprep.subr.mxu0 0.0
    %3173 = vmatpush1.msra.mxu0 0.0
    %3174 = vmatprep.subr.mxu0 0.0
    %3175 = vmatpush1.msra.mxu0 0.0
    %3176 = vmatprep.subr.mxu0 0.0
    %3177 = vmatpush1.msra.mxu0 0.0
    %3178 = vmatprep.mubr.f32.mxu0 0.0
    %3179 = vmatmul.mubr.f32.gmra.mrb[0].mxu0 %v3112
    %v3180 = vpop.f32.mrb[0].mxu0
    %v3181 = vadd.f32 0.0, %v3180
    %v3182 = vpop.f32.mrb[0].mxu0
    %3183 = vdwg.mxu0
    %v3185 = vlaneseq
    %v3186 = vshrl.u32 %v3185, 7
    %v3187 = vsub.s32 0, %v3186
    %v3188 = vrot.slane %v2948, %v3187
    %v3190 = vadd.f32 %v3188, %v3181
    %v3192 = vsel %vm660, %v2286, 0
    %v3195 = vsel %vm660, %v2372, 0
    %3197 = vmatprep.subr.mxu0 0.0
    %3198 = vmatpush1.xpose.msra.mxu0 %v3195
    %3199 = vmatprep.subr.mxu0 0.0
    %3200 = vmatpush1.xpose.msra.mxu0 0.0
    %3201 = vmatprep.subr.mxu0 0.0
    %3202 = vmatpush1.xpose.msra.mxu0 0.0
    %3203 = vmatprep.subr.mxu0 0.0
    %3204 = vmatpush1.xpose.msra.mxu0 0.0
    %3205 = vmatprep.subr.mxu0 0.0
    %3206 = vmatpush1.xpose.msra.mxu0 0.0
    %3207 = vmatprep.subr.mxu0 0.0
    %3208 = vmatpush1.xpose.msra.mxu0 0.0
    %3209 = vmatprep.subr.mxu0 0.0
    %3210 = vmatpush1.xpose.msra.mxu0 0.0
    %3211 = vmatprep.subr.mxu0 0.0
    %3212 = vmatpush1.xpose.msra.mxu0 0.0
    %3213 = vmatprep.subr.mxu0 0.0
    %3214 = vmatpush1.xpose.msra.mxu0 0.0
    %3215 = vmatprep.subr.mxu0 0.0
    %3216 = vmatpush1.xpose.msra.mxu0 0.0
    %3217 = vmatprep.subr.mxu0 0.0
    %3218 = vmatpush1.xpose.msra.mxu0 0.0
    %3219 = vmatprep.subr.mxu0 0.0
    %3220 = vmatpush1.xpose.msra.mxu0 0.0
    %3221 = vmatprep.subr.mxu0 0.0
    %3222 = vmatpush1.xpose.msra.mxu0 0.0
    %3223 = vmatprep.subr.mxu0 0.0
    %3224 = vmatpush1.xpose.msra.mxu0 0.0
    %3225 = vmatprep.subr.mxu0 0.0
    %3226 = vmatpush1.xpose.msra.mxu0 0.0
    %3227 = vmatprep.subr.mxu0 0.0
    %3228 = vmatpush1.xpose.msra.mxu0 0.0
    %3229 = vmatprep.subr.mxu0 0.0
    %3230 = vmatpush1.xpose.msra.mxu0 0.0
    %3231 = vmatprep.subr.mxu0 0.0
    %3232 = vmatpush1.xpose.msra.mxu0 0.0
    %3233 = vmatprep.subr.mxu0 0.0
    %3234 = vmatpush1.xpose.msra.mxu0 0.0
    %3235 = vmatprep.subr.mxu0 0.0
    %3236 = vmatpush1.xpose.msra.mxu0 0.0
    %3237 = vmatprep.subr.mxu0 0.0
    %3238 = vmatpush1.xpose.msra.mxu0 0.0
    %3239 = vmatprep.subr.mxu0 0.0
    %3240 = vmatpush1.xpose.msra.mxu0 0.0
    %3241 = vmatprep.subr.mxu0 0.0
    %3242 = vmatpush1.xpose.msra.mxu0 0.0
    %3243 = vmatprep.subr.mxu0 0.0
    %3244 = vmatpush1.xpose.msra.mxu0 0.0
    %3245 = vmatprep.subr.mxu0 0.0
    %3246 = vmatpush1.xpose.msra.mxu0 0.0
    %3247 = vmatprep.subr.mxu0 0.0
    %3248 = vmatpush1.xpose.msra.mxu0 0.0
    %3249 = vmatprep.subr.mxu0 0.0
    %3250 = vmatpush1.xpose.msra.mxu0 0.0
    %3251 = vmatprep.subr.mxu0 0.0
    %3252 = vmatpush1.xpose.msra.mxu0 0.0
    %3253 = vmatprep.subr.mxu0 0.0
    %3254 = vmatpush1.xpose.msra.mxu0 0.0
    %3255 = vmatprep.subr.mxu0 0.0
    %3256 = vmatpush1.xpose.msra.mxu0 0.0
    %3257 = vmatprep.subr.mxu0 0.0
    %3258 = vmatpush1.xpose.msra.mxu0 0.0
    %3259 = vmatprep.subr.mxu0 0.0
    %3260 = vmatpush1.xpose.msra.mxu0 0.0
    %3261 = vmatprep.mubr.f32.mxu0 0.0
    %3262 = vmatmul.mubr.f32.gmra.mrb[0].mxu0 %v3192
    %v3263 = vpop.f32.mrb[0].mxu0
    %v3264 = vadd.f32 %v2947, %v3263
    %v3265 = vpop.f32.mrb[0].mxu0
    %3266 = vdwg.mxu0
    %v3267 = vsel %vm737, %v3264, -inf
    %3268 = vmax.xlane.f32.xlu0 %v3267
    %v3269 = vpop.xlane.xlu0 %3268
    %v3270 = vsub.f32 %v3264, %v3269
    %v3271 = vmul.f32 %v3270, 1.442695
    %v3272 = vpow.pop %v3271
    %v3273 = vsel %vm737, %v3272, 0.0
    %3274 = vadd.xlane.f32.xlu0 %v3273
    %v3275 = vpop.xlane.xlu0 %3274
    %v3276 = vrcp.pop %v3275
    %v3277 = vmul.f32 %v3272, %v3276
    %v3279 = vsel %vm737, %v3277, 0
    %3281 = vmatprep.subr.mxu0 0.0
    %3282 = vmatpush1.msra.mxu0 %v2460
    %3283 = vmatprep.subr.mxu0 0.0
    %3284 = vmatpush1.msra.mxu0 0.0
    %3285 = vmatprep.subr.mxu0 0.0
    %3286 = vmatpush1.msra.mxu0 0.0
    %3287 = vmatprep.subr.mxu0 0.0
    %3288 = vmatpush1.msra.mxu0 0.0
    %3289 = vmatprep.subr.mxu0 0.0
    %3290 = vmatpush1.msra.mxu0 0.0
    %3291 = vmatprep.subr.mxu0 0.0
    %3292 = vmatpush1.msra.mxu0 0.0
    %3293 = vmatprep.subr.mxu0 0.0
    %3294 = vmatpush1.msra.mxu0 0.0
    %3295 = vmatprep.subr.mxu0 0.0
    %3296 = vmatpush1.msra.mxu0 0.0
    %3297 = vmatprep.subr.mxu0 0.0
    %3298 = vmatpush1.msra.mxu0 0.0
    %3299 = vmatprep.subr.mxu0 0.0
    %3300 = vmatpush1.msra.mxu0 0.0
    %3301 = vmatprep.subr.mxu0 0.0
    %3302 = vmatpush1.msra.mxu0 0.0
    %3303 = vmatprep.subr.mxu0 0.0
    %3304 = vmatpush1.msra.mxu0 0.0
    %3305 = vmatprep.subr.mxu0 0.0
    %3306 = vmatpush1.msra.mxu0 0.0
    %3307 = vmatprep.subr.mxu0 0.0
    %3308 = vmatpush1.msra.mxu0 0.0
    %3309 = vmatprep.subr.mxu0 0.0
    %3310 = vmatpush1.msra.mxu0 0.0
    %3311 = vmatprep.subr.mxu0 0.0
    %3312 = vmatpush1.msra.mxu0 0.0
    %3313 = vmatprep.subr.mxu0 0.0
    %3314 = vmatpush1.msra.mxu0 0.0
    %3315 = vmatprep.subr.mxu0 0.0
    %3316 = vmatpush1.msra.mxu0 0.0
    %3317 = vmatprep.subr.mxu0 0.0
    %3318 = vmatpush1.msra.mxu0 0.0
    %3319 = vmatprep.subr.mxu0 0.0
    %3320 = vmatpush1.msra.mxu0 0.0
    %3321 = vmatprep.subr.mxu0 0.0
    %3322 = vmatpush1.msra.mxu0 0.0
    %3323 = vmatprep.subr.mxu0 0.0
    %3324 = vmatpush1.msra.mxu0 0.0
    %3325 = vmatprep.subr.mxu0 0.0
    %3326 = vmatpush1.msra.mxu0 0.0
    %3327 = vmatprep.subr.mxu0 0.0
    %3328 = vmatpush1.msra.mxu0 0.0
    %3329 = vmatprep.subr.mxu0 0.0
    %3330 = vmatpush1.msra.mxu0 0.0
    %3331 = vmatprep.subr.mxu0 0.0
    %3332 = vmatpush1.msra.mxu0 0.0
    %3333 = vmatprep.subr.mxu0 0.0
    %3334 = vmatpush1.msra.mxu0 0.0
    %3335 = vmatprep.subr.mxu0 0.0
    %3336 = vmatpush1.msra.mxu0 0.0
    %3337 = vmatprep.subr.mxu0 0.0
    %3338 = vmatpush1.msra.mxu0 0.0
    %3339 = vmatprep.subr.mxu0 0.0
    %3340 = vmatpush1.msra.mxu0 0.0
    %3341 = vmatprep.subr.mxu0 0.0
    %3342 = vmatpush1.msra.mxu0 0.0
    %3343 = vmatprep.subr.mxu0 0.0
    %3344 = vmatpush1.msra.mxu0 0.0
    %3345 = vmatprep.mubr.f32.mxu0 0.0
    %3346 = vmatmul.mubr.f32.gmra.mrb[0].mxu0 %v3279
    %v3347 = vpop.f32.mrb[0].mxu0
    %v3348 = vadd.f32 0.0, %v3347
    %v3349 = vpop.f32.mrb[0].mxu0
    %3350 = vdwg.mxu0
    %v3351 = vld [vmem:[%s2869] sm:$0xff]
    %v3352 = vld [vmem:[%s2869 + $0x8] sm:$0xff]
    %v3354 = vsel %vm660, %v3348, 0
    %3356 = vmatprep.subr.mxu0 0.0
    %3357 = vmatpush1.msra.mxu0 %v3351
    %3358 = vmatprep.subr.mxu0 0.0
    %3359 = vmatpush1.msra.mxu0 %v3352
    %3360 = vmatprep.subr.mxu0 0.0
    %3361 = vmatpush1.msra.mxu0 0.0
    %3362 = vmatprep.subr.mxu0 0.0
    %3363 = vmatpush1.msra.mxu0 0.0
    %3364 = vmatprep.subr.mxu0 0.0
    %3365 = vmatpush1.msra.mxu0 0.0
    %3366 = vmatprep.subr.mxu0 0.0
    %3367 = vmatpush1.msra.mxu0 0.0
    %3368 = vmatprep.subr.mxu0 0.0
    %3369 = vmatpush1.msra.mxu0 0.0
    %3370 = vmatprep.subr.mxu0 0.0
    %3371 = vmatpush1.msra.mxu0 0.0
    %3372 = vmatprep.subr.mxu0 0.0
    %3373 = vmatpush1.msra.mxu0 0.0
    %3374 = vmatprep.subr.mxu0 0.0
    %3375 = vmatpush1.msra.mxu0 0.0
    %3376 = vmatprep.subr.mxu0 0.0
    %3377 = vmatpush1.msra.mxu0 0.0
    %3378 = vmatprep.subr.mxu0 0.0
    %3379 = vmatpush1.msra.mxu0 0.0
    %3380 = vmatprep.subr.mxu0 0.0
    %3381 = vmatpush1.msra.mxu0 0.0
    %3382 = vmatprep.subr.mxu0 0.0
    %3383 = vmatpush1.msra.mxu0 0.0
    %3384 = vmatprep.subr.mxu0 0.0
    %3385 = vmatpush1.msra.mxu0 0.0
    %3386 = vmatprep.subr.mxu0 0.0
    %3387 = vmatpush1.msra.mxu0 0.0
    %3388 = vmatprep.subr.mxu0 0.0
    %3389 = vmatpush1.msra.mxu0 0.0
    %3390 = vmatprep.subr.mxu0 0.0
    %3391 = vmatpush1.msra.mxu0 0.0
    %3392 = vmatprep.subr.mxu0 0.0
    %3393 = vmatpush1.msra.mxu0 0.0
    %3394 = vmatprep.subr.mxu0 0.0
    %3395 = vmatpush1.msra.mxu0 0.0
    %3396 = vmatprep.subr.mxu0 0.0
    %3397 = vmatpush1.msra.mxu0 0.0
    %3398 = vmatprep.subr.mxu0 0.0
    %3399 = vmatpush1.msra.mxu0 0.0
    %3400 = vmatprep.subr.mxu0 0.0
    %3401 = vmatpush1.msra.mxu0 0.0
    %3402 = vmatprep.subr.mxu0 0.0
    %3403 = vmatpush1.msra.mxu0 0.0
    %3404 = vmatprep.subr.mxu0 0.0
    %3405 = vmatpush1.msra.mxu0 0.0
    %3406 = vmatprep.subr.mxu0 0.0
    %3407 = vmatpush1.msra.mxu0 0.0
    %3408 = vmatprep.subr.mxu0 0.0
    %3409 = vmatpush1.msra.mxu0 0.0
    %3410 = vmatprep.subr.mxu0 0.0
    %3411 = vmatpush1.msra.mxu0 0.0
    %3412 = vmatprep.subr.mxu0 0.0
    %3413 = vmatpush1.msra.mxu0 0.0
    %3414 = vmatprep.subr.mxu0 0.0
    %3415 = vmatpush1.msra.mxu0 0.0
    %3416 = vmatprep.subr.mxu0 0.0
    %3417 = vmatpush1.msra.mxu0 0.0
    %3418 = vmatprep.subr.mxu0 0.0
    %3419 = vmatpush1.msra.mxu0 0.0
    %3420 = vmatprep.mubr.f32.mxu0 0.0
    %3421 = vmatmul.mubr.f32.gmra.mrb[0].mxu0 %v3354
    %v3422 = vpop.f32.mrb[0].mxu0
    %v3423 = vadd.f32 0.0, %v3422
    %v3424 = vpop.f32.mrb[0].mxu0
    %3425 = vdwg.mxu0
    %v3426 = vadd.f32 %v3190, %v3423
    %3427 = vst.msk [vmem:[#allocation2 + $0x8] sm:$0xff] %vm82, %v3426
    %v3428 = vld [vmem:[#allocation2] sm:$0xff]
    %v3429 = vld [vmem:[#allocation2 + $0x8] sm:$0xff]
    %v3430 = vadd.f32 %v3428, %v1923
    %v3431 = vadd.f32 %v3429, %v1924
    %s3432 = scalar_lea.vmem %s12, 1
    %v3433 = vld [vmem:[%s3432] sm:$0x1]
    %s3434 = scalar_lea.vmem %s13, 1
    %v3435 = vld [vmem:[%s3434] sm:$0x1]
    %v3436 = vsel %vm82, %v3430, 0.0
    %3437 = vadd.xlane.f32.xlu0 %v3436
    %v3438 = vpop.xlane.xlu0 %3437
    %v3439 = vsel %vm82, %v3431, 0.0
    %3440 = vadd.xlane.f32.xlu0 %v3439
    %v3441 = vpop.xlane.xlu0 %3440
    %v3442 = vmul.f32 %v3438, %v89
    %v3443 = vmul.f32 %v3441, %v89
    %v3444 = vsub.f32 %v3430, %v3442
    %v3445 = vsub.f32 %v3431, %v3443
    %v3446 = vmul.f32 %v3444, %v3444
    %v3447 = vmul.f32 %v3445, %v3445
    %v3448 = vsel %vm82, %v3446, 0.0
    %3449 = vadd.xlane.f32.xlu0 %v3448
    %v3450 = vpop.xlane.xlu0 %3449
    %v3451 = vsel %vm82, %v3447, 0.0
    %3452 = vadd.xlane.f32.xlu0 %v3451
    %v3453 = vpop.xlane.xlu0 %3452
    %v3454 = vmul.f32 %v3450, %v89
    %v3455 = vmul.f32 %v3453, %v89
    %v3456 = vadd.f32 %v3454, 1e-12
    %v3457 = vadd.f32 %v3455, 1e-12
    %v3458 = vrsqrt.pop %v3456
    %v3459 = vrsqrt.pop %v3457
    %v3460 = vmul.f32 %v3444, %v3458
    %v3461 = vmul.f32 %v3445, %v3459
    %v3463 = vlaneseq
    %v3464 = vshrl.u32 %v3463, 7
    %v3465 = vsub.s32 0, %v3464
    %v3466 = vrot.slane %v3433, %v3465
    %v3468 = vmul.f32 %v3460, %v3466
    %v3469 = vmul.f32 %v3461, %v3466
    %v3471 = vlaneseq
    %v3472 = vshrl.u32 %v3471, 7
    %v3473 = vsub.s32 0, %v3472
    %v3474 = vrot.slane %v3435, %v3473
    %v3476 = vadd.f32 %v3468, %v3474
    %v3477 = vadd.f32 %v3469, %v3474
    %s3478 = scalar_lea.vmem %s14, 32
    %v3479 = vld [vmem:[%s3478] sm:$0xff]
    %v3480 = vld [vmem:[%s3478 + $0x8] sm:$0xff]
    %v3481 = vld [vmem:[%s3478 + $0x10] sm:$0xff]
    %v3482 = vld [vmem:[%s3478 + $0x18] sm:$0xff]
    %s3483 = scalar_lea.vmem %s15, 1
    %v3484 = vld [vmem:[%s3483] sm:$0x1]
    %v3486 = vlaneseq
    %v3487 = vshrl.u32 %v3486, 7
    %v3488 = vsub.s32 0, %v3487
    %v3489 = vrot.slane %v3484, %v3488
    %v3492 = vsel %vm82, %v3476, 0
    %v3495 = vsel %vm82, %v3477, 0
    %3497 = vmatprep.subr.mxu0 0.0
    %3498 = vmatpush1.msra.mxu0 %v3479
    %3499 = vmatprep.subr.mxu0 0.0
    %3500 = vmatpush1.msra.mxu0 %v3480
    %3501 = vmatprep.subr.mxu0 0.0
    %3502 = vmatpush1.msra.mxu0 %v3481
    %3503 = vmatprep.subr.mxu0 0.0
    %3504 = vmatpush1.msra.mxu0 %v3482
    %3505 = vmatprep.subr.mxu0 0.0
    %3506 = vmatpush1.msra.mxu0 0.0
    %3507 = vmatprep.subr.mxu0 0.0
    %3508 = vmatpush1.msra.mxu0 0.0
    %3509 = vmatprep.subr.mxu0 0.0
    %3510 = vmatpush1.msra.mxu0 0.0
    %3511 = vmatprep.subr.mxu0 0.0
    %3512 = vmatpush1.msra.mxu0 0.0
    %3513 = vmatprep.subr.mxu0 0.0
    %3514 = vmatpush1.msra.mxu0 0.0
    %3515 = vmatprep.subr.mxu0 0.0
    %3516 = vmatpush1.msra.mxu0 0.0
    %3517 = vmatprep.subr.mxu0 0.0
    %3518 = vmatpush1.msra.mxu0 0.0
    %3519 = vmatprep.subr.mxu0 0.0
    %3520 = vmatpush1.msra.mxu0 0.0
    %3521 = vmatprep.subr.mxu0 0.0
    %3522 = vmatpush1.msra.mxu0 0.0
    %3523 = vmatprep.subr.mxu0 0.0
    %3524 = vmatpush1.msra.mxu0 0.0
    %3525 = vmatprep.subr.mxu0 0.0
    %3526 = vmatpush1.msra.mxu0 0.0
    %3527 = vmatprep.subr.mxu0 0.0
    %3528 = vmatpush1.msra.mxu0 0.0
    %3529 = vmatprep.subr.mxu0 0.0
    %3530 = vmatpush1.msra.mxu0 0.0
    %3531 = vmatprep.subr.mxu0 0.0
    %3532 = vmatpush1.msra.mxu0 0.0
    %3533 = vmatprep.subr.mxu0 0.0
    %3534 = vmatpush1.msra.mxu0 0.0
    %3535 = vmatprep.subr.mxu0 0.0
    %3536 = vmatpush1.msra.mxu0 0.0
    %3537 = vmatprep.subr.mxu0 0.0
    %3538 = vmatpush1.msra.mxu0 0.0
    %3539 = vmatprep.subr.mxu0 0.0
    %3540 = vmatpush1.msra.mxu0 0.0
    %3541 = vmatprep.subr.mxu0 0.0
    %3542 = vmatpush1.msra.mxu0 0.0
    %3543 = vmatprep.subr.mxu0 0.0
    %3544 = vmatpush1.msra.mxu0 0.0
    %3545 = vmatprep.subr.mxu0 0.0
    %3546 = vmatpush1.msra.mxu0 0.0
    %3547 = vmatprep.subr.mxu0 0.0
    %3548 = vmatpush1.msra.mxu0 0.0
    %3549 = vmatprep.subr.mxu0 0.0
    %3550 = vmatpush1.msra.mxu0 0.0
    %3551 = vmatprep.subr.mxu0 0.0
    %3552 = vmatpush1.msra.mxu0 0.0
    %3553 = vmatprep.subr.mxu0 0.0
    %3554 = vmatpush1.msra.mxu0 0.0
    %3555 = vmatprep.subr.mxu0 0.0
    %3556 = vmatpush1.msra.mxu0 0.0
    %3557 = vmatprep.subr.mxu0 0.0
    %3558 = vmatpush1.msra.mxu0 0.0
    %3559 = vmatprep.subr.mxu0 0.0
    %3560 = vmatpush1.msra.mxu0 0.0
    %3561 = vmatprep.mubr.f32.mxu0 0.0
    %3562 = vmatmul.mubr.f32.gmra.mrb[0].mxu0 %v3492
    %v3563 = vpop.f32.mrb[0].mxu0
    %v3564 = vadd.f32 %v3489, %v3563
    %v3565 = vpop.f32.mrb[0].mxu0
    %3566 = vmatprep.mubr.f32.mxu0 0.0
    %3567 = vmatmul.mubr.f32.gmra.mrb[0].mxu0 %v3495
    %v3568 = vpop.f32.mrb[0].mxu0
    %v3569 = vadd.f32 %v3489, %v3568
    %v3570 = vpop.f32.mrb[0].mxu0
    %3571 = vdwg.mxu0
    %v3572 = vmul.f32 %v3564, 0.5
    %v3573 = vmul.f32 %v3569, 0.5
    %v3574 = vmul.f32 %v3564, 0.044715
    %v3575 = vmul.f32 %v3569, 0.044715
    %v3576 = vmul.f32 %v3574, %v3564
    %v3577 = vmul.f32 %v3575, %v3569
    %v3578 = vmul.f32 %v3576, %v3564
    %v3579 = vmul.f32 %v3577, %v3569
    %v3580 = vadd.f32 %v3564, %v3578
    %v3581 = vadd.f32 %v3569, %v3579
    %v3582 = vmul.f32 %v3580, 0.7978846
    %v3583 = vmul.f32 %v3581, 0.7978846
    %v3584 = vtanh.pop %v3582
    %v3585 = vtanh.pop %v3583
    %v3586 = vadd.f32 %v3584, 1.0
    %v3587 = vadd.f32 %v3585, 1.0
    %v3588 = vmul.f32 %v3572, %v3586
    %v3589 = vmul.f32 %v3573, %v3587
    %s3590 = scalar_lea.vmem %s16, 64
    %v3591 = vld [vmem:[%s3590] sm:$0xff]
    %v3592 = vld [vmem:[%s3590 + $0x8] sm:$0xff]
    %v3593 = vld [vmem:[%s3590 + $0x10] sm:$0xff]
    %v3594 = vld [vmem:[%s3590 + $0x18] sm:$0xff]
    %v3595 = vld [vmem:[%s3590 + $0x20] sm:$0xff]
    %v3596 = vld [vmem:[%s3590 + $0x28] sm:$0xff]
    %v3597 = vld [vmem:[%s3590 + $0x30] sm:$0xff]
    %v3598 = vld [vmem:[%s3590 + $0x38] sm:$0xff]
    %s3599 = scalar_lea.vmem %s17, 1
    %v3600 = vld [vmem:[%s3599] sm:$0x1]
    %v3602 = vlaneseq
    %v3603 = vshrl.u32 %v3602, 7
    %v3604 = vsub.s32 0, %v3603
    %v3605 = vrot.slane %v3600, %v3604
    %v3608 = vsel %vm1797, %v3588, 0
    %v3611 = vsel %vm1797, %v3589, 0
    %3613 = vmatprep.subr.mxu0 0.0
    %3614 = vmatpush1.msra.mxu0 %v3591
    %3615 = vmatprep.subr.mxu0 0.0
    %3616 = vmatpush1.msra.mxu0 %v3592
    %3617 = vmatprep.subr.mxu0 0.0
    %3618 = vmatpush1.msra.mxu0 %v3593
    %3619 = vmatprep.subr.mxu0 0.0
    %3620 = vmatpush1.msra.mxu0 %v3594
    %3621 = vmatprep.subr.mxu0 0.0
    %3622 = vmatpush1.msra.mxu0 %v3595
    %3623 = vmatprep.subr.mxu0 0.0
    %3624 = vmatpush1.msra.mxu0 %v3596
    %3625 = vmatprep.subr.mxu0 0.0
    %3626 = vmatpush1.msra.mxu0 %v3597
    %3627 = vmatprep.subr.mxu0 0.0
    %3628 = vmatpush1.msra.mxu0 %v3598
    %3629 = vmatprep.subr.mxu0 0.0
    %3630 = vmatpush1.msra.mxu0 0.0
    %3631 = vmatprep.subr.mxu0 0.0
    %3632 = vmatpush1.msra.mxu0 0.0
    %3633 = vmatprep.subr.mxu0 0.0
    %3634 = vmatpush1.msra.mxu0 0.0
    %3635 = vmatprep.subr.mxu0 0.0
    %3636 = vmatpush1.msra.mxu0 0.0
    %3637 = vmatprep.subr.mxu0 0.0
    %3638 = vmatpush1.msra.mxu0 0.0
    %3639 = vmatprep.subr.mxu0 0.0
    %3640 = vmatpush1.msra.mxu0 0.0
    %3641 = vmatprep.subr.mxu0 0.0
    %3642 = vmatpush1.msra.mxu0 0.0
    %3643 = vmatprep.subr.mxu0 0.0
    %3644 = vmatpush1.msra.mxu0 0.0
    %3645 = vmatprep.subr.mxu0 0.0
    %3646 = vmatpush1.msra.mxu0 0.0
    %3647 = vmatprep.subr.mxu0 0.0
    %3648 = vmatpush1.msra.mxu0 0.0
    %3649 = vmatprep.subr.mxu0 0.0
    %3650 = vmatpush1.msra.mxu0 0.0
    %3651 = vmatprep.subr.mxu0 0.0
    %3652 = vmatpush1.msra.mxu0 0.0
    %3653 = vmatprep.subr.mxu0 0.0
    %3654 = vmatpush1.msra.mxu0 0.0
    %3655 = vmatprep.subr.mxu0 0.0
    %3656 = vmatpush1.msra.mxu0 0.0
    %3657 = vmatprep.subr.mxu0 0.0
    %3658 = vmatpush1.msra.mxu0 0.0
    %3659 = vmatprep.subr.mxu0 0.0
    %3660 = vmatpush1.msra.mxu0 0.0
    %3661 = vmatprep.subr.mxu0 0.0
    %3662 = vmatpush1.msra.mxu0 0.0
    %3663 = vmatprep.subr.mxu0 0.0
    %3664 = vmatpush1.msra.mxu0 0.0
    %3665 = vmatprep.subr.mxu0 0.0
    %3666 = vmatpush1.msra.mxu0 0.0
    %3667 = vmatprep.subr.mxu0 0.0
    %3668 = vmatpush1.msra.mxu0 0.0
    %3669 = vmatprep.subr.mxu0 0.0
    %3670 = vmatpush1.msra.mxu0 0.0
    %3671 = vmatprep.subr.mxu0 0.0
    %3672 = vmatpush1.msra.mxu0 0.0
    %3673 = vmatprep.subr.mxu0 0.0
    %3674 = vmatpush1.msra.mxu0 0.0
    %3675 = vmatprep.subr.mxu0 0.0
    %3676 = vmatpush1.msra.mxu0 0.0
    %3677 = vmatprep.mubr.f32.mxu0 0.0
    %3678 = vmatmul.mubr.f32.gmra.mrb[0].mxu0 %v3608
    %v3679 = vpop.f32.mrb[0].mxu0
    %v3680 = vadd.f32 %v3605, %v3679
    %v3681 = vpop.f32.mrb[0].mxu0
    %3682 = vmatprep.mubr.f32.mxu0 0.0
    %3683 = vmatmul.mubr.f32.gmra.mrb[0].mxu0 %v3611
    %v3684 = vpop.f32.mrb[0].mxu0
    %v3685 = vadd.f32 %v3605, %v3684
    %v3686 = vpop.f32.mrb[0].mxu0
    %3687 = vdwg.mxu0
    %v3688 = vadd.f32 %v3680, %v3476
    %v3689 = vadd.f32 %v3685, %v3477
    %s3690 = scalar_lea.vmem %s18, 1
    %v3691 = vld [vmem:[%s3690] sm:$0x1]
    %s3692 = scalar_lea.vmem %s19, 1
    %v3693 = vld [vmem:[%s3692] sm:$0x1]
    %v3694 = vsel %vm82, %v3688, 0.0
    %3695 = vadd.xlane.f32.xlu0 %v3694
    %v3696 = vpop.xlane.xlu0 %3695
    %v3697 = vsel %vm82, %v3689, 0.0
    %3698 = vadd.xlane.f32.xlu0 %v3697
    %v3699 = vpop.xlane.xlu0 %3698
    %v3700 = vmul.f32 %v3696, %v89
    %v3701 = vmul.f32 %v3699, %v89
    %v3702 = vsub.f32 %v3688, %v3700
    %v3703 = vsub.f32 %v3689, %v3701
    %v3704 = vmul.f32 %v3702, %v3702
    %v3705 = vmul.f32 %v3703, %v3703
    %v3706 = vsel %vm82, %v3704, 0.0
    %3707 = vadd.xlane.f32.xlu0 %v3706
    %v3708 = vpop.xlane.xlu0 %3707
    %v3709 = vsel %vm82, %v3705, 0.0
    %3710 = vadd.xlane.f32.xlu0 %v3709
    %v3711 = vpop.xlane.xlu0 %3710
    %v3712 = vmul.f32 %v3708, %v89
    %v3713 = vmul.f32 %v3711, %v89
    %v3714 = vadd.f32 %v3712, 1e-12
    %v3715 = vadd.f32 %v3713, 1e-12
    %v3716 = vrsqrt.pop %v3714
    %v3717 = vrsqrt.pop %v3715
    %v3718 = vmul.f32 %v3702, %v3716
    %v3719 = vmul.f32 %v3703, %v3717
    %v3721 = vlaneseq
    %v3722 = vshrl.u32 %v3721, 7
    %v3723 = vsub.s32 0, %v3722
    %v3724 = vrot.slane %v3691, %v3723
    %v3726 = vmul.f32 %v3718, %v3724
    %v3727 = vmul.f32 %v3719, %v3724
    %v3729 = vlaneseq
    %v3730 = vshrl.u32 %v3729, 7
    %v3731 = vsub.s32 0, %v3730
    %v3732 = vrot.slane %v3693, %v3731
    %v3734 = vadd.f32 %v3726, %v3732
    %v3735 = vadd.f32 %v3727, %v3732
    %v3736 = vlaneseq
    %v3737 = vand.u32 %v3736, 127
    %v3738 = vlaneseq
    %v3739 = vshrl.u32 %v3738, 7
    %v3740 = vmul.u32 %v3739, 8
    %vm3741 = vcmp.eq.s32.totalorder %v3737, %v3740
    %v3742 = vsel %vm3741, 1, 0
    %v3743 = vcvt.s32.f32 %v3742
    %v3745 = vsel %vm660, %v3743, 0
    %3747 = vmatprep.subr.mxu0 0.0
    %3748 = vmatpush1.msra.mxu0 %v3734
    %3749 = vmatprep.subr.mxu0 0.0
    %3750 = vmatpush1.msra.mxu0 %v3735
    %3751 = vmatprep.subr.mxu0 0.0
    %3752 = vmatpush1.msra.mxu0 0.0
    %3753 = vmatprep.subr.mxu0 0.0
    %3754 = vmatpush1.msra.mxu0 0.0
    %3755 = vmatprep.subr.mxu0 0.0
    %3756 = vmatpush1.msra.mxu0 0.0
    %3757 = vmatprep.subr.mxu0 0.0
    %3758 = vmatpush1.msra.mxu0 0.0
    %3759 = vmatprep.subr.mxu0 0.0
    %3760 = vmatpush1.msra.mxu0 0.0
    %3761 = vmatprep.subr.mxu0 0.0
    %3762 = vmatpush1.msra.mxu0 0.0
    %3763 = vmatprep.subr.mxu0 0.0
    %3764 = vmatpush1.msra.mxu0 0.0
    %3765 = vmatprep.subr.mxu0 0.0
    %3766 = vmatpush1.msra.mxu0 0.0
    %3767 = vmatprep.subr.mxu0 0.0
    %3768 = vmatpush1.msra.mxu0 0.0
    %3769 = vmatprep.subr.mxu0 0.0
    %3770 = vmatpush1.msra.mxu0 0.0
    %3771 = vmatprep.subr.mxu0 0.0
    %3772 = vmatpush1.msra.mxu0 0.0
    %3773 = vmatprep.subr.mxu0 0.0
    %3774 = vmatpush1.msra.mxu0 0.0
    %3775 = vmatprep.subr.mxu0 0.0
    %3776 = vmatpush1.msra.mxu0 0.0
    %3777 = vmatprep.subr.mxu0 0.0
    %3778 = vmatpush1.msra.mxu0 0.0
    %3779 = vmatprep.subr.mxu0 0.0
    %3780 = vmatpush1.msra.mxu0 0.0
    %3781 = vmatprep.subr.mxu0 0.0
    %3782 = vmatpush1.msra.mxu0 0.0
    %3783 = vmatprep.subr.mxu0 0.0
    %3784 = vmatpush1.msra.mxu0 0.0
    %3785 = vmatprep.subr.mxu0 0.0
    %3786 = vmatpush1.msra.mxu0 0.0
    %3787 = vmatprep.subr.mxu0 0.0
    %3788 = vmatpush1.msra.mxu0 0.0
    %3789 = vmatprep.subr.mxu0 0.0
    %3790 = vmatpush1.msra.mxu0 0.0
    %3791 = vmatprep.subr.mxu0 0.0
    %3792 = vmatpush1.msra.mxu0 0.0
    %3793 = vmatprep.subr.mxu0 0.0
    %3794 = vmatpush1.msra.mxu0 0.0
    %3795 = vmatprep.subr.mxu0 0.0
    %3796 = vmatpush1.msra.mxu0 0.0
    %3797 = vmatprep.subr.mxu0 0.0
    %3798 = vmatpush1.msra.mxu0 0.0
    %3799 = vmatprep.subr.mxu0 0.0
    %3800 = vmatpush1.msra.mxu0 0.0
    %3801 = vmatprep.subr.mxu0 0.0
    %3802 = vmatpush1.msra.mxu0 0.0
    %3803 = vmatprep.subr.mxu0 0.0
    %3804 = vmatpush1.msra.mxu0 0.0
    %3805 = vmatprep.subr.mxu0 0.0
    %3806 = vmatpush1.msra.mxu0 0.0
    %3807 = vmatprep.subr.mxu0 0.0
    %3808 = vmatpush1.msra.mxu0 0.0
    %3809 = vmatprep.subr.mxu0 0.0
    %3810 = vmatpush1.msra.mxu0 0.0
    %3811 = vmatprep.mubr.f32.mxu0 0.0
    %3812 = vmatmul.mubr.f32.gmra.mrb[0].mxu0 %v3745
    %v3813 = vpop.f32.mrb[0].mxu0
    %v3814 = vadd.f32 0.0, %v3813
    %v3815 = vpop.f32.mrb[0].mxu0
    %3816 = vdwg.mxu0
    %v3817 = vld [vmem:[%s20] sm:$0xff]
    %v3818 = vld [vmem:[%s20 + $0x8] sm:$0xff]
    %v3819 = vld [vmem:[%s20 + $0x10] sm:$0xff]
    %v3820 = vld [vmem:[%s20 + $0x18] sm:$0xff]
    %v3821 = vld [vmem:[%s21] sm:$0x1]
    %v3823 = vlaneseq
    %v3824 = vshrl.u32 %v3823, 7
    %v3825 = vsub.s32 0, %v3824
    %v3826 = vrot.slane %v3821, %v3825
    %v3829 = vsel %vm82, %v3814, 0
    %3831 = vmatprep.subr.mxu0 0.0
    %3832 = vmatpush1.msra.mxu0 %v3817
    %3833 = vmatprep.subr.mxu0 0.0
    %3834 = vmatpush1.msra.mxu0 %v3818
    %3835 = vmatprep.subr.mxu0 0.0
    %3836 = vmatpush1.msra.mxu0 %v3819
    %3837 = vmatprep.subr.mxu0 0.0
    %3838 = vmatpush1.msra.mxu0 %v3820
    %3839 = vmatprep.subr.mxu0 0.0
    %3840 = vmatpush1.msra.mxu0 0.0
    %3841 = vmatprep.subr.mxu0 0.0
    %3842 = vmatpush1.msra.mxu0 0.0
    %3843 = vmatprep.subr.mxu0 0.0
    %3844 = vmatpush1.msra.mxu0 0.0
    %3845 = vmatprep.subr.mxu0 0.0
    %3846 = vmatpush1.msra.mxu0 0.0
    %3847 = vmatprep.subr.mxu0 0.0
    %3848 = vmatpush1.msra.mxu0 0.0
    %3849 = vmatprep.subr.mxu0 0.0
    %3850 = vmatpush1.msra.mxu0 0.0
    %3851 = vmatprep.subr.mxu0 0.0
    %3852 = vmatpush1.msra.mxu0 0.0
    %3853 = vmatprep.subr.mxu0 0.0
    %3854 = vmatpush1.msra.mxu0 0.0
    %3855 = vmatprep.subr.mxu0 0.0
    %3856 = vmatpush1.msra.mxu0 0.0
    %3857 = vmatprep.subr.mxu0 0.0
    %3858 = vmatpush1.msra.mxu0 0.0
    %3859 = vmatprep.subr.mxu0 0.0
    %3860 = vmatpush1.msra.mxu0 0.0
    %3861 = vmatprep.subr.mxu0 0.0
    %3862 = vmatpush1.msra.mxu0 0.0
    %3863 = vmatprep.subr.mxu0 0.0
    %3864 = vmatpush1.msra.mxu0 0.0
    %3865 = vmatprep.subr.mxu0 0.0
    %3866 = vmatpush1.msra.mxu0 0.0
    %3867 = vmatprep.subr.mxu0 0.0
    %3868 = vmatpush1.msra.mxu0 0.0
    %3869 = vmatprep.subr.mxu0 0.0
    %3870 = vmatpush1.msra.mxu0 0.0
    %3871 = vmatprep.subr.mxu0 0.0
    %3872 = vmatpush1.msra.mxu0 0.0
    %3873 = vmatprep.subr.mxu0 0.0
    %3874 = vmatpush1.msra.mxu0 0.0
    %3875 = vmatprep.subr.mxu0 0.0
    %3876 = vmatpush1.msra.mxu0 0.0
    %3877 = vmatprep.subr.mxu0 0.0
    %3878 = vmatpush1.msra.mxu0 0.0
    %3879 = vmatprep.subr.mxu0 0.0
    %3880 = vmatpush1.msra.mxu0 0.0
    %3881 = vmatprep.subr.mxu0 0.0
    %3882 = vmatpush1.msra.mxu0 0.0
    %3883 = vmatprep.subr.mxu0 0.0
    %3884 = vmatpush1.msra.mxu0 0.0
    %3885 = vmatprep.subr.mxu0 0.0
    %3886 = vmatpush1.msra.mxu0 0.0
    %3887 = vmatprep.subr.mxu0 0.0
    %3888 = vmatpush1.msra.mxu0 0.0
    %3889 = vmatprep.subr.mxu0 0.0
    %3890 = vmatpush1.msra.mxu0 0.0
    %3891 = vmatprep.subr.mxu0 0.0
    %3892 = vmatpush1.msra.mxu0 0.0
    %3893 = vmatprep.subr.mxu0 0.0
    %3894 = vmatpush1.msra.mxu0 0.0
    %3895 = vmatprep.mubr.f32.mxu0 0.0
    %3896 = vmatmul.mubr.f32.gmra.mrb[0].mxu0 %v3829
    %v3897 = vpop.f32.mrb[0].mxu0
    %v3898 = vadd.f32 %v3826, %v3897
    %v3899 = vpop.f32.mrb[0].mxu0
    %3900 = vdwg.mxu0
    %v3901 = vtanh.pop %v3898
    %v3902 = vld [vmem:[%s22] sm:$0xff]
    %v3903 = vld [vmem:[%s22 + $0x8] sm:$0xff]
    %v3904 = vld [vmem:[%s22 + $0x10] sm:$0xff]
    %v3905 = vld [vmem:[%s22 + $0x18] sm:$0xff]
    %v3906 = vld [vmem:[%s23] sm:$0x1]
    %v3908 = vlaneseq
    %v3909 = vshrl.u32 %v3908, 7
    %v3910 = vsub.s32 0, %v3909
    %v3911 = vrot.slane %v3906, %v3910
    %v3914 = vsel %vm82, %v3901, 0
    %3916 = vmatprep.subr.mxu0 0.0
    %3917 = vmatpush1.msra.mxu0 %v3902
    %3918 = vmatprep.subr.mxu0 0.0
    %3919 = vmatpush1.msra.mxu0 %v3903
    %3920 = vmatprep.subr.mxu0 0.0
    %3921 = vmatpush1.msra.mxu0 %v3904
    %3922 = vmatprep.subr.mxu0 0.0
    %3923 = vmatpush1.msra.mxu0 %v3905
    %3924 = vmatprep.subr.mxu0 0.0
    %3925 = vmatpush1.msra.mxu0 0.0
    %3926 = vmatprep.subr.mxu0 0.0
    %3927 = vmatpush1.msra.mxu0 0.0
    %3928 = vmatprep.subr.mxu0 0.0
    %3929 = vmatpush1.msra.mxu0 0.0
    %3930 = vmatprep.subr.mxu0 0.0
    %3931 = vmatpush1.msra.mxu0 0.0
    %3932 = vmatprep.subr.mxu0 0.0
    %3933 = vmatpush1.msra.mxu0 0.0
    %3934 = vmatprep.subr.mxu0 0.0
    %3935 = vmatpush1.msra.mxu0 0.0
    %3936 = vmatprep.subr.mxu0 0.0
    %3937 = vmatpush1.msra.mxu0 0.0
    %3938 = vmatprep.subr.mxu0 0.0
    %3939 = vmatpush1.msra.mxu0 0.0
    %3940 = vmatprep.subr.mxu0 0.0
    %3941 = vmatpush1.msra.mxu0 0.0
    %3942 = vmatprep.subr.mxu0 0.0
    %3943 = vmatpush1.msra.mxu0 0.0
    %3944 = vmatprep.subr.mxu0 0.0
    %3945 = vmatpush1.msra.mxu0 0.0
    %3946 = vmatprep.subr.mxu0 0.0
    %3947 = vmatpush1.msra.mxu0 0.0
    %3948 = vmatprep.subr.mxu0 0.0
    %3949 = vmatpush1.msra.mxu0 0.0
    %3950 = vmatprep.subr.mxu0 0.0
    %3951 = vmatpush1.msra.mxu0 0.0
    %3952 = vmatprep.subr.mxu0 0.0
    %3953 = vmatpush1.msra.mxu0 0.0
    %3954 = vmatprep.subr.mxu0 0.0
    %3955 = vmatpush1.msra.mxu0 0.0
    %3956 = vmatprep.subr.mxu0 0.0
    %3957 = vmatpush1.msra.mxu0 0.0
    %3958 = vmatprep.subr.mxu0 0.0
    %3959 = vmatpush1.msra.mxu0 0.0
    %3960 = vmatprep.subr.mxu0 0.0
    %3961 = vmatpush1.msra.mxu0 0.0
    %3962 = vmatprep.subr.mxu0 0.0
    %3963 = vmatpush1.msra.mxu0 0.0
    %3964 = vmatprep.subr.mxu0 0.0
    %3965 = vmatpush1.msra.mxu0 0.0
    %3966 = vmatprep.subr.mxu0 0.0
    %3967 = vmatpush1.msra.mxu0 0.0
    %3968 = vmatprep.subr.mxu0 0.0
    %3969 = vmatpush1.msra.mxu0 0.0
    %3970 = vmatprep.subr.mxu0 0.0
    %3971 = vmatpush1.msra.mxu0 0.0
    %3972 = vmatprep.subr.mxu0 0.0
    %3973 = vmatpush1.msra.mxu0 0.0
    %3974 = vmatprep.subr.mxu0 0.0
    %3975 = vmatpush1.msra.mxu0 0.0
    %3976 = vmatprep.subr.mxu0 0.0
    %3977 = vmatpush1.msra.mxu0 0.0
    %3978 = vmatprep.subr.mxu0 0.0
    %3979 = vmatpush1.msra.mxu0 0.0
    %3980 = vmatprep.mubr.f32.mxu0 0.0
    %3981 = vmatmul.mubr.f32.gmra.mrb[0].mxu0 %v3914
    %v3982 = vpop.f32.mrb[0].mxu0
    %v3983 = vadd.f32 %v3911, %v3982
    %v3984 = vpop.f32.mrb[0].mxu0
    %3985 = vdwg.mxu0
    %v3986 = vxor.u32 %v3983, 2147483648
    %v3987 = vmul.f32 %v3986, 1.442695
    %v3988 = vpow.pop %v3987
    %v3989 = vadd.f32 %v3988, 1.0
    %v3990 = vrcp.pop %v3989
    %v3991 = vmul.f32 1.0, %v3990
    %vm3992 = vcmask 25600
    %3993 = vst.msk [vmem:[#allocation3] sm:$0x3] %vm3992, %v3991
    // Predicated region
    $region98: #{bert_taxonomy_forward.1} parent=1 // pred_check
      _
    $region99: #{bert_taxonomy_forward.1} parent=1 // pred_check_branch
      %3995 = sbr.rel (0) target = $region101
    $region100: #{bert_taxonomy_forward.1} parent=1 // pred_region
      %s3997 = ssub.s32 32, 32
      %3998 = vsyncadd [#allocation4], %s3997
      %s4000 = sshll.u32 [#allocation3], 4
      %s4001 = int_to_ptr.vmem [resolvable:$true] %s4000
      %4003 = dma.vmem_to_hbm [thread:$0]  %s4001, 32, %s24, [#allocation4]
    $region101: #{bert_taxonomy_forward.1} parent=1 // pred_fallthru
      _
    // Predicated region
    $region102: #{bert_taxonomy_forward.1} parent=1 // pred_check
      _
    $region103: #{bert_taxonomy_forward.1} parent=1 // pred_check_branch
      %4005 = sbr.rel (0) target = $region105
    $region104: #{bert_taxonomy_forward.1} parent=1 // pred_region
      %4006 = dma.done [#allocation4], 32
    $region105: #{bert_taxonomy_forward.1} parent=1 // pred_fallthru
      _
    %4007 = vsyncpa [#allocation4], 1

</llo_original>
